<compile_context>
chip_gen: v5e
topology: v5e:2x2
jax: 0.10.0
libtpu: 0.0.40
codegen_flags: <defaults>
</compile_context>

<pallas_src>
import functools

import jax
import jax.numpy as jnp
import numpy as np
from jax.experimental import pallas as pl
from jax.experimental.pallas import tpu as pltpu

# Fixed (non-learnable) Sobel kernels, exactly as in the PyTorch module.
_KX = ((-1.0, 0.0, 1.0), (-2.0, 0.0, 2.0), (-1.0, 0.0, 1.0))
_KY = ((1.0, 2.0, 1.0), (0.0, 0.0, 0.0), (-1.0, -2.0, -1.0))


def _sobel_grad(x, H, W):
    """|sobel_x| + |sobel_y| of an unpadded (H, W) plane (== F.conv2d, padding=1).

    Separable form: one horizontal smooth + one horizontal diff per plane (lane
    shifts), then cheap vertical (sublane) combines. Borders are zero-extended by
    concatenating zero strips, which reproduces conv2d zero padding exactly.
    """
    zc = jnp.zeros((H, 1), jnp.float32)
    x_l = jnp.concatenate([zc, x[:, : W - 1]], axis=1)    # x[i, j-1] (0 at j=0)
    x_r = jnp.concatenate([x[:, 1:], zc], axis=1)         # x[i, j+1] (0 at j=W-1)
    s = x_l + 2.0 * x + x_r                               # [1, 2, 1] horizontal
    d = x_r - x_l                                         # [-1, 0, 1] horizontal

    zr = jnp.zeros((1, W), jnp.float32)
    d_u = jnp.concatenate([zr, d[: H - 1, :]], axis=0)    # d[i-1, j]
    d_d = jnp.concatenate([d[1:, :], zr], axis=0)         # d[i+1, j]
    s_u = jnp.concatenate([zr, s[: H - 1, :]], axis=0)    # s[i-1, j]
    s_d = jnp.concatenate([s[1:, :], zr], axis=0)         # s[i+1, j]

    sobelx = d_u + 2.0 * d + d_d                          # vertical [1,2,1] of diff
    sobely = s_u - s_d                                    # vertical [1,0,-1] of smooth
    return jnp.abs(sobelx) + jnp.abs(sobely)


def _topk_masks_pair(att_a, att_b, k):
    """masks (att >= kth_smallest(att)) for two attention maps, exact kthvalue.

    31-step bitwise binary search on the raw int32 bit patterns. Valid because
    att = Y * |sobel| is non-negative, so IEEE float order == raw int32 bit order
    and the sign bit is always 0 (no sign remap, no 32nd pass). The two
    independent searches share one loop so their compare / cross-lane reduce /
    scalar-select chains interleave. Rank counts are int32 (exact for any H*W).
    """
    key_a = pltpu.bitcast(att_a, jnp.int32)
    key_b = pltpu.bitcast(att_b, jnp.int32)
    ki = jnp.int32(k)

    pa = jnp.int32(0)
    pb = jnp.int32(0)
    for bit in range(30, -1, -1):
        bitv = np.int32(1 << bit)
        low = np.int32((1 << bit) - 1)
        ta = pa | low
        tb = pb | low
        ca = jnp.sum((key_a <= ta).astype(jnp.int32))     # rank count, O(N)
        cb = jnp.sum((key_b <= tb).astype(jnp.int32))
        pa = jnp.where(ca >= ki, pa, pa | bitv)
        pb = jnp.where(cb >= ki, pb, pb | bitv)

    mask_a = (key_a >= pa).astype(jnp.float32)
    mask_b = (key_b >= pb).astype(jnp.float32)
    return mask_a, mask_b


def _fusion_kernel(a_ref, b_ref, f_ref, out_ref, *, H, W, k):
    # Y planes arrive at native dtype (bf16/u8 halve HBM DMA); cast in-kernel.
    a = a_ref[...].astype(jnp.float32)
    b = b_ref[...].astype(jnp.float32)
    f = f_ref[...].astype(jnp.float32)

    grad_a = _sobel_grad(a, H, W)
    grad_b = _sobel_grad(b, H, W)
    grad_f = _sobel_grad(f, H, W)

    # Gradient L1 partial: |grad_F - max(grad_A, grad_B)| summed over this image.
    g_sum = jnp.sum(jnp.abs(grad_f - jnp.maximum(grad_a, grad_b)))

    # Gradient-attention kth-value masks (exact torch.kthvalue semantics).
    mask_a, mask_b = _topk_masks_pair(a * grad_a, b * grad_b, k)
    m1 = jnp.minimum(mask_a + mask_b, 1.0)                 # grand_Mask_one
    m3 = 1.0 - m1                                          # grand_Mask_three

    # Intensity partial sums; masks are {0,1} so m*|x-y| == |x*m - y*m| exactly.
    s0 = jnp.sum(m1 * jnp.abs(jnp.maximum(a, b) - f))      # L_Intensity
    s1 = jnp.sum(m3 * jnp.abs(a - f))                      # L1(A*m3, F*m3)
    s2 = jnp.sum(m3 * jnp.abs(b - f))                      # L1(B*m3, F*m3)

    rows = jax.lax.broadcasted_iota(jnp.int32, (8, 128), 0)
    out_ref[...] = jnp.where(rows == 0, g_sum,
                   jnp.where(rows == 1, s0,
                   jnp.where(rows == 2, s1,
                   jnp.where(rows == 3, s2, jnp.float32(0.0)))))


def _run_fused(image_A, image_B, image_F, H, W, k):
    B = image_A.shape[0]
    # Channel-squeezing spec: DMAs only the Y plane (channel 0) of each image,
    # unpadded and at native dtype -- no host-side pad / slice / astype copies.
    y_spec = pl.BlockSpec((None, None, H, W), lambda b: (b, 0, 0, 0))
    part = pl.pallas_call(
        functools.partial(_fusion_kernel, H=H, W=W, k=k),
        out_shape=jax.ShapeDtypeStruct((B, 8, 128), jnp.float32),
        grid=(B,),
        in_specs=[y_spec, y_spec, y_spec],
        out_specs=pl.BlockSpec((None, 8, 128), lambda b: (b, 0, 0)),
        compiler_params=pltpu.CompilerParams(
            dimension_semantics=("parallel",),       # batch images are independent
            vmem_limit_bytes=48 * 1024 * 1024,       # > v5e's 16 MiB default scoped
        ),
    )(image_A, image_B, image_F)
    return part[:, :4, 0]   # (B, 4): [grad_sum, loss_one_sum, lossA_sum, lossB_sum]


# ------------------------------------------------------------------
# Wrappers mirroring the PyTorch modules
# ------------------------------------------------------------------
def l_grad_inte(image_A, image_B, image_fused, percent=0.8):
    B, C, H, W = image_A.shape
    k = int(round(percent * H * W))   # torch.round(percent*H*W).int()
    assert 1 <= k <= H * W

    part = _run_fused(image_A, image_B, image_fused, H, W, k)

    denom = jnp.float32(B * H * W)                 # l1_loss 'mean' over (B, 1, H, W)
    loss_gradient = jnp.sum(part[:, 0]) / denom
    loss_one = jnp.sum(part[:, 1]) / denom
    loss_three = 0.5 * jnp.sum(part[:, 2]) / denom + 0.5 * jnp.sum(part[:, 3]) / denom
    return loss_gradient, loss_one + loss_three


def fusion_loss_med(image_fused, image_A, image_B):
    pred = image_fused['pred'] if isinstance(image_fused, dict) else image_fused
    loss_gradient, grand_inten_loss = l_grad_inte(image_A, image_B, pred, percent=0.8)
    return loss_gradient * 20.0 + grand_inten_loss * 20.0


# ------------------------------------------------------------------
# Pure-JAX reference (mirrors the PyTorch code) for the correctness check
# ------------------------------------------------------------------
def _sobel_ref(x):
    Hh, Ww = x.shape[1], x.shape[2]
    xp = jnp.pad(x, ((0, 0), (1, 1), (1, 1)))
    sx = jnp.zeros_like(x)
    sy = jnp.zeros_like(x)
    for u in range(3):
        for v in range(3):
            win = xp[:, u:u + Hh, v:v + Ww]
            sx = sx + _KX[u][v] * win
            sy = sy + _KY[u][v] * win
    return jnp.abs(sx) + jnp.abs(sy)


def l_grad_inte_ref(image_A, image_B, image_fused, percent=0.8):
    B, C, H, W = image_A.shape
    a = image_A[:, 0].astype(jnp.float32)
    b = image_B[:, 0].astype(jnp.float32)
    f = image_fused[:, 0].astype(jnp.float32)
    ga, gb, gf = _sobel_ref(a), _sobel_ref(b), _sobel_ref(f)
    loss_grad = jnp.mean(jnp.abs(gf - jnp.maximum(ga, gb)))
    att_a, att_b = a * ga, b * gb
    N = H * W
    k = int(round(percent * N))

    def mask_of(att):
        flat = att.reshape(B, N)
        v = jnp.sort(flat, axis=1)[:, k - 1]
        return (flat >= v[:, None]).astype(jnp.float32).reshape(B, H, W)

    m = jnp.clip(mask_of(att_a) + mask_of(att_b), 0.0, 1.0)
    loss_one = jnp.mean(jnp.abs(jnp.maximum(a * m, b * m) - f * m))
    m3 = 1.0 - m
    loss_three = 0.5 * jnp.mean(jnp.abs(a * m3 - f * m3)) + \
                 0.5 * jnp.mean(jnp.abs(b * m3 - f * m3))
    return loss_grad, loss_one + loss_three


def fusion_loss_med_ref(image_fused, image_A, image_B):
    pred = image_fused['pred'] if isinstance(image_fused, dict) else image_fused
    lg, li = l_grad_inte_ref(image_A, image_B, pred)
    return lg * 20.0 + li * 20.0


if __name__ == "__main__":
    key = jax.random.PRNGKey(0)
    k1, k2, k3 = jax.random.split(key, 3)
    B, C, H, W = 2, 4, 16, 16
    image_A = jax.random.uniform(k1, (B, C, H, W), jnp.float32)
    image_B = jax.random.uniform(k2, (B, C, H, W), jnp.float32)
    image_F = jax.random.uniform(k3, (B, C, H, W), jnp.float32)

    loss_grad, loss_inten = jax.jit(l_grad_inte)(image_A, image_B, image_F)
    total = jax.jit(fusion_loss_med)({'pred': image_F}, image_A, image_B)
    jax.block_until_ready((loss_grad, loss_inten, total))

    ref_grad, ref_inten = l_grad_inte_ref(image_A, image_B, image_F)
    ref_total = fusion_loss_med_ref({'pred': image_F}, image_A, image_B)
    np.testing.assert_allclose(np.asarray(loss_grad), np.asarray(ref_grad),
                               rtol=2e-3, atol=2e-4)
    np.testing.assert_allclose(np.asarray(loss_inten), np.asarray(ref_inten),
                               rtol=2e-3, atol=2e-4)
    np.testing.assert_allclose(np.asarray(total), np.asarray(ref_total),
                               rtol=2e-3, atol=2e-3)
    print("KERNEL_OK")
</pallas_src>

<mosaic_0001>
module attributes {stable_mosaic.version = 11 : i64} {
  func.func @_fusion_kernel(%arg0: i32, %arg1: memref<1x1x16x16xf32, #tpu.memory_space<vmem>>, %arg2: memref<1x1x16x16xf32, #tpu.memory_space<vmem>>, %arg3: memref<1x1x16x16xf32, #tpu.memory_space<vmem>>, %arg4: memref<1x8x128xf32, #tpu.memory_space<vmem>>) attributes {dimension_semantics = [#tpu.dimension_semantics<parallel>], iteration_bounds = array<i64: 2>, scalar_prefetch = 0 : i64, scratch_operands = 0 : i64, tpu.core_type = #tpu.core_type<tc>, window_params = [{transform_indices = @transform_0, window_bounds = array<i64: 1, 1, 16, 16>}, {transform_indices = @transform_1, window_bounds = array<i64: 1, 1, 16, 16>}, {transform_indices = @transform_2, window_bounds = array<i64: 1, 1, 16, 16>}, {transform_indices = @transform_3, window_bounds = array<i64: 1, 8, 128>}]} {
    %c0 = arith.constant 0 : index
    %c0_0 = arith.constant 0 : index
    %c0_1 = arith.constant 0 : index
    %c0_2 = arith.constant 0 : index
    %0 = vector.load %arg1[%c0, %c0_0, %c0_1, %c0_2] : memref<1x1x16x16xf32, #tpu.memory_space<vmem>>, vector<1x1x16x16xf32>
    %1 = vector.shape_cast %0 : vector<1x1x16x16xf32> to vector<16x16xf32>
    %c0_3 = arith.constant 0 : index
    %c0_4 = arith.constant 0 : index
    %c0_5 = arith.constant 0 : index
    %c0_6 = arith.constant 0 : index
    %2 = vector.load %arg2[%c0_3, %c0_4, %c0_5, %c0_6] : memref<1x1x16x16xf32, #tpu.memory_space<vmem>>, vector<1x1x16x16xf32>
    %3 = vector.shape_cast %2 : vector<1x1x16x16xf32> to vector<16x16xf32>
    %c0_7 = arith.constant 0 : index
    %c0_8 = arith.constant 0 : index
    %c0_9 = arith.constant 0 : index
    %c0_10 = arith.constant 0 : index
    %4 = vector.load %arg3[%c0_7, %c0_8, %c0_9, %c0_10] : memref<1x1x16x16xf32, #tpu.memory_space<vmem>>, vector<1x1x16x16xf32>
    %5 = vector.shape_cast %4 : vector<1x1x16x16xf32> to vector<16x16xf32>
    %cst = arith.constant 0.000000e+00 : f32
    %6 = vector.broadcast %cst : f32 to vector<16x1xf32>
    %7 = vector.extract_strided_slice %1 {offsets = [0, 0], sizes = [16, 15], strides = [1, 1]} : vector<16x16xf32> to vector<16x15xf32>
    %8 = tpu.concatenate %6, %7 in 1 : vector<16x1xf32>, vector<16x15xf32> -> vector<16x16xf32>
    %9 = vector.extract_strided_slice %1 {offsets = [0, 1], sizes = [16, 15], strides = [1, 1]} : vector<16x16xf32> to vector<16x15xf32>
    %10 = tpu.concatenate %9, %6 in 1 : vector<16x15xf32>, vector<16x1xf32> -> vector<16x16xf32>
    %cst_11 = arith.constant 2.000000e+00 : f32
    %11 = vector.broadcast %cst_11 : f32 to vector<16x16xf32>
    %12 = arith.mulf %11, %1 : vector<16x16xf32>
    %13 = arith.addf %8, %12 : vector<16x16xf32>
    %14 = arith.addf %13, %10 : vector<16x16xf32>
    %15 = arith.subf %10, %8 : vector<16x16xf32>
    %cst_12 = arith.constant 0.000000e+00 : f32
    %16 = vector.broadcast %cst_12 : f32 to vector<1x16xf32>
    %17 = vector.extract_strided_slice %15 {offsets = [0, 0], sizes = [15, 16], strides = [1, 1]} : vector<16x16xf32> to vector<15x16xf32>
    %18 = tpu.concatenate %16, %17 in 0 : vector<1x16xf32>, vector<15x16xf32> -> vector<16x16xf32>
    %19 = vector.extract_strided_slice %15 {offsets = [1, 0], sizes = [15, 16], strides = [1, 1]} : vector<16x16xf32> to vector<15x16xf32>
    %20 = tpu.concatenate %19, %16 in 0 : vector<15x16xf32>, vector<1x16xf32> -> vector<16x16xf32>
    %21 = vector.extract_strided_slice %14 {offsets = [0, 0], sizes = [15, 16], strides = [1, 1]} : vector<16x16xf32> to vector<15x16xf32>
    %22 = tpu.concatenate %16, %21 in 0 : vector<1x16xf32>, vector<15x16xf32> -> vector<16x16xf32>
    %23 = vector.extract_strided_slice %14 {offsets = [1, 0], sizes = [15, 16], strides = [1, 1]} : vector<16x16xf32> to vector<15x16xf32>
    %24 = tpu.concatenate %23, %16 in 0 : vector<15x16xf32>, vector<1x16xf32> -> vector<16x16xf32>
    %cst_13 = arith.constant 2.000000e+00 : f32
    %25 = vector.broadcast %cst_13 : f32 to vector<16x16xf32>
    %26 = arith.mulf %25, %15 : vector<16x16xf32>
    %27 = arith.addf %18, %26 : vector<16x16xf32>
    %28 = arith.addf %27, %20 : vector<16x16xf32>
    %29 = arith.subf %22, %24 : vector<16x16xf32>
    %30 = math.absf %28 : vector<16x16xf32>
    %31 = math.absf %29 : vector<16x16xf32>
    %32 = arith.addf %30, %31 : vector<16x16xf32>
    %cst_14 = arith.constant 0.000000e+00 : f32
    %33 = vector.broadcast %cst_14 : f32 to vector<16x1xf32>
    %34 = vector.extract_strided_slice %3 {offsets = [0, 0], sizes = [16, 15], strides = [1, 1]} : vector<16x16xf32> to vector<16x15xf32>
    %35 = tpu.concatenate %33, %34 in 1 : vector<16x1xf32>, vector<16x15xf32> -> vector<16x16xf32>
    %36 = vector.extract_strided_slice %3 {offsets = [0, 1], sizes = [16, 15], strides = [1, 1]} : vector<16x16xf32> to vector<16x15xf32>
    %37 = tpu.concatenate %36, %33 in 1 : vector<16x15xf32>, vector<16x1xf32> -> vector<16x16xf32>
    %cst_15 = arith.constant 2.000000e+00 : f32
    %38 = vector.broadcast %cst_15 : f32 to vector<16x16xf32>
    %39 = arith.mulf %38, %3 : vector<16x16xf32>
    %40 = arith.addf %35, %39 : vector<16x16xf32>
    %41 = arith.addf %40, %37 : vector<16x16xf32>
    %42 = arith.subf %37, %35 : vector<16x16xf32>
    %cst_16 = arith.constant 0.000000e+00 : f32
    %43 = vector.broadcast %cst_16 : f32 to vector<1x16xf32>
    %44 = vector.extract_strided_slice %42 {offsets = [0, 0], sizes = [15, 16], strides = [1, 1]} : vector<16x16xf32> to vector<15x16xf32>
    %45 = tpu.concatenate %43, %44 in 0 : vector<1x16xf32>, vector<15x16xf32> -> vector<16x16xf32>
    %46 = vector.extract_strided_slice %42 {offsets = [1, 0], sizes = [15, 16], strides = [1, 1]} : vector<16x16xf32> to vector<15x16xf32>
    %47 = tpu.concatenate %46, %43 in 0 : vector<15x16xf32>, vector<1x16xf32> -> vector<16x16xf32>
    %48 = vector.extract_strided_slice %41 {offsets = [0, 0], sizes = [15, 16], strides = [1, 1]} : vector<16x16xf32> to vector<15x16xf32>
    %49 = tpu.concatenate %43, %48 in 0 : vector<1x16xf32>, vector<15x16xf32> -> vector<16x16xf32>
    %50 = vector.extract_strided_slice %41 {offsets = [1, 0], sizes = [15, 16], strides = [1, 1]} : vector<16x16xf32> to vector<15x16xf32>
    %51 = tpu.concatenate %50, %43 in 0 : vector<15x16xf32>, vector<1x16xf32> -> vector<16x16xf32>
    %cst_17 = arith.constant 2.000000e+00 : f32
    %52 = vector.broadcast %cst_17 : f32 to vector<16x16xf32>
    %53 = arith.mulf %52, %42 : vector<16x16xf32>
    %54 = arith.addf %45, %53 : vector<16x16xf32>
    %55 = arith.addf %54, %47 : vector<16x16xf32>
    %56 = arith.subf %49, %51 : vector<16x16xf32>
    %57 = math.absf %55 : vector<16x16xf32>
    %58 = math.absf %56 : vector<16x16xf32>
    %59 = arith.addf %57, %58 : vector<16x16xf32>
    %cst_18 = arith.constant 0.000000e+00 : f32
    %60 = vector.broadcast %cst_18 : f32 to vector<16x1xf32>
    %61 = vector.extract_strided_slice %5 {offsets = [0, 0], sizes = [16, 15], strides = [1, 1]} : vector<16x16xf32> to vector<16x15xf32>
    %62 = tpu.concatenate %60, %61 in 1 : vector<16x1xf32>, vector<16x15xf32> -> vector<16x16xf32>
    %63 = vector.extract_strided_slice %5 {offsets = [0, 1], sizes = [16, 15], strides = [1, 1]} : vector<16x16xf32> to vector<16x15xf32>
    %64 = tpu.concatenate %63, %60 in 1 : vector<16x15xf32>, vector<16x1xf32> -> vector<16x16xf32>
    %cst_19 = arith.constant 2.000000e+00 : f32
    %65 = vector.broadcast %cst_19 : f32 to vector<16x16xf32>
    %66 = arith.mulf %65, %5 : vector<16x16xf32>
    %67 = arith.addf %62, %66 : vector<16x16xf32>
    %68 = arith.addf %67, %64 : vector<16x16xf32>
    %69 = arith.subf %64, %62 : vector<16x16xf32>
    %cst_20 = arith.constant 0.000000e+00 : f32
    %70 = vector.broadcast %cst_20 : f32 to vector<1x16xf32>
    %71 = vector.extract_strided_slice %69 {offsets = [0, 0], sizes = [15, 16], strides = [1, 1]} : vector<16x16xf32> to vector<15x16xf32>
    %72 = tpu.concatenate %70, %71 in 0 : vector<1x16xf32>, vector<15x16xf32> -> vector<16x16xf32>
    %73 = vector.extract_strided_slice %69 {offsets = [1, 0], sizes = [15, 16], strides = [1, 1]} : vector<16x16xf32> to vector<15x16xf32>
    %74 = tpu.concatenate %73, %70 in 0 : vector<15x16xf32>, vector<1x16xf32> -> vector<16x16xf32>
    %75 = vector.extract_strided_slice %68 {offsets = [0, 0], sizes = [15, 16], strides = [1, 1]} : vector<16x16xf32> to vector<15x16xf32>
    %76 = tpu.concatenate %70, %75 in 0 : vector<1x16xf32>, vector<15x16xf32> -> vector<16x16xf32>
    %77 = vector.extract_strided_slice %68 {offsets = [1, 0], sizes = [15, 16], strides = [1, 1]} : vector<16x16xf32> to vector<15x16xf32>
    %78 = tpu.concatenate %77, %70 in 0 : vector<15x16xf32>, vector<1x16xf32> -> vector<16x16xf32>
    %cst_21 = arith.constant 2.000000e+00 : f32
    %79 = vector.broadcast %cst_21 : f32 to vector<16x16xf32>
    %80 = arith.mulf %79, %69 : vector<16x16xf32>
    %81 = arith.addf %72, %80 : vector<16x16xf32>
    %82 = arith.addf %81, %74 : vector<16x16xf32>
    %83 = arith.subf %76, %78 : vector<16x16xf32>
    %84 = math.absf %82 : vector<16x16xf32>
    %85 = math.absf %83 : vector<16x16xf32>
    %86 = arith.addf %84, %85 : vector<16x16xf32>
    %87 = arith.maximumf %32, %59 : vector<16x16xf32>
    %88 = arith.subf %86, %87 : vector<16x16xf32>
    %89 = math.absf %88 : vector<16x16xf32>
    %90 = vector.shape_cast %89 : vector<16x16xf32> to vector<1x16x16xf32>
    %cst_22 = arith.constant dense<0.000000e+00> : vector<1xf32>
    %91 = vector.multi_reduction <add>, %90, %cst_22 [1, 2] : vector<1x16x16xf32> to vector<1xf32>
    %92 = vector.shape_cast %91 : vector<1xf32> to vector<1x1x1xf32>
    %93 = vector.extract %92[0, 0, 0] : f32 from vector<1x1x1xf32>
    %94 = arith.mulf %1, %32 : vector<16x16xf32>
    %95 = arith.mulf %3, %59 : vector<16x16xf32>
    %96 = tpu.bitcast %94 : vector<16x16xf32> -> vector<16x16xi32>
    %97 = tpu.bitcast %95 : vector<16x16xf32> -> vector<16x16xi32>
    %c0_i32 = arith.constant 0 : i32
    %c1073741823_i32 = arith.constant 1073741823 : i32
    %98 = arith.ori %c0_i32, %c1073741823_i32 : i32
    %c0_i32_23 = arith.constant 0 : i32
    %c1073741823_i32_24 = arith.constant 1073741823 : i32
    %99 = arith.ori %c0_i32_23, %c1073741823_i32_24 : i32
    %100 = vector.broadcast %98 : i32 to vector<16x16xi32>
    %101 = arith.cmpi sle, %96, %100 : vector<16x16xi32>
    %102 = arith.extui %101 : vector<16x16xi1> to vector<16x16xi32>
    %103 = vector.shape_cast %102 : vector<16x16xi32> to vector<1x16x16xi32>
    %cst_25 = arith.constant dense<0> : vector<1xi32>
    %104 = vector.multi_reduction <add>, %103, %cst_25 [1, 2] : vector<1x16x16xi32> to vector<1xi32>
    %105 = vector.shape_cast %104 : vector<1xi32> to vector<1x1x1xi32>
    %106 = vector.extract %105[0, 0, 0] : i32 from vector<1x1x1xi32>
    %107 = vector.broadcast %99 : i32 to vector<16x16xi32>
    %108 = arith.cmpi sle, %97, %107 : vector<16x16xi32>
    %109 = arith.extui %108 : vector<16x16xi1> to vector<16x16xi32>
    %110 = vector.shape_cast %109 : vector<16x16xi32> to vector<1x16x16xi32>
    %cst_26 = arith.constant dense<0> : vector<1xi32>
    %111 = vector.multi_reduction <add>, %110, %cst_26 [1, 2] : vector<1x16x16xi32> to vector<1xi32>
    %112 = vector.shape_cast %111 : vector<1xi32> to vector<1x1x1xi32>
    %113 = vector.extract %112[0, 0, 0] : i32 from vector<1x1x1xi32>
    %c205_i32 = arith.constant 205 : i32
    %114 = arith.cmpi sge, %106, %c205_i32 : i32
    %c0_i32_27 = arith.constant 0 : i32
    %c1073741824_i32 = arith.constant 1073741824 : i32
    %115 = arith.ori %c0_i32_27, %c1073741824_i32 : i32
    %c0_i32_28 = arith.constant 0 : i32
    %116 = arith.select %114, %c0_i32_28, %115 : i32
    %c205_i32_29 = arith.constant 205 : i32
    %117 = arith.cmpi sge, %113, %c205_i32_29 : i32
    %c0_i32_30 = arith.constant 0 : i32
    %c1073741824_i32_31 = arith.constant 1073741824 : i32
    %118 = arith.ori %c0_i32_30, %c1073741824_i32_31 : i32
    %c0_i32_32 = arith.constant 0 : i32
    %119 = arith.select %117, %c0_i32_32, %118 : i32
    %c536870911_i32 = arith.constant 536870911 : i32
    %120 = arith.ori %116, %c536870911_i32 : i32
    %c536870911_i32_33 = arith.constant 536870911 : i32
    %121 = arith.ori %119, %c536870911_i32_33 : i32
    %122 = vector.broadcast %120 : i32 to vector<16x16xi32>
    %123 = arith.cmpi sle, %96, %122 : vector<16x16xi32>
    %124 = arith.extui %123 : vector<16x16xi1> to vector<16x16xi32>
    %125 = vector.shape_cast %124 : vector<16x16xi32> to vector<1x16x16xi32>
    %cst_34 = arith.constant dense<0> : vector<1xi32>
    %126 = vector.multi_reduction <add>, %125, %cst_34 [1, 2] : vector<1x16x16xi32> to vector<1xi32>
    %127 = vector.shape_cast %126 : vector<1xi32> to vector<1x1x1xi32>
    %128 = vector.extract %127[0, 0, 0] : i32 from vector<1x1x1xi32>
    %129 = vector.broadcast %121 : i32 to vector<16x16xi32>
    %130 = arith.cmpi sle, %97, %129 : vector<16x16xi32>
    %131 = arith.extui %130 : vector<16x16xi1> to vector<16x16xi32>
    %132 = vector.shape_cast %131 : vector<16x16xi32> to vector<1x16x16xi32>
    %cst_35 = arith.constant dense<0> : vector<1xi32>
    %133 = vector.multi_reduction <add>, %132, %cst_35 [1, 2] : vector<1x16x16xi32> to vector<1xi32>
    %134 = vector.shape_cast %133 : vector<1xi32> to vector<1x1x1xi32>
    %135 = vector.extract %134[0, 0, 0] : i32 from vector<1x1x1xi32>
    %c205_i32_36 = arith.constant 205 : i32
    %136 = arith.cmpi sge, %128, %c205_i32_36 : i32
    %c536870912_i32 = arith.constant 536870912 : i32
    %137 = arith.ori %116, %c536870912_i32 : i32
    %138 = arith.select %136, %116, %137 : i32
    %c205_i32_37 = arith.constant 205 : i32
    %139 = arith.cmpi sge, %135, %c205_i32_37 : i32
    %c536870912_i32_38 = arith.constant 536870912 : i32
    %140 = arith.ori %119, %c536870912_i32_38 : i32
    %141 = arith.select %139, %119, %140 : i32
    %c268435455_i32 = arith.constant 268435455 : i32
    %142 = arith.ori %138, %c268435455_i32 : i32
    %c268435455_i32_39 = arith.constant 268435455 : i32
    %143 = arith.ori %141, %c268435455_i32_39 : i32
    %144 = vector.broadcast %142 : i32 to vector<16x16xi32>
    %145 = arith.cmpi sle, %96, %144 : vector<16x16xi32>
    %146 = arith.extui %145 : vector<16x16xi1> to vector<16x16xi32>
    %147 = vector.shape_cast %146 : vector<16x16xi32> to vector<1x16x16xi32>
    %cst_40 = arith.constant dense<0> : vector<1xi32>
    %148 = vector.multi_reduction <add>, %147, %cst_40 [1, 2] : vector<1x16x16xi32> to vector<1xi32>
    %149 = vector.shape_cast %148 : vector<1xi32> to vector<1x1x1xi32>
    %150 = vector.extract %149[0, 0, 0] : i32 from vector<1x1x1xi32>
    %151 = vector.broadcast %143 : i32 to vector<16x16xi32>
    %152 = arith.cmpi sle, %97, %151 : vector<16x16xi32>
    %153 = arith.extui %152 : vector<16x16xi1> to vector<16x16xi32>
    %154 = vector.shape_cast %153 : vector<16x16xi32> to vector<1x16x16xi32>
    %cst_41 = arith.constant dense<0> : vector<1xi32>
    %155 = vector.multi_reduction <add>, %154, %cst_41 [1, 2] : vector<1x16x16xi32> to vector<1xi32>
    %156 = vector.shape_cast %155 : vector<1xi32> to vector<1x1x1xi32>
    %157 = vector.extract %156[0, 0, 0] : i32 from vector<1x1x1xi32>
    %c205_i32_42 = arith.constant 205 : i32
    %158 = arith.cmpi sge, %150, %c205_i32_42 : i32
    %c268435456_i32 = arith.constant 268435456 : i32
    %159 = arith.ori %138, %c268435456_i32 : i32
    %160 = arith.select %158, %138, %159 : i32
    %c205_i32_43 = arith.constant 205 : i32
    %161 = arith.cmpi sge, %157, %c205_i32_43 : i32
    %c268435456_i32_44 = arith.constant 268435456 : i32
    %162 = arith.ori %141, %c268435456_i32_44 : i32
    %163 = arith.select %161, %141, %162 : i32
    %c134217727_i32 = arith.constant 134217727 : i32
    %164 = arith.ori %160, %c134217727_i32 : i32
    %c134217727_i32_45 = arith.constant 134217727 : i32
    %165 = arith.ori %163, %c134217727_i32_45 : i32
    %166 = vector.broadcast %164 : i32 to vector<16x16xi32>
    %167 = arith.cmpi sle, %96, %166 : vector<16x16xi32>
    %168 = arith.extui %167 : vector<16x16xi1> to vector<16x16xi32>
    %169 = vector.shape_cast %168 : vector<16x16xi32> to vector<1x16x16xi32>
    %cst_46 = arith.constant dense<0> : vector<1xi32>
    %170 = vector.multi_reduction <add>, %169, %cst_46 [1, 2] : vector<1x16x16xi32> to vector<1xi32>
    %171 = vector.shape_cast %170 : vector<1xi32> to vector<1x1x1xi32>
    %172 = vector.extract %171[0, 0, 0] : i32 from vector<1x1x1xi32>
    %173 = vector.broadcast %165 : i32 to vector<16x16xi32>
    %174 = arith.cmpi sle, %97, %173 : vector<16x16xi32>
    %175 = arith.extui %174 : vector<16x16xi1> to vector<16x16xi32>
    %176 = vector.shape_cast %175 : vector<16x16xi32> to vector<1x16x16xi32>
    %cst_47 = arith.constant dense<0> : vector<1xi32>
    %177 = vector.multi_reduction <add>, %176, %cst_47 [1, 2] : vector<1x16x16xi32> to vector<1xi32>
    %178 = vector.shape_cast %177 : vector<1xi32> to vector<1x1x1xi32>
    %179 = vector.extract %178[0, 0, 0] : i32 from vector<1x1x1xi32>
    %c205_i32_48 = arith.constant 205 : i32
    %180 = arith.cmpi sge, %172, %c205_i32_48 : i32
    %c134217728_i32 = arith.constant 134217728 : i32
    %181 = arith.ori %160, %c134217728_i32 : i32
    %182 = arith.select %180, %160, %181 : i32
    %c205_i32_49 = arith.constant 205 : i32
    %183 = arith.cmpi sge, %179, %c205_i32_49 : i32
    %c134217728_i32_50 = arith.constant 134217728 : i32
    %184 = arith.ori %163, %c134217728_i32_50 : i32
    %185 = arith.select %183, %163, %184 : i32
    %c67108863_i32 = arith.constant 67108863 : i32
    %186 = arith.ori %182, %c67108863_i32 : i32
    %c67108863_i32_51 = arith.constant 67108863 : i32
    %187 = arith.ori %185, %c67108863_i32_51 : i32
    %188 = vector.broadcast %186 : i32 to vector<16x16xi32>
    %189 = arith.cmpi sle, %96, %188 : vector<16x16xi32>
    %190 = arith.extui %189 : vector<16x16xi1> to vector<16x16xi32>
    %191 = vector.shape_cast %190 : vector<16x16xi32> to vector<1x16x16xi32>
    %cst_52 = arith.constant dense<0> : vector<1xi32>
    %192 = vector.multi_reduction <add>, %191, %cst_52 [1, 2] : vector<1x16x16xi32> to vector<1xi32>
    %193 = vector.shape_cast %192 : vector<1xi32> to vector<1x1x1xi32>
    %194 = vector.extract %193[0, 0, 0] : i32 from vector<1x1x1xi32>
    %195 = vector.broadcast %187 : i32 to vector<16x16xi32>
    %196 = arith.cmpi sle, %97, %195 : vector<16x16xi32>
    %197 = arith.extui %196 : vector<16x16xi1> to vector<16x16xi32>
    %198 = vector.shape_cast %197 : vector<16x16xi32> to vector<1x16x16xi32>
    %cst_53 = arith.constant dense<0> : vector<1xi32>
    %199 = vector.multi_reduction <add>, %198, %cst_53 [1, 2] : vector<1x16x16xi32> to vector<1xi32>
    %200 = vector.shape_cast %199 : vector<1xi32> to vector<1x1x1xi32>
    %201 = vector.extract %200[0, 0, 0] : i32 from vector<1x1x1xi32>
    %c205_i32_54 = arith.constant 205 : i32
    %202 = arith.cmpi sge, %194, %c205_i32_54 : i32
    %c67108864_i32 = arith.constant 67108864 : i32
    %203 = arith.ori %182, %c67108864_i32 : i32
    %204 = arith.select %202, %182, %203 : i32
    %c205_i32_55 = arith.constant 205 : i32
    %205 = arith.cmpi sge, %201, %c205_i32_55 : i32
    %c67108864_i32_56 = arith.constant 67108864 : i32
    %206 = arith.ori %185, %c67108864_i32_56 : i32
    %207 = arith.select %205, %185, %206 : i32
    %c33554431_i32 = arith.constant 33554431 : i32
    %208 = arith.ori %204, %c33554431_i32 : i32
    %c33554431_i32_57 = arith.constant 33554431 : i32
    %209 = arith.ori %207, %c33554431_i32_57 : i32
    %210 = vector.broadcast %208 : i32 to vector<16x16xi32>
    %211 = arith.cmpi sle, %96, %210 : vector<16x16xi32>
    %212 = arith.extui %211 : vector<16x16xi1> to vector<16x16xi32>
    %213 = vector.shape_cast %212 : vector<16x16xi32> to vector<1x16x16xi32>
    %cst_58 = arith.constant dense<0> : vector<1xi32>
    %214 = vector.multi_reduction <add>, %213, %cst_58 [1, 2] : vector<1x16x16xi32> to vector<1xi32>
    %215 = vector.shape_cast %214 : vector<1xi32> to vector<1x1x1xi32>
    %216 = vector.extract %215[0, 0, 0] : i32 from vector<1x1x1xi32>
    %217 = vector.broadcast %209 : i32 to vector<16x16xi32>
    %218 = arith.cmpi sle, %97, %217 : vector<16x16xi32>
    %219 = arith.extui %218 : vector<16x16xi1> to vector<16x16xi32>
    %220 = vector.shape_cast %219 : vector<16x16xi32> to vector<1x16x16xi32>
    %cst_59 = arith.constant dense<0> : vector<1xi32>
    %221 = vector.multi_reduction <add>, %220, %cst_59 [1, 2] : vector<1x16x16xi32> to vector<1xi32>
    %222 = vector.shape_cast %221 : vector<1xi32> to vector<1x1x1xi32>
    %223 = vector.extract %222[0, 0, 0] : i32 from vector<1x1x1xi32>
    %c205_i32_60 = arith.constant 205 : i32
    %224 = arith.cmpi sge, %216, %c205_i32_60 : i32
    %c33554432_i32 = arith.constant 33554432 : i32
    %225 = arith.ori %204, %c33554432_i32 : i32
    %226 = arith.select %224, %204, %225 : i32
    %c205_i32_61 = arith.constant 205 : i32
    %227 = arith.cmpi sge, %223, %c205_i32_61 : i32
    %c33554432_i32_62 = arith.constant 33554432 : i32
    %228 = arith.ori %207, %c33554432_i32_62 : i32
    %229 = arith.select %227, %207, %228 : i32
    %c16777215_i32 = arith.constant 16777215 : i32
    %230 = arith.ori %226, %c16777215_i32 : i32
    %c16777215_i32_63 = arith.constant 16777215 : i32
    %231 = arith.ori %229, %c16777215_i32_63 : i32
    %232 = vector.broadcast %230 : i32 to vector<16x16xi32>
    %233 = arith.cmpi sle, %96, %232 : vector<16x16xi32>
    %234 = arith.extui %233 : vector<16x16xi1> to vector<16x16xi32>
    %235 = vector.shape_cast %234 : vector<16x16xi32> to vector<1x16x16xi32>
    %cst_64 = arith.constant dense<0> : vector<1xi32>
    %236 = vector.multi_reduction <add>, %235, %cst_64 [1, 2] : vector<1x16x16xi32> to vector<1xi32>
    %237 = vector.shape_cast %236 : vector<1xi32> to vector<1x1x1xi32>
    %238 = vector.extract %237[0, 0, 0] : i32 from vector<1x1x1xi32>
    %239 = vector.broadcast %231 : i32 to vector<16x16xi32>
    %240 = arith.cmpi sle, %97, %239 : vector<16x16xi32>
    %241 = arith.extui %240 : vector<16x16xi1> to vector<16x16xi32>
    %242 = vector.shape_cast %241 : vector<16x16xi32> to vector<1x16x16xi32>
    %cst_65 = arith.constant dense<0> : vector<1xi32>
    %243 = vector.multi_reduction <add>, %242, %cst_65 [1, 2] : vector<1x16x16xi32> to vector<1xi32>
    %244 = vector.shape_cast %243 : vector<1xi32> to vector<1x1x1xi32>
    %245 = vector.extract %244[0, 0, 0] : i32 from vector<1x1x1xi32>
    %c205_i32_66 = arith.constant 205 : i32
    %246 = arith.cmpi sge, %238, %c205_i32_66 : i32
    %c16777216_i32 = arith.constant 16777216 : i32
    %247 = arith.ori %226, %c16777216_i32 : i32
    %248 = arith.select %246, %226, %247 : i32
    %c205_i32_67 = arith.constant 205 : i32
    %249 = arith.cmpi sge, %245, %c205_i32_67 : i32
    %c16777216_i32_68 = arith.constant 16777216 : i32
    %250 = arith.ori %229, %c16777216_i32_68 : i32
    %251 = arith.select %249, %229, %250 : i32
    %c8388607_i32 = arith.constant 8388607 : i32
    %252 = arith.ori %248, %c8388607_i32 : i32
    %c8388607_i32_69 = arith.constant 8388607 : i32
    %253 = arith.ori %251, %c8388607_i32_69 : i32
    %254 = vector.broadcast %252 : i32 to vector<16x16xi32>
    %255 = arith.cmpi sle, %96, %254 : vector<16x16xi32>
    %256 = arith.extui %255 : vector<16x16xi1> to vector<16x16xi32>
    %257 = vector.shape_cast %256 : vector<16x16xi32> to vector<1x16x16xi32>
    %cst_70 = arith.constant dense<0> : vector<1xi32>
    %258 = vector.multi_reduction <add>, %257, %cst_70 [1, 2] : vector<1x16x16xi32> to vector<1xi32>
    %259 = vector.shape_cast %258 : vector<1xi32> to vector<1x1x1xi32>
    %260 = vector.extract %259[0, 0, 0] : i32 from vector<1x1x1xi32>
    %261 = vector.broadcast %253 : i32 to vector<16x16xi32>
    %262 = arith.cmpi sle, %97, %261 : vector<16x16xi32>
    %263 = arith.extui %262 : vector<16x16xi1> to vector<16x16xi32>
    %264 = vector.shape_cast %263 : vector<16x16xi32> to vector<1x16x16xi32>
    %cst_71 = arith.constant dense<0> : vector<1xi32>
    %265 = vector.multi_reduction <add>, %264, %cst_71 [1, 2] : vector<1x16x16xi32> to vector<1xi32>
    %266 = vector.shape_cast %265 : vector<1xi32> to vector<1x1x1xi32>
    %267 = vector.extract %266[0, 0, 0] : i32 from vector<1x1x1xi32>
    %c205_i32_72 = arith.constant 205 : i32
    %268 = arith.cmpi sge, %260, %c205_i32_72 : i32
    %c8388608_i32 = arith.constant 8388608 : i32
    %269 = arith.ori %248, %c8388608_i32 : i32
    %270 = arith.select %268, %248, %269 : i32
    %c205_i32_73 = arith.constant 205 : i32
    %271 = arith.cmpi sge, %267, %c205_i32_73 : i32
    %c8388608_i32_74 = arith.constant 8388608 : i32
    %272 = arith.ori %251, %c8388608_i32_74 : i32
    %273 = arith.select %271, %251, %272 : i32
    %c4194303_i32 = arith.constant 4194303 : i32
    %274 = arith.ori %270, %c4194303_i32 : i32
    %c4194303_i32_75 = arith.constant 4194303 : i32
    %275 = arith.ori %273, %c4194303_i32_75 : i32
    %276 = vector.broadcast %274 : i32 to vector<16x16xi32>
    %277 = arith.cmpi sle, %96, %276 : vector<16x16xi32>
    %278 = arith.extui %277 : vector<16x16xi1> to vector<16x16xi32>
    %279 = vector.shape_cast %278 : vector<16x16xi32> to vector<1x16x16xi32>
    %cst_76 = arith.constant dense<0> : vector<1xi32>
    %280 = vector.multi_reduction <add>, %279, %cst_76 [1, 2] : vector<1x16x16xi32> to vector<1xi32>
    %281 = vector.shape_cast %280 : vector<1xi32> to vector<1x1x1xi32>
    %282 = vector.extract %281[0, 0, 0] : i32 from vector<1x1x1xi32>
    %283 = vector.broadcast %275 : i32 to vector<16x16xi32>
    %284 = arith.cmpi sle, %97, %283 : vector<16x16xi32>
    %285 = arith.extui %284 : vector<16x16xi1> to vector<16x16xi32>
    %286 = vector.shape_cast %285 : vector<16x16xi32> to vector<1x16x16xi32>
    %cst_77 = arith.constant dense<0> : vector<1xi32>
    %287 = vector.multi_reduction <add>, %286, %cst_77 [1, 2] : vector<1x16x16xi32> to vector<1xi32>
    %288 = vector.shape_cast %287 : vector<1xi32> to vector<1x1x1xi32>
    %289 = vector.extract %288[0, 0, 0] : i32 from vector<1x1x1xi32>
    %c205_i32_78 = arith.constant 205 : i32
    %290 = arith.cmpi sge, %282, %c205_i32_78 : i32
    %c4194304_i32 = arith.constant 4194304 : i32
    %291 = arith.ori %270, %c4194304_i32 : i32
    %292 = arith.select %290, %270, %291 : i32
    %c205_i32_79 = arith.constant 205 : i32
    %293 = arith.cmpi sge, %289, %c205_i32_79 : i32
    %c4194304_i32_80 = arith.constant 4194304 : i32
    %294 = arith.ori %273, %c4194304_i32_80 : i32
    %295 = arith.select %293, %273, %294 : i32
    %c2097151_i32 = arith.constant 2097151 : i32
    %296 = arith.ori %292, %c2097151_i32 : i32
    %c2097151_i32_81 = arith.constant 2097151 : i32
    %297 = arith.ori %295, %c2097151_i32_81 : i32
    %298 = vector.broadcast %296 : i32 to vector<16x16xi32>
    %299 = arith.cmpi sle, %96, %298 : vector<16x16xi32>
    %300 = arith.extui %299 : vector<16x16xi1> to vector<16x16xi32>
    %301 = vector.shape_cast %300 : vector<16x16xi32> to vector<1x16x16xi32>
    %cst_82 = arith.constant dense<0> : vector<1xi32>
    %302 = vector.multi_reduction <add>, %301, %cst_82 [1, 2] : vector<1x16x16xi32> to vector<1xi32>
    %303 = vector.shape_cast %302 : vector<1xi32> to vector<1x1x1xi32>
    %304 = vector.extract %303[0, 0, 0] : i32 from vector<1x1x1xi32>
    %305 = vector.broadcast %297 : i32 to vector<16x16xi32>
    %306 = arith.cmpi sle, %97, %305 : vector<16x16xi32>
    %307 = arith.extui %306 : vector<16x16xi1> to vector<16x16xi32>
    %308 = vector.shape_cast %307 : vector<16x16xi32> to vector<1x16x16xi32>
    %cst_83 = arith.constant dense<0> : vector<1xi32>
    %309 = vector.multi_reduction <add>, %308, %cst_83 [1, 2] : vector<1x16x16xi32> to vector<1xi32>
    %310 = vector.shape_cast %309 : vector<1xi32> to vector<1x1x1xi32>
    %311 = vector.extract %310[0, 0, 0] : i32 from vector<1x1x1xi32>
    %c205_i32_84 = arith.constant 205 : i32
    %312 = arith.cmpi sge, %304, %c205_i32_84 : i32
    %c2097152_i32 = arith.constant 2097152 : i32
    %313 = arith.ori %292, %c2097152_i32 : i32
    %314 = arith.select %312, %292, %313 : i32
    %c205_i32_85 = arith.constant 205 : i32
    %315 = arith.cmpi sge, %311, %c205_i32_85 : i32
    %c2097152_i32_86 = arith.constant 2097152 : i32
    %316 = arith.ori %295, %c2097152_i32_86 : i32
    %317 = arith.select %315, %295, %316 : i32
    %c1048575_i32 = arith.constant 1048575 : i32
    %318 = arith.ori %314, %c1048575_i32 : i32
    %c1048575_i32_87 = arith.constant 1048575 : i32
    %319 = arith.ori %317, %c1048575_i32_87 : i32
    %320 = vector.broadcast %318 : i32 to vector<16x16xi32>
    %321 = arith.cmpi sle, %96, %320 : vector<16x16xi32>
    %322 = arith.extui %321 : vector<16x16xi1> to vector<16x16xi32>
    %323 = vector.shape_cast %322 : vector<16x16xi32> to vector<1x16x16xi32>
    %cst_88 = arith.constant dense<0> : vector<1xi32>
    %324 = vector.multi_reduction <add>, %323, %cst_88 [1, 2] : vector<1x16x16xi32> to vector<1xi32>
    %325 = vector.shape_cast %324 : vector<1xi32> to vector<1x1x1xi32>
    %326 = vector.extract %325[0, 0, 0] : i32 from vector<1x1x1xi32>
    %327 = vector.broadcast %319 : i32 to vector<16x16xi32>
    %328 = arith.cmpi sle, %97, %327 : vector<16x16xi32>
    %329 = arith.extui %328 : vector<16x16xi1> to vector<16x16xi32>
    %330 = vector.shape_cast %329 : vector<16x16xi32> to vector<1x16x16xi32>
    %cst_89 = arith.constant dense<0> : vector<1xi32>
    %331 = vector.multi_reduction <add>, %330, %cst_89 [1, 2] : vector<1x16x16xi32> to vector<1xi32>
    %332 = vector.shape_cast %331 : vector<1xi32> to vector<1x1x1xi32>
    %333 = vector.extract %332[0, 0, 0] : i32 from vector<1x1x1xi32>
    %c205_i32_90 = arith.constant 205 : i32
    %334 = arith.cmpi sge, %326, %c205_i32_90 : i32
    %c1048576_i32 = arith.constant 1048576 : i32
    %335 = arith.ori %314, %c1048576_i32 : i32
    %336 = arith.select %334, %314, %335 : i32
    %c205_i32_91 = arith.constant 205 : i32
    %337 = arith.cmpi sge, %333, %c205_i32_91 : i32
    %c1048576_i32_92 = arith.constant 1048576 : i32
    %338 = arith.ori %317, %c1048576_i32_92 : i32
    %339 = arith.select %337, %317, %338 : i32
    %c524287_i32 = arith.constant 524287 : i32
    %340 = arith.ori %336, %c524287_i32 : i32
    %c524287_i32_93 = arith.constant 524287 : i32
    %341 = arith.ori %339, %c524287_i32_93 : i32
    %342 = vector.broadcast %340 : i32 to vector<16x16xi32>
    %343 = arith.cmpi sle, %96, %342 : vector<16x16xi32>
    %344 = arith.extui %343 : vector<16x16xi1> to vector<16x16xi32>
    %345 = vector.shape_cast %344 : vector<16x16xi32> to vector<1x16x16xi32>
    %cst_94 = arith.constant dense<0> : vector<1xi32>
    %346 = vector.multi_reduction <add>, %345, %cst_94 [1, 2] : vector<1x16x16xi32> to vector<1xi32>
    %347 = vector.shape_cast %346 : vector<1xi32> to vector<1x1x1xi32>
    %348 = vector.extract %347[0, 0, 0] : i32 from vector<1x1x1xi32>
    %349 = vector.broadcast %341 : i32 to vector<16x16xi32>
    %350 = arith.cmpi sle, %97, %349 : vector<16x16xi32>
    %351 = arith.extui %350 : vector<16x16xi1> to vector<16x16xi32>
    %352 = vector.shape_cast %351 : vector<16x16xi32> to vector<1x16x16xi32>
    %cst_95 = arith.constant dense<0> : vector<1xi32>
    %353 = vector.multi_reduction <add>, %352, %cst_95 [1, 2] : vector<1x16x16xi32> to vector<1xi32>
    %354 = vector.shape_cast %353 : vector<1xi32> to vector<1x1x1xi32>
    %355 = vector.extract %354[0, 0, 0] : i32 from vector<1x1x1xi32>
    %c205_i32_96 = arith.constant 205 : i32
    %356 = arith.cmpi sge, %348, %c205_i32_96 : i32
    %c524288_i32 = arith.constant 524288 : i32
    %357 = arith.ori %336, %c524288_i32 : i32
    %358 = arith.select %356, %336, %357 : i32
    %c205_i32_97 = arith.constant 205 : i32
    %359 = arith.cmpi sge, %355, %c205_i32_97 : i32
    %c524288_i32_98 = arith.constant 524288 : i32
    %360 = arith.ori %339, %c524288_i32_98 : i32
    %361 = arith.select %359, %339, %360 : i32
    %c262143_i32 = arith.constant 262143 : i32
    %362 = arith.ori %358, %c262143_i32 : i32
    %c262143_i32_99 = arith.constant 262143 : i32
    %363 = arith.ori %361, %c262143_i32_99 : i32
    %364 = vector.broadcast %362 : i32 to vector<16x16xi32>
    %365 = arith.cmpi sle, %96, %364 : vector<16x16xi32>
    %366 = arith.extui %365 : vector<16x16xi1> to vector<16x16xi32>
    %367 = vector.shape_cast %366 : vector<16x16xi32> to vector<1x16x16xi32>
    %cst_100 = arith.constant dense<0> : vector<1xi32>
    %368 = vector.multi_reduction <add>, %367, %cst_100 [1, 2] : vector<1x16x16xi32> to vector<1xi32>
    %369 = vector.shape_cast %368 : vector<1xi32> to vector<1x1x1xi32>
    %370 = vector.extract %369[0, 0, 0] : i32 from vector<1x1x1xi32>
    %371 = vector.broadcast %363 : i32 to vector<16x16xi32>
    %372 = arith.cmpi sle, %97, %371 : vector<16x16xi32>
    %373 = arith.extui %372 : vector<16x16xi1> to vector<16x16xi32>
    %374 = vector.shape_cast %373 : vector<16x16xi32> to vector<1x16x16xi32>
    %cst_101 = arith.constant dense<0> : vector<1xi32>
    %375 = vector.multi_reduction <add>, %374, %cst_101 [1, 2] : vector<1x16x16xi32> to vector<1xi32>
    %376 = vector.shape_cast %375 : vector<1xi32> to vector<1x1x1xi32>
    %377 = vector.extract %376[0, 0, 0] : i32 from vector<1x1x1xi32>
    %c205_i32_102 = arith.constant 205 : i32
    %378 = arith.cmpi sge, %370, %c205_i32_102 : i32
    %c262144_i32 = arith.constant 262144 : i32
    %379 = arith.ori %358, %c262144_i32 : i32
    %380 = arith.select %378, %358, %379 : i32
    %c205_i32_103 = arith.constant 205 : i32
    %381 = arith.cmpi sge, %377, %c205_i32_103 : i32
    %c262144_i32_104 = arith.constant 262144 : i32
    %382 = arith.ori %361, %c262144_i32_104 : i32
    %383 = arith.select %381, %361, %382 : i32
    %c131071_i32 = arith.constant 131071 : i32
    %384 = arith.ori %380, %c131071_i32 : i32
    %c131071_i32_105 = arith.constant 131071 : i32
    %385 = arith.ori %383, %c131071_i32_105 : i32
    %386 = vector.broadcast %384 : i32 to vector<16x16xi32>
    %387 = arith.cmpi sle, %96, %386 : vector<16x16xi32>
    %388 = arith.extui %387 : vector<16x16xi1> to vector<16x16xi32>
    %389 = vector.shape_cast %388 : vector<16x16xi32> to vector<1x16x16xi32>
    %cst_106 = arith.constant dense<0> : vector<1xi32>
    %390 = vector.multi_reduction <add>, %389, %cst_106 [1, 2] : vector<1x16x16xi32> to vector<1xi32>
    %391 = vector.shape_cast %390 : vector<1xi32> to vector<1x1x1xi32>
    %392 = vector.extract %391[0, 0, 0] : i32 from vector<1x1x1xi32>
    %393 = vector.broadcast %385 : i32 to vector<16x16xi32>
    %394 = arith.cmpi sle, %97, %393 : vector<16x16xi32>
    %395 = arith.extui %394 : vector<16x16xi1> to vector<16x16xi32>
    %396 = vector.shape_cast %395 : vector<16x16xi32> to vector<1x16x16xi32>
    %cst_107 = arith.constant dense<0> : vector<1xi32>
    %397 = vector.multi_reduction <add>, %396, %cst_107 [1, 2] : vector<1x16x16xi32> to vector<1xi32>
    %398 = vector.shape_cast %397 : vector<1xi32> to vector<1x1x1xi32>
    %399 = vector.extract %398[0, 0, 0] : i32 from vector<1x1x1xi32>
    %c205_i32_108 = arith.constant 205 : i32
    %400 = arith.cmpi sge, %392, %c205_i32_108 : i32
    %c131072_i32 = arith.constant 131072 : i32
    %401 = arith.ori %380, %c131072_i32 : i32
    %402 = arith.select %400, %380, %401 : i32
    %c205_i32_109 = arith.constant 205 : i32
    %403 = arith.cmpi sge, %399, %c205_i32_109 : i32
    %c131072_i32_110 = arith.constant 131072 : i32
    %404 = arith.ori %383, %c131072_i32_110 : i32
    %405 = arith.select %403, %383, %404 : i32
    %c65535_i32 = arith.constant 65535 : i32
    %406 = arith.ori %402, %c65535_i32 : i32
    %c65535_i32_111 = arith.constant 65535 : i32
    %407 = arith.ori %405, %c65535_i32_111 : i32
    %408 = vector.broadcast %406 : i32 to vector<16x16xi32>
    %409 = arith.cmpi sle, %96, %408 : vector<16x16xi32>
    %410 = arith.extui %409 : vector<16x16xi1> to vector<16x16xi32>
    %411 = vector.shape_cast %410 : vector<16x16xi32> to vector<1x16x16xi32>
    %cst_112 = arith.constant dense<0> : vector<1xi32>
    %412 = vector.multi_reduction <add>, %411, %cst_112 [1, 2] : vector<1x16x16xi32> to vector<1xi32>
    %413 = vector.shape_cast %412 : vector<1xi32> to vector<1x1x1xi32>
    %414 = vector.extract %413[0, 0, 0] : i32 from vector<1x1x1xi32>
    %415 = vector.broadcast %407 : i32 to vector<16x16xi32>
    %416 = arith.cmpi sle, %97, %415 : vector<16x16xi32>
    %417 = arith.extui %416 : vector<16x16xi1> to vector<16x16xi32>
    %418 = vector.shape_cast %417 : vector<16x16xi32> to vector<1x16x16xi32>
    %cst_113 = arith.constant dense<0> : vector<1xi32>
    %419 = vector.multi_reduction <add>, %418, %cst_113 [1, 2] : vector<1x16x16xi32> to vector<1xi32>
    %420 = vector.shape_cast %419 : vector<1xi32> to vector<1x1x1xi32>
    %421 = vector.extract %420[0, 0, 0] : i32 from vector<1x1x1xi32>
    %c205_i32_114 = arith.constant 205 : i32
    %422 = arith.cmpi sge, %414, %c205_i32_114 : i32
    %c65536_i32 = arith.constant 65536 : i32
    %423 = arith.ori %402, %c65536_i32 : i32
    %424 = arith.select %422, %402, %423 : i32
    %c205_i32_115 = arith.constant 205 : i32
    %425 = arith.cmpi sge, %421, %c205_i32_115 : i32
    %c65536_i32_116 = arith.constant 65536 : i32
    %426 = arith.ori %405, %c65536_i32_116 : i32
    %427 = arith.select %425, %405, %426 : i32
    %c32767_i32 = arith.constant 32767 : i32
    %428 = arith.ori %424, %c32767_i32 : i32
    %c32767_i32_117 = arith.constant 32767 : i32
    %429 = arith.ori %427, %c32767_i32_117 : i32
    %430 = vector.broadcast %428 : i32 to vector<16x16xi32>
    %431 = arith.cmpi sle, %96, %430 : vector<16x16xi32>
    %432 = arith.extui %431 : vector<16x16xi1> to vector<16x16xi32>
    %433 = vector.shape_cast %432 : vector<16x16xi32> to vector<1x16x16xi32>
    %cst_118 = arith.constant dense<0> : vector<1xi32>
    %434 = vector.multi_reduction <add>, %433, %cst_118 [1, 2] : vector<1x16x16xi32> to vector<1xi32>
    %435 = vector.shape_cast %434 : vector<1xi32> to vector<1x1x1xi32>
    %436 = vector.extract %435[0, 0, 0] : i32 from vector<1x1x1xi32>
    %437 = vector.broadcast %429 : i32 to vector<16x16xi32>
    %438 = arith.cmpi sle, %97, %437 : vector<16x16xi32>
    %439 = arith.extui %438 : vector<16x16xi1> to vector<16x16xi32>
    %440 = vector.shape_cast %439 : vector<16x16xi32> to vector<1x16x16xi32>
    %cst_119 = arith.constant dense<0> : vector<1xi32>
    %441 = vector.multi_reduction <add>, %440, %cst_119 [1, 2] : vector<1x16x16xi32> to vector<1xi32>
    %442 = vector.shape_cast %441 : vector<1xi32> to vector<1x1x1xi32>
    %443 = vector.extract %442[0, 0, 0] : i32 from vector<1x1x1xi32>
    %c205_i32_120 = arith.constant 205 : i32
    %444 = arith.cmpi sge, %436, %c205_i32_120 : i32
    %c32768_i32 = arith.constant 32768 : i32
    %445 = arith.ori %424, %c32768_i32 : i32
    %446 = arith.select %444, %424, %445 : i32
    %c205_i32_121 = arith.constant 205 : i32
    %447 = arith.cmpi sge, %443, %c205_i32_121 : i32
    %c32768_i32_122 = arith.constant 32768 : i32
    %448 = arith.ori %427, %c32768_i32_122 : i32
    %449 = arith.select %447, %427, %448 : i32
    %c16383_i32 = arith.constant 16383 : i32
    %450 = arith.ori %446, %c16383_i32 : i32
    %c16383_i32_123 = arith.constant 16383 : i32
    %451 = arith.ori %449, %c16383_i32_123 : i32
    %452 = vector.broadcast %450 : i32 to vector<16x16xi32>
    %453 = arith.cmpi sle, %96, %452 : vector<16x16xi32>
    %454 = arith.extui %453 : vector<16x16xi1> to vector<16x16xi32>
    %455 = vector.shape_cast %454 : vector<16x16xi32> to vector<1x16x16xi32>
    %cst_124 = arith.constant dense<0> : vector<1xi32>
    %456 = vector.multi_reduction <add>, %455, %cst_124 [1, 2] : vector<1x16x16xi32> to vector<1xi32>
    %457 = vector.shape_cast %456 : vector<1xi32> to vector<1x1x1xi32>
    %458 = vector.extract %457[0, 0, 0] : i32 from vector<1x1x1xi32>
    %459 = vector.broadcast %451 : i32 to vector<16x16xi32>
    %460 = arith.cmpi sle, %97, %459 : vector<16x16xi32>
    %461 = arith.extui %460 : vector<16x16xi1> to vector<16x16xi32>
    %462 = vector.shape_cast %461 : vector<16x16xi32> to vector<1x16x16xi32>
    %cst_125 = arith.constant dense<0> : vector<1xi32>
    %463 = vector.multi_reduction <add>, %462, %cst_125 [1, 2] : vector<1x16x16xi32> to vector<1xi32>
    %464 = vector.shape_cast %463 : vector<1xi32> to vector<1x1x1xi32>
    %465 = vector.extract %464[0, 0, 0] : i32 from vector<1x1x1xi32>
    %c205_i32_126 = arith.constant 205 : i32
    %466 = arith.cmpi sge, %458, %c205_i32_126 : i32
    %c16384_i32 = arith.constant 16384 : i32
    %467 = arith.ori %446, %c16384_i32 : i32
    %468 = arith.select %466, %446, %467 : i32
    %c205_i32_127 = arith.constant 205 : i32
    %469 = arith.cmpi sge, %465, %c205_i32_127 : i32
    %c16384_i32_128 = arith.constant 16384 : i32
    %470 = arith.ori %449, %c16384_i32_128 : i32
    %471 = arith.select %469, %449, %470 : i32
    %c8191_i32 = arith.constant 8191 : i32
    %472 = arith.ori %468, %c8191_i32 : i32
    %c8191_i32_129 = arith.constant 8191 : i32
    %473 = arith.ori %471, %c8191_i32_129 : i32
    %474 = vector.broadcast %472 : i32 to vector<16x16xi32>
    %475 = arith.cmpi sle, %96, %474 : vector<16x16xi32>
    %476 = arith.extui %475 : vector<16x16xi1> to vector<16x16xi32>
    %477 = vector.shape_cast %476 : vector<16x16xi32> to vector<1x16x16xi32>
    %cst_130 = arith.constant dense<0> : vector<1xi32>
    %478 = vector.multi_reduction <add>, %477, %cst_130 [1, 2] : vector<1x16x16xi32> to vector<1xi32>
    %479 = vector.shape_cast %478 : vector<1xi32> to vector<1x1x1xi32>
    %480 = vector.extract %479[0, 0, 0] : i32 from vector<1x1x1xi32>
    %481 = vector.broadcast %473 : i32 to vector<16x16xi32>
    %482 = arith.cmpi sle, %97, %481 : vector<16x16xi32>
    %483 = arith.extui %482 : vector<16x16xi1> to vector<16x16xi32>
    %484 = vector.shape_cast %483 : vector<16x16xi32> to vector<1x16x16xi32>
    %cst_131 = arith.constant dense<0> : vector<1xi32>
    %485 = vector.multi_reduction <add>, %484, %cst_131 [1, 2] : vector<1x16x16xi32> to vector<1xi32>
    %486 = vector.shape_cast %485 : vector<1xi32> to vector<1x1x1xi32>
    %487 = vector.extract %486[0, 0, 0] : i32 from vector<1x1x1xi32>
    %c205_i32_132 = arith.constant 205 : i32
    %488 = arith.cmpi sge, %480, %c205_i32_132 : i32
    %c8192_i32 = arith.constant 8192 : i32
    %489 = arith.ori %468, %c8192_i32 : i32
    %490 = arith.select %488, %468, %489 : i32
    %c205_i32_133 = arith.constant 205 : i32
    %491 = arith.cmpi sge, %487, %c205_i32_133 : i32
    %c8192_i32_134 = arith.constant 8192 : i32
    %492 = arith.ori %471, %c8192_i32_134 : i32
    %493 = arith.select %491, %471, %492 : i32
    %c4095_i32 = arith.constant 4095 : i32
    %494 = arith.ori %490, %c4095_i32 : i32
    %c4095_i32_135 = arith.constant 4095 : i32
    %495 = arith.ori %493, %c4095_i32_135 : i32
    %496 = vector.broadcast %494 : i32 to vector<16x16xi32>
    %497 = arith.cmpi sle, %96, %496 : vector<16x16xi32>
    %498 = arith.extui %497 : vector<16x16xi1> to vector<16x16xi32>
    %499 = vector.shape_cast %498 : vector<16x16xi32> to vector<1x16x16xi32>
    %cst_136 = arith.constant dense<0> : vector<1xi32>
    %500 = vector.multi_reduction <add>, %499, %cst_136 [1, 2] : vector<1x16x16xi32> to vector<1xi32>
    %501 = vector.shape_cast %500 : vector<1xi32> to vector<1x1x1xi32>
    %502 = vector.extract %501[0, 0, 0] : i32 from vector<1x1x1xi32>
    %503 = vector.broadcast %495 : i32 to vector<16x16xi32>
    %504 = arith.cmpi sle, %97, %503 : vector<16x16xi32>
    %505 = arith.extui %504 : vector<16x16xi1> to vector<16x16xi32>
    %506 = vector.shape_cast %505 : vector<16x16xi32> to vector<1x16x16xi32>
    %cst_137 = arith.constant dense<0> : vector<1xi32>
    %507 = vector.multi_reduction <add>, %506, %cst_137 [1, 2] : vector<1x16x16xi32> to vector<1xi32>
    %508 = vector.shape_cast %507 : vector<1xi32> to vector<1x1x1xi32>
    %509 = vector.extract %508[0, 0, 0] : i32 from vector<1x1x1xi32>
    %c205_i32_138 = arith.constant 205 : i32
    %510 = arith.cmpi sge, %502, %c205_i32_138 : i32
    %c4096_i32 = arith.constant 4096 : i32
    %511 = arith.ori %490, %c4096_i32 : i32
    %512 = arith.select %510, %490, %511 : i32
    %c205_i32_139 = arith.constant 205 : i32
    %513 = arith.cmpi sge, %509, %c205_i32_139 : i32
    %c4096_i32_140 = arith.constant 4096 : i32
    %514 = arith.ori %493, %c4096_i32_140 : i32
    %515 = arith.select %513, %493, %514 : i32
    %c2047_i32 = arith.constant 2047 : i32
    %516 = arith.ori %512, %c2047_i32 : i32
    %c2047_i32_141 = arith.constant 2047 : i32
    %517 = arith.ori %515, %c2047_i32_141 : i32
    %518 = vector.broadcast %516 : i32 to vector<16x16xi32>
    %519 = arith.cmpi sle, %96, %518 : vector<16x16xi32>
    %520 = arith.extui %519 : vector<16x16xi1> to vector<16x16xi32>
    %521 = vector.shape_cast %520 : vector<16x16xi32> to vector<1x16x16xi32>
    %cst_142 = arith.constant dense<0> : vector<1xi32>
    %522 = vector.multi_reduction <add>, %521, %cst_142 [1, 2] : vector<1x16x16xi32> to vector<1xi32>
    %523 = vector.shape_cast %522 : vector<1xi32> to vector<1x1x1xi32>
    %524 = vector.extract %523[0, 0, 0] : i32 from vector<1x1x1xi32>
    %525 = vector.broadcast %517 : i32 to vector<16x16xi32>
    %526 = arith.cmpi sle, %97, %525 : vector<16x16xi32>
    %527 = arith.extui %526 : vector<16x16xi1> to vector<16x16xi32>
    %528 = vector.shape_cast %527 : vector<16x16xi32> to vector<1x16x16xi32>
    %cst_143 = arith.constant dense<0> : vector<1xi32>
    %529 = vector.multi_reduction <add>, %528, %cst_143 [1, 2] : vector<1x16x16xi32> to vector<1xi32>
    %530 = vector.shape_cast %529 : vector<1xi32> to vector<1x1x1xi32>
    %531 = vector.extract %530[0, 0, 0] : i32 from vector<1x1x1xi32>
    %c205_i32_144 = arith.constant 205 : i32
    %532 = arith.cmpi sge, %524, %c205_i32_144 : i32
    %c2048_i32 = arith.constant 2048 : i32
    %533 = arith.ori %512, %c2048_i32 : i32
    %534 = arith.select %532, %512, %533 : i32
    %c205_i32_145 = arith.constant 205 : i32
    %535 = arith.cmpi sge, %531, %c205_i32_145 : i32
    %c2048_i32_146 = arith.constant 2048 : i32
    %536 = arith.ori %515, %c2048_i32_146 : i32
    %537 = arith.select %535, %515, %536 : i32
    %c1023_i32 = arith.constant 1023 : i32
    %538 = arith.ori %534, %c1023_i32 : i32
    %c1023_i32_147 = arith.constant 1023 : i32
    %539 = arith.ori %537, %c1023_i32_147 : i32
    %540 = vector.broadcast %538 : i32 to vector<16x16xi32>
    %541 = arith.cmpi sle, %96, %540 : vector<16x16xi32>
    %542 = arith.extui %541 : vector<16x16xi1> to vector<16x16xi32>
    %543 = vector.shape_cast %542 : vector<16x16xi32> to vector<1x16x16xi32>
    %cst_148 = arith.constant dense<0> : vector<1xi32>
    %544 = vector.multi_reduction <add>, %543, %cst_148 [1, 2] : vector<1x16x16xi32> to vector<1xi32>
    %545 = vector.shape_cast %544 : vector<1xi32> to vector<1x1x1xi32>
    %546 = vector.extract %545[0, 0, 0] : i32 from vector<1x1x1xi32>
    %547 = vector.broadcast %539 : i32 to vector<16x16xi32>
    %548 = arith.cmpi sle, %97, %547 : vector<16x16xi32>
    %549 = arith.extui %548 : vector<16x16xi1> to vector<16x16xi32>
    %550 = vector.shape_cast %549 : vector<16x16xi32> to vector<1x16x16xi32>
    %cst_149 = arith.constant dense<0> : vector<1xi32>
    %551 = vector.multi_reduction <add>, %550, %cst_149 [1, 2] : vector<1x16x16xi32> to vector<1xi32>
    %552 = vector.shape_cast %551 : vector<1xi32> to vector<1x1x1xi32>
    %553 = vector.extract %552[0, 0, 0] : i32 from vector<1x1x1xi32>
    %c205_i32_150 = arith.constant 205 : i32
    %554 = arith.cmpi sge, %546, %c205_i32_150 : i32
    %c1024_i32 = arith.constant 1024 : i32
    %555 = arith.ori %534, %c1024_i32 : i32
    %556 = arith.select %554, %534, %555 : i32
    %c205_i32_151 = arith.constant 205 : i32
    %557 = arith.cmpi sge, %553, %c205_i32_151 : i32
    %c1024_i32_152 = arith.constant 1024 : i32
    %558 = arith.ori %537, %c1024_i32_152 : i32
    %559 = arith.select %557, %537, %558 : i32
    %c511_i32 = arith.constant 511 : i32
    %560 = arith.ori %556, %c511_i32 : i32
    %c511_i32_153 = arith.constant 511 : i32
    %561 = arith.ori %559, %c511_i32_153 : i32
    %562 = vector.broadcast %560 : i32 to vector<16x16xi32>
    %563 = arith.cmpi sle, %96, %562 : vector<16x16xi32>
    %564 = arith.extui %563 : vector<16x16xi1> to vector<16x16xi32>
    %565 = vector.shape_cast %564 : vector<16x16xi32> to vector<1x16x16xi32>
    %cst_154 = arith.constant dense<0> : vector<1xi32>
    %566 = vector.multi_reduction <add>, %565, %cst_154 [1, 2] : vector<1x16x16xi32> to vector<1xi32>
    %567 = vector.shape_cast %566 : vector<1xi32> to vector<1x1x1xi32>
    %568 = vector.extract %567[0, 0, 0] : i32 from vector<1x1x1xi32>
    %569 = vector.broadcast %561 : i32 to vector<16x16xi32>
    %570 = arith.cmpi sle, %97, %569 : vector<16x16xi32>
    %571 = arith.extui %570 : vector<16x16xi1> to vector<16x16xi32>
    %572 = vector.shape_cast %571 : vector<16x16xi32> to vector<1x16x16xi32>
    %cst_155 = arith.constant dense<0> : vector<1xi32>
    %573 = vector.multi_reduction <add>, %572, %cst_155 [1, 2] : vector<1x16x16xi32> to vector<1xi32>
    %574 = vector.shape_cast %573 : vector<1xi32> to vector<1x1x1xi32>
    %575 = vector.extract %574[0, 0, 0] : i32 from vector<1x1x1xi32>
    %c205_i32_156 = arith.constant 205 : i32
    %576 = arith.cmpi sge, %568, %c205_i32_156 : i32
    %c512_i32 = arith.constant 512 : i32
    %577 = arith.ori %556, %c512_i32 : i32
    %578 = arith.select %576, %556, %577 : i32
    %c205_i32_157 = arith.constant 205 : i32
    %579 = arith.cmpi sge, %575, %c205_i32_157 : i32
    %c512_i32_158 = arith.constant 512 : i32
    %580 = arith.ori %559, %c512_i32_158 : i32
    %581 = arith.select %579, %559, %580 : i32
    %c255_i32 = arith.constant 255 : i32
    %582 = arith.ori %578, %c255_i32 : i32
    %c255_i32_159 = arith.constant 255 : i32
    %583 = arith.ori %581, %c255_i32_159 : i32
    %584 = vector.broadcast %582 : i32 to vector<16x16xi32>
    %585 = arith.cmpi sle, %96, %584 : vector<16x16xi32>
    %586 = arith.extui %585 : vector<16x16xi1> to vector<16x16xi32>
    %587 = vector.shape_cast %586 : vector<16x16xi32> to vector<1x16x16xi32>
    %cst_160 = arith.constant dense<0> : vector<1xi32>
    %588 = vector.multi_reduction <add>, %587, %cst_160 [1, 2] : vector<1x16x16xi32> to vector<1xi32>
    %589 = vector.shape_cast %588 : vector<1xi32> to vector<1x1x1xi32>
    %590 = vector.extract %589[0, 0, 0] : i32 from vector<1x1x1xi32>
    %591 = vector.broadcast %583 : i32 to vector<16x16xi32>
    %592 = arith.cmpi sle, %97, %591 : vector<16x16xi32>
    %593 = arith.extui %592 : vector<16x16xi1> to vector<16x16xi32>
    %594 = vector.shape_cast %593 : vector<16x16xi32> to vector<1x16x16xi32>
    %cst_161 = arith.constant dense<0> : vector<1xi32>
    %595 = vector.multi_reduction <add>, %594, %cst_161 [1, 2] : vector<1x16x16xi32> to vector<1xi32>
    %596 = vector.shape_cast %595 : vector<1xi32> to vector<1x1x1xi32>
    %597 = vector.extract %596[0, 0, 0] : i32 from vector<1x1x1xi32>
    %c205_i32_162 = arith.constant 205 : i32
    %598 = arith.cmpi sge, %590, %c205_i32_162 : i32
    %c256_i32 = arith.constant 256 : i32
    %599 = arith.ori %578, %c256_i32 : i32
    %600 = arith.select %598, %578, %599 : i32
    %c205_i32_163 = arith.constant 205 : i32
    %601 = arith.cmpi sge, %597, %c205_i32_163 : i32
    %c256_i32_164 = arith.constant 256 : i32
    %602 = arith.ori %581, %c256_i32_164 : i32
    %603 = arith.select %601, %581, %602 : i32
    %c127_i32 = arith.constant 127 : i32
    %604 = arith.ori %600, %c127_i32 : i32
    %c127_i32_165 = arith.constant 127 : i32
    %605 = arith.ori %603, %c127_i32_165 : i32
    %606 = vector.broadcast %604 : i32 to vector<16x16xi32>
    %607 = arith.cmpi sle, %96, %606 : vector<16x16xi32>
    %608 = arith.extui %607 : vector<16x16xi1> to vector<16x16xi32>
    %609 = vector.shape_cast %608 : vector<16x16xi32> to vector<1x16x16xi32>
    %cst_166 = arith.constant dense<0> : vector<1xi32>
    %610 = vector.multi_reduction <add>, %609, %cst_166 [1, 2] : vector<1x16x16xi32> to vector<1xi32>
    %611 = vector.shape_cast %610 : vector<1xi32> to vector<1x1x1xi32>
    %612 = vector.extract %611[0, 0, 0] : i32 from vector<1x1x1xi32>
    %613 = vector.broadcast %605 : i32 to vector<16x16xi32>
    %614 = arith.cmpi sle, %97, %613 : vector<16x16xi32>
    %615 = arith.extui %614 : vector<16x16xi1> to vector<16x16xi32>
    %616 = vector.shape_cast %615 : vector<16x16xi32> to vector<1x16x16xi32>
    %cst_167 = arith.constant dense<0> : vector<1xi32>
    %617 = vector.multi_reduction <add>, %616, %cst_167 [1, 2] : vector<1x16x16xi32> to vector<1xi32>
    %618 = vector.shape_cast %617 : vector<1xi32> to vector<1x1x1xi32>
    %619 = vector.extract %618[0, 0, 0] : i32 from vector<1x1x1xi32>
    %c205_i32_168 = arith.constant 205 : i32
    %620 = arith.cmpi sge, %612, %c205_i32_168 : i32
    %c128_i32 = arith.constant 128 : i32
    %621 = arith.ori %600, %c128_i32 : i32
    %622 = arith.select %620, %600, %621 : i32
    %c205_i32_169 = arith.constant 205 : i32
    %623 = arith.cmpi sge, %619, %c205_i32_169 : i32
    %c128_i32_170 = arith.constant 128 : i32
    %624 = arith.ori %603, %c128_i32_170 : i32
    %625 = arith.select %623, %603, %624 : i32
    %c63_i32 = arith.constant 63 : i32
    %626 = arith.ori %622, %c63_i32 : i32
    %c63_i32_171 = arith.constant 63 : i32
    %627 = arith.ori %625, %c63_i32_171 : i32
    %628 = vector.broadcast %626 : i32 to vector<16x16xi32>
    %629 = arith.cmpi sle, %96, %628 : vector<16x16xi32>
    %630 = arith.extui %629 : vector<16x16xi1> to vector<16x16xi32>
    %631 = vector.shape_cast %630 : vector<16x16xi32> to vector<1x16x16xi32>
    %cst_172 = arith.constant dense<0> : vector<1xi32>
    %632 = vector.multi_reduction <add>, %631, %cst_172 [1, 2] : vector<1x16x16xi32> to vector<1xi32>
    %633 = vector.shape_cast %632 : vector<1xi32> to vector<1x1x1xi32>
    %634 = vector.extract %633[0, 0, 0] : i32 from vector<1x1x1xi32>
    %635 = vector.broadcast %627 : i32 to vector<16x16xi32>
    %636 = arith.cmpi sle, %97, %635 : vector<16x16xi32>
    %637 = arith.extui %636 : vector<16x16xi1> to vector<16x16xi32>
    %638 = vector.shape_cast %637 : vector<16x16xi32> to vector<1x16x16xi32>
    %cst_173 = arith.constant dense<0> : vector<1xi32>
    %639 = vector.multi_reduction <add>, %638, %cst_173 [1, 2] : vector<1x16x16xi32> to vector<1xi32>
    %640 = vector.shape_cast %639 : vector<1xi32> to vector<1x1x1xi32>
    %641 = vector.extract %640[0, 0, 0] : i32 from vector<1x1x1xi32>
    %c205_i32_174 = arith.constant 205 : i32
    %642 = arith.cmpi sge, %634, %c205_i32_174 : i32
    %c64_i32 = arith.constant 64 : i32
    %643 = arith.ori %622, %c64_i32 : i32
    %644 = arith.select %642, %622, %643 : i32
    %c205_i32_175 = arith.constant 205 : i32
    %645 = arith.cmpi sge, %641, %c205_i32_175 : i32
    %c64_i32_176 = arith.constant 64 : i32
    %646 = arith.ori %625, %c64_i32_176 : i32
    %647 = arith.select %645, %625, %646 : i32
    %c31_i32 = arith.constant 31 : i32
    %648 = arith.ori %644, %c31_i32 : i32
    %c31_i32_177 = arith.constant 31 : i32
    %649 = arith.ori %647, %c31_i32_177 : i32
    %650 = vector.broadcast %648 : i32 to vector<16x16xi32>
    %651 = arith.cmpi sle, %96, %650 : vector<16x16xi32>
    %652 = arith.extui %651 : vector<16x16xi1> to vector<16x16xi32>
    %653 = vector.shape_cast %652 : vector<16x16xi32> to vector<1x16x16xi32>
    %cst_178 = arith.constant dense<0> : vector<1xi32>
    %654 = vector.multi_reduction <add>, %653, %cst_178 [1, 2] : vector<1x16x16xi32> to vector<1xi32>
    %655 = vector.shape_cast %654 : vector<1xi32> to vector<1x1x1xi32>
    %656 = vector.extract %655[0, 0, 0] : i32 from vector<1x1x1xi32>
    %657 = vector.broadcast %649 : i32 to vector<16x16xi32>
    %658 = arith.cmpi sle, %97, %657 : vector<16x16xi32>
    %659 = arith.extui %658 : vector<16x16xi1> to vector<16x16xi32>
    %660 = vector.shape_cast %659 : vector<16x16xi32> to vector<1x16x16xi32>
    %cst_179 = arith.constant dense<0> : vector<1xi32>
    %661 = vector.multi_reduction <add>, %660, %cst_179 [1, 2] : vector<1x16x16xi32> to vector<1xi32>
    %662 = vector.shape_cast %661 : vector<1xi32> to vector<1x1x1xi32>
    %663 = vector.extract %662[0, 0, 0] : i32 from vector<1x1x1xi32>
    %c205_i32_180 = arith.constant 205 : i32
    %664 = arith.cmpi sge, %656, %c205_i32_180 : i32
    %c32_i32 = arith.constant 32 : i32
    %665 = arith.ori %644, %c32_i32 : i32
    %666 = arith.select %664, %644, %665 : i32
    %c205_i32_181 = arith.constant 205 : i32
    %667 = arith.cmpi sge, %663, %c205_i32_181 : i32
    %c32_i32_182 = arith.constant 32 : i32
    %668 = arith.ori %647, %c32_i32_182 : i32
    %669 = arith.select %667, %647, %668 : i32
    %c15_i32 = arith.constant 15 : i32
    %670 = arith.ori %666, %c15_i32 : i32
    %c15_i32_183 = arith.constant 15 : i32
    %671 = arith.ori %669, %c15_i32_183 : i32
    %672 = vector.broadcast %670 : i32 to vector<16x16xi32>
    %673 = arith.cmpi sle, %96, %672 : vector<16x16xi32>
    %674 = arith.extui %673 : vector<16x16xi1> to vector<16x16xi32>
    %675 = vector.shape_cast %674 : vector<16x16xi32> to vector<1x16x16xi32>
    %cst_184 = arith.constant dense<0> : vector<1xi32>
    %676 = vector.multi_reduction <add>, %675, %cst_184 [1, 2] : vector<1x16x16xi32> to vector<1xi32>
    %677 = vector.shape_cast %676 : vector<1xi32> to vector<1x1x1xi32>
    %678 = vector.extract %677[0, 0, 0] : i32 from vector<1x1x1xi32>
    %679 = vector.broadcast %671 : i32 to vector<16x16xi32>
    %680 = arith.cmpi sle, %97, %679 : vector<16x16xi32>
    %681 = arith.extui %680 : vector<16x16xi1> to vector<16x16xi32>
    %682 = vector.shape_cast %681 : vector<16x16xi32> to vector<1x16x16xi32>
    %cst_185 = arith.constant dense<0> : vector<1xi32>
    %683 = vector.multi_reduction <add>, %682, %cst_185 [1, 2] : vector<1x16x16xi32> to vector<1xi32>
    %684 = vector.shape_cast %683 : vector<1xi32> to vector<1x1x1xi32>
    %685 = vector.extract %684[0, 0, 0] : i32 from vector<1x1x1xi32>
    %c205_i32_186 = arith.constant 205 : i32
    %686 = arith.cmpi sge, %678, %c205_i32_186 : i32
    %c16_i32 = arith.constant 16 : i32
    %687 = arith.ori %666, %c16_i32 : i32
    %688 = arith.select %686, %666, %687 : i32
    %c205_i32_187 = arith.constant 205 : i32
    %689 = arith.cmpi sge, %685, %c205_i32_187 : i32
    %c16_i32_188 = arith.constant 16 : i32
    %690 = arith.ori %669, %c16_i32_188 : i32
    %691 = arith.select %689, %669, %690 : i32
    %c7_i32 = arith.constant 7 : i32
    %692 = arith.ori %688, %c7_i32 : i32
    %c7_i32_189 = arith.constant 7 : i32
    %693 = arith.ori %691, %c7_i32_189 : i32
    %694 = vector.broadcast %692 : i32 to vector<16x16xi32>
    %695 = arith.cmpi sle, %96, %694 : vector<16x16xi32>
    %696 = arith.extui %695 : vector<16x16xi1> to vector<16x16xi32>
    %697 = vector.shape_cast %696 : vector<16x16xi32> to vector<1x16x16xi32>
    %cst_190 = arith.constant dense<0> : vector<1xi32>
    %698 = vector.multi_reduction <add>, %697, %cst_190 [1, 2] : vector<1x16x16xi32> to vector<1xi32>
    %699 = vector.shape_cast %698 : vector<1xi32> to vector<1x1x1xi32>
    %700 = vector.extract %699[0, 0, 0] : i32 from vector<1x1x1xi32>
    %701 = vector.broadcast %693 : i32 to vector<16x16xi32>
    %702 = arith.cmpi sle, %97, %701 : vector<16x16xi32>
    %703 = arith.extui %702 : vector<16x16xi1> to vector<16x16xi32>
    %704 = vector.shape_cast %703 : vector<16x16xi32> to vector<1x16x16xi32>
    %cst_191 = arith.constant dense<0> : vector<1xi32>
    %705 = vector.multi_reduction <add>, %704, %cst_191 [1, 2] : vector<1x16x16xi32> to vector<1xi32>
    %706 = vector.shape_cast %705 : vector<1xi32> to vector<1x1x1xi32>
    %707 = vector.extract %706[0, 0, 0] : i32 from vector<1x1x1xi32>
    %c205_i32_192 = arith.constant 205 : i32
    %708 = arith.cmpi sge, %700, %c205_i32_192 : i32
    %c8_i32 = arith.constant 8 : i32
    %709 = arith.ori %688, %c8_i32 : i32
    %710 = arith.select %708, %688, %709 : i32
    %c205_i32_193 = arith.constant 205 : i32
    %711 = arith.cmpi sge, %707, %c205_i32_193 : i32
    %c8_i32_194 = arith.constant 8 : i32
    %712 = arith.ori %691, %c8_i32_194 : i32
    %713 = arith.select %711, %691, %712 : i32
    %c3_i32 = arith.constant 3 : i32
    %714 = arith.ori %710, %c3_i32 : i32
    %c3_i32_195 = arith.constant 3 : i32
    %715 = arith.ori %713, %c3_i32_195 : i32
    %716 = vector.broadcast %714 : i32 to vector<16x16xi32>
    %717 = arith.cmpi sle, %96, %716 : vector<16x16xi32>
    %718 = arith.extui %717 : vector<16x16xi1> to vector<16x16xi32>
    %719 = vector.shape_cast %718 : vector<16x16xi32> to vector<1x16x16xi32>
    %cst_196 = arith.constant dense<0> : vector<1xi32>
    %720 = vector.multi_reduction <add>, %719, %cst_196 [1, 2] : vector<1x16x16xi32> to vector<1xi32>
    %721 = vector.shape_cast %720 : vector<1xi32> to vector<1x1x1xi32>
    %722 = vector.extract %721[0, 0, 0] : i32 from vector<1x1x1xi32>
    %723 = vector.broadcast %715 : i32 to vector<16x16xi32>
    %724 = arith.cmpi sle, %97, %723 : vector<16x16xi32>
    %725 = arith.extui %724 : vector<16x16xi1> to vector<16x16xi32>
    %726 = vector.shape_cast %725 : vector<16x16xi32> to vector<1x16x16xi32>
    %cst_197 = arith.constant dense<0> : vector<1xi32>
    %727 = vector.multi_reduction <add>, %726, %cst_197 [1, 2] : vector<1x16x16xi32> to vector<1xi32>
    %728 = vector.shape_cast %727 : vector<1xi32> to vector<1x1x1xi32>
    %729 = vector.extract %728[0, 0, 0] : i32 from vector<1x1x1xi32>
    %c205_i32_198 = arith.constant 205 : i32
    %730 = arith.cmpi sge, %722, %c205_i32_198 : i32
    %c4_i32 = arith.constant 4 : i32
    %731 = arith.ori %710, %c4_i32 : i32
    %732 = arith.select %730, %710, %731 : i32
    %c205_i32_199 = arith.constant 205 : i32
    %733 = arith.cmpi sge, %729, %c205_i32_199 : i32
    %c4_i32_200 = arith.constant 4 : i32
    %734 = arith.ori %713, %c4_i32_200 : i32
    %735 = arith.select %733, %713, %734 : i32
    %c1_i32 = arith.constant 1 : i32
    %736 = arith.ori %732, %c1_i32 : i32
    %c1_i32_201 = arith.constant 1 : i32
    %737 = arith.ori %735, %c1_i32_201 : i32
    %738 = vector.broadcast %736 : i32 to vector<16x16xi32>
    %739 = arith.cmpi sle, %96, %738 : vector<16x16xi32>
    %740 = arith.extui %739 : vector<16x16xi1> to vector<16x16xi32>
    %741 = vector.shape_cast %740 : vector<16x16xi32> to vector<1x16x16xi32>
    %cst_202 = arith.constant dense<0> : vector<1xi32>
    %742 = vector.multi_reduction <add>, %741, %cst_202 [1, 2] : vector<1x16x16xi32> to vector<1xi32>
    %743 = vector.shape_cast %742 : vector<1xi32> to vector<1x1x1xi32>
    %744 = vector.extract %743[0, 0, 0] : i32 from vector<1x1x1xi32>
    %745 = vector.broadcast %737 : i32 to vector<16x16xi32>
    %746 = arith.cmpi sle, %97, %745 : vector<16x16xi32>
    %747 = arith.extui %746 : vector<16x16xi1> to vector<16x16xi32>
    %748 = vector.shape_cast %747 : vector<16x16xi32> to vector<1x16x16xi32>
    %cst_203 = arith.constant dense<0> : vector<1xi32>
    %749 = vector.multi_reduction <add>, %748, %cst_203 [1, 2] : vector<1x16x16xi32> to vector<1xi32>
    %750 = vector.shape_cast %749 : vector<1xi32> to vector<1x1x1xi32>
    %751 = vector.extract %750[0, 0, 0] : i32 from vector<1x1x1xi32>
    %c205_i32_204 = arith.constant 205 : i32
    %752 = arith.cmpi sge, %744, %c205_i32_204 : i32
    %c2_i32 = arith.constant 2 : i32
    %753 = arith.ori %732, %c2_i32 : i32
    %754 = arith.select %752, %732, %753 : i32
    %c205_i32_205 = arith.constant 205 : i32
    %755 = arith.cmpi sge, %751, %c205_i32_205 : i32
    %c2_i32_206 = arith.constant 2 : i32
    %756 = arith.ori %735, %c2_i32_206 : i32
    %757 = arith.select %755, %735, %756 : i32
    %c0_i32_207 = arith.constant 0 : i32
    %758 = arith.ori %754, %c0_i32_207 : i32
    %c0_i32_208 = arith.constant 0 : i32
    %759 = arith.ori %757, %c0_i32_208 : i32
    %760 = vector.broadcast %758 : i32 to vector<16x16xi32>
    %761 = arith.cmpi sle, %96, %760 : vector<16x16xi32>
    %762 = arith.extui %761 : vector<16x16xi1> to vector<16x16xi32>
    %763 = vector.shape_cast %762 : vector<16x16xi32> to vector<1x16x16xi32>
    %cst_209 = arith.constant dense<0> : vector<1xi32>
    %764 = vector.multi_reduction <add>, %763, %cst_209 [1, 2] : vector<1x16x16xi32> to vector<1xi32>
    %765 = vector.shape_cast %764 : vector<1xi32> to vector<1x1x1xi32>
    %766 = vector.extract %765[0, 0, 0] : i32 from vector<1x1x1xi32>
    %767 = vector.broadcast %759 : i32 to vector<16x16xi32>
    %768 = arith.cmpi sle, %97, %767 : vector<16x16xi32>
    %769 = arith.extui %768 : vector<16x16xi1> to vector<16x16xi32>
    %770 = vector.shape_cast %769 : vector<16x16xi32> to vector<1x16x16xi32>
    %cst_210 = arith.constant dense<0> : vector<1xi32>
    %771 = vector.multi_reduction <add>, %770, %cst_210 [1, 2] : vector<1x16x16xi32> to vector<1xi32>
    %772 = vector.shape_cast %771 : vector<1xi32> to vector<1x1x1xi32>
    %773 = vector.extract %772[0, 0, 0] : i32 from vector<1x1x1xi32>
    %c205_i32_211 = arith.constant 205 : i32
    %774 = arith.cmpi sge, %766, %c205_i32_211 : i32
    %c1_i32_212 = arith.constant 1 : i32
    %775 = arith.ori %754, %c1_i32_212 : i32
    %776 = arith.select %774, %754, %775 : i32
    %c205_i32_213 = arith.constant 205 : i32
    %777 = arith.cmpi sge, %773, %c205_i32_213 : i32
    %c1_i32_214 = arith.constant 1 : i32
    %778 = arith.ori %757, %c1_i32_214 : i32
    %779 = arith.select %777, %757, %778 : i32
    %780 = vector.broadcast %776 : i32 to vector<16x16xi32>
    %781 = arith.cmpi sge, %96, %780 : vector<16x16xi32>
    %782 = arith.extui %781 : vector<16x16xi1> to vector<16x16xi32>
    %783 = arith.sitofp %782 : vector<16x16xi32> to vector<16x16xf32>
    %784 = vector.broadcast %779 : i32 to vector<16x16xi32>
    %785 = arith.cmpi sge, %97, %784 : vector<16x16xi32>
    %786 = arith.extui %785 : vector<16x16xi1> to vector<16x16xi32>
    %787 = arith.sitofp %786 : vector<16x16xi32> to vector<16x16xf32>
    %788 = arith.addf %783, %787 : vector<16x16xf32>
    %cst_215 = arith.constant 1.000000e+00 : f32
    %789 = vector.broadcast %cst_215 : f32 to vector<16x16xf32>
    %790 = arith.minimumf %788, %789 : vector<16x16xf32>
    %cst_216 = arith.constant 1.000000e+00 : f32
    %791 = vector.broadcast %cst_216 : f32 to vector<16x16xf32>
    %792 = arith.subf %791, %790 : vector<16x16xf32>
    %793 = arith.maximumf %1, %3 : vector<16x16xf32>
    %794 = arith.subf %793, %5 : vector<16x16xf32>
    %795 = math.absf %794 : vector<16x16xf32>
    %796 = arith.mulf %790, %795 : vector<16x16xf32>
    %797 = vector.shape_cast %796 : vector<16x16xf32> to vector<1x16x16xf32>
    %cst_217 = arith.constant dense<0.000000e+00> : vector<1xf32>
    %798 = vector.multi_reduction <add>, %797, %cst_217 [1, 2] : vector<1x16x16xf32> to vector<1xf32>
    %799 = vector.shape_cast %798 : vector<1xf32> to vector<1x1x1xf32>
    %800 = vector.extract %799[0, 0, 0] : f32 from vector<1x1x1xf32>
    %801 = arith.subf %1, %5 : vector<16x16xf32>
    %802 = math.absf %801 : vector<16x16xf32>
    %803 = arith.mulf %792, %802 : vector<16x16xf32>
    %804 = vector.shape_cast %803 : vector<16x16xf32> to vector<1x16x16xf32>
    %cst_218 = arith.constant dense<0.000000e+00> : vector<1xf32>
    %805 = vector.multi_reduction <add>, %804, %cst_218 [1, 2] : vector<1x16x16xf32> to vector<1xf32>
    %806 = vector.shape_cast %805 : vector<1xf32> to vector<1x1x1xf32>
    %807 = vector.extract %806[0, 0, 0] : f32 from vector<1x1x1xf32>
    %808 = arith.subf %3, %5 : vector<16x16xf32>
    %809 = math.absf %808 : vector<16x16xf32>
    %810 = arith.mulf %792, %809 : vector<16x16xf32>
    %811 = vector.shape_cast %810 : vector<16x16xf32> to vector<1x16x16xf32>
    %cst_219 = arith.constant dense<0.000000e+00> : vector<1xf32>
    %812 = vector.multi_reduction <add>, %811, %cst_219 [1, 2] : vector<1x16x16xf32> to vector<1xf32>
    %813 = vector.shape_cast %812 : vector<1xf32> to vector<1x1x1xf32>
    %814 = vector.extract %813[0, 0, 0] : f32 from vector<1x1x1xf32>
    %815 = tpu.iota {dimensions = array<i32: 0>} : vector<8x128xi32>
    %c0_i32_220 = arith.constant 0 : i32
    %816 = vector.broadcast %c0_i32_220 : i32 to vector<8x128xi32>
    %817 = arith.cmpi eq, %815, %816 : vector<8x128xi32>
    %c1_i32_221 = arith.constant 1 : i32
    %818 = vector.broadcast %c1_i32_221 : i32 to vector<8x128xi32>
    %819 = arith.cmpi eq, %815, %818 : vector<8x128xi32>
    %c2_i32_222 = arith.constant 2 : i32
    %820 = vector.broadcast %c2_i32_222 : i32 to vector<8x128xi32>
    %821 = arith.cmpi eq, %815, %820 : vector<8x128xi32>
    %c3_i32_223 = arith.constant 3 : i32
    %822 = vector.broadcast %c3_i32_223 : i32 to vector<8x128xi32>
    %823 = arith.cmpi eq, %815, %822 : vector<8x128xi32>
    %cst_224 = arith.constant 0.000000e+00 : f32
    %824 = vector.broadcast %814 : f32 to vector<8x128xf32>
    %825 = vector.broadcast %cst_224 : f32 to vector<8x128xf32>
    %826 = arith.select %823, %824, %825 : vector<8x128xi1>, vector<8x128xf32>
    %827 = vector.broadcast %807 : f32 to vector<8x128xf32>
    %828 = arith.select %821, %827, %826 : vector<8x128xi1>, vector<8x128xf32>
    %829 = vector.broadcast %800 : f32 to vector<8x128xf32>
    %830 = arith.select %819, %829, %828 : vector<8x128xi1>, vector<8x128xf32>
    %831 = vector.broadcast %93 : f32 to vector<8x128xf32>
    %832 = arith.select %817, %831, %830 : vector<8x128xi1>, vector<8x128xf32>
    %c0_225 = arith.constant 0 : index
    %c0_226 = arith.constant 0 : index
    %c0_227 = arith.constant 0 : index
    %833 = vector.load %arg4[%c0_225, %c0_226, %c0_227] : memref<1x8x128xf32, #tpu.memory_space<vmem>>, vector<1x8x128xf32>
    %834 = vector.shape_cast %833 : vector<1x8x128xf32> to vector<8x128xf32>
    %835 = vector.shape_cast %832 : vector<8x128xf32> to vector<1x8x128xf32>
    tpu.vector_store %arg4[%c0_225, %c0_226, %c0_227], %835 {strides = array<i32>} : memref<1x8x128xf32, #tpu.memory_space<vmem>>, vector<1x8x128xf32>,
    return
  }
  func.func @transform_0(%arg0: i32) -> (i32, i32, i32, i32) {
    %c0_i32 = arith.constant 0 : i32
    %c0_i32_0 = arith.constant 0 : i32
    %c0_i32_1 = arith.constant 0 : i32
    %c0_i32_2 = arith.constant 0 : i32
    return %arg0, %c0_i32, %c0_i32_0, %c0_i32_1 : i32, i32, i32, i32
  }
  func.func @transform_1(%arg0: i32) -> (i32, i32, i32, i32) {
    %c0_i32 = arith.constant 0 : i32
    %c0_i32_0 = arith.constant 0 : i32
    %c0_i32_1 = arith.constant 0 : i32
    %c0_i32_2 = arith.constant 0 : i32
    return %arg0, %c0_i32, %c0_i32_0, %c0_i32_1 : i32, i32, i32, i32
  }
  func.func @transform_2(%arg0: i32) -> (i32, i32, i32, i32) {
    %c0_i32 = arith.constant 0 : i32
    %c0_i32_0 = arith.constant 0 : i32
    %c0_i32_1 = arith.constant 0 : i32
    %c0_i32_2 = arith.constant 0 : i32
    return %arg0, %c0_i32, %c0_i32_0, %c0_i32_1 : i32, i32, i32, i32
  }
  func.func @transform_3(%arg0: i32) -> (i32, i32, i32) {
    %c0_i32 = arith.constant 0 : i32
    %c0_i32_0 = arith.constant 0 : i32
    %c0_i32_1 = arith.constant 0 : i32
    return %arg0, %c0_i32, %c0_i32_0 : i32, i32, i32
  }
}

</mosaic_0001>

<llo_original>
// kernel: l_grad_inte.1
$region0: #{l_grad_inte.1}
  #allocation0 [shape = 'u32[]', space=smem, size = 0x4, offset = 0x4, fixed_abs, tag = 'smem constant byte address 0x4 - core index']
  #allocation1 [shape = 'u32[72,128]{1,0:T(1,128)}', space=vmem, size = 0x9000, scoped, tag = 'internal scratch']
  %s0 = inlined_call_operand.hbm [shape: f32[2,4,16,16], index: 0, kind: input, shape index: {}]
  %s1 = inlined_call_operand.hbm [shape: f32[2,4,16,16], index: 1, kind: input, shape index: {}]
  %s2 = inlined_call_operand.hbm [shape: f32[2,4,16,16], index: 2, kind: input, shape index: {}]
  %s3 = inlined_call_operand.vmem [shape: f32[2,8,128], index: 3, kind: output, shape index: {}]
  %s4 = sld [smem:[#allocation0]]
  $region57: #{l_grad_inte.1} parent=0
    _
  %s6 = ssub.s32 1, %s4
  %s7 = scalar_select 0, %s6, %s4
  $region1: #{l_grad_inte.1} parent=0
    #allocation2 [shape = 'u8[16384]{0}', space=vmem, size = 0x4000, scoped, tag = 'input window, operand 0']
    #allocation3 [shape = 's32[2]{0}', space=sflag, size = 0x8, scoped, tag = 'scoped memory for l_grad_inte.1']
    #allocation4 [shape = 'u8[16384]{0}', space=vmem, size = 0x4000, scoped, tag = 'input window, operand 1']
    #allocation5 [shape = 's32[2]{0}', space=sflag, size = 0x8, scoped, tag = 'scoped memory for l_grad_inte.1']
    #allocation6 [shape = 'u8[16384]{0}', space=vmem, size = 0x4000, scoped, tag = 'input window, operand 2']
    %8 = vsyncpa [#allocation3], 0
    %s9 = scalar_lea.sflag [#allocation3], 1
    %10 = vsyncpa %s9, 0
    %11 = vsyncpa [#allocation5], 0
    %s12 = scalar_lea.sflag [#allocation5], 1
    %13 = vsyncpa %s12, 0
    loop: start=0, step=1, limit=4
    $region2: #{l_grad_inte.1} parent=1 // loop_pre_header
      _
    $region3: #{l_grad_inte.1} parent=1 // loop_header
      %s15 = sphi 0, %s19
      %p16 = scmp.ge.s32.totalorder %s15, 4
      %s25 = sphi 0, %s27
      %s28 = sphi 0, %s25
      %s29 = sphi 0, %s28
      %s45 = sphi 0, %s29
      %s51 = sphi 0, %s53
      %s54 = sphi 0, %s51
      %s55 = sphi 0, %s54
      %s71 = sphi 0, %s55
      %s77 = sphi 0, %s79
      %s80 = sphi 0, %s77
      %s81 = sphi 0, %s80
      %s97 = sphi 0, %s81
      %s103 = sphi 0, %s105
      %s106 = sphi 0, %s103
      %s107 = sphi 0, %s106
      %s123 = sphi 0, %s107
    $region4: #{l_grad_inte.1} parent=1 // loop_header_branch
      %18 = sbr.rel (%p16) target = $region8
    $region5: #{l_grad_inte.1} parent=1 // loop_body
      %s20 = ssub.s32 %s15, 1
      %s21 = ssub.s32 %s15, 2
      %s22 = sadd.s32 %s15, 1
      %s23 = ssub.s32 %s15, %s22
      %p24 = scmp.eq.s32.totalorder %s23, 0
      %s26 = sadd.s32 %s25, 1
      %s27 = scalar_select %p24, %s25, %s26
      %p30 = pneg %p24
      %p31 = scmp.eq.s32.totalorder %s15, 1
      %p32 = por %p30, %p31
      %p33 = scmp.ne.s32.totalorder %s25, %s28
      %p34 = scmp.eq.s32.totalorder %s15, 0
      %p35 = por %p33, %p34
      %p36 = scmp.ne.s32.totalorder %s25, %s28
      %p37 = scmp.eq.s32.totalorder %s20, 1
      %p38 = por %p36, %p37
      %p39 = scmp.ne.s32.totalorder %s28, %s29
      %p40 = scmp.eq.s32.totalorder %s20, 0
      %p41 = por %p39, %p40
      %p42 = scmp.ne.s32.totalorder %s28, %s29
      %p43 = scmp.eq.s32.totalorder %s21, 1
      %p44 = por %p42, %p43
      %p46 = scmp.ne.s32.totalorder %s29, %s45
      %p47 = scmp.eq.s32.totalorder %s21, 0
      %p48 = por %p46, %p47
      %s49 = ssub.s32 %s15, %s22
      %p50 = scmp.eq.s32.totalorder %s49, 0
      %s52 = sadd.s32 %s51, 1
      %s53 = scalar_select %p50, %s51, %s52
      %p56 = pneg %p50
      %p57 = scmp.eq.s32.totalorder %s15, 1
      %p58 = por %p56, %p57
      %p59 = scmp.ne.s32.totalorder %s51, %s54
      %p60 = scmp.eq.s32.totalorder %s15, 0
      %p61 = por %p59, %p60
      %p62 = scmp.ne.s32.totalorder %s51, %s54
      %p63 = scmp.eq.s32.totalorder %s20, 1
      %p64 = por %p62, %p63
      %p65 = scmp.ne.s32.totalorder %s54, %s55
      %p66 = scmp.eq.s32.totalorder %s20, 0
      %p67 = por %p65, %p66
      %p68 = scmp.ne.s32.totalorder %s54, %s55
      %p69 = scmp.eq.s32.totalorder %s21, 1
      %p70 = por %p68, %p69
      %p72 = scmp.ne.s32.totalorder %s55, %s71
      %p73 = scmp.eq.s32.totalorder %s21, 0
      %p74 = por %p72, %p73
      %s75 = ssub.s32 %s15, %s22
      %p76 = scmp.eq.s32.totalorder %s75, 0
      %s78 = sadd.s32 %s77, 1
      %s79 = scalar_select %p76, %s77, %s78
      %p82 = pneg %p76
      %p83 = scmp.eq.s32.totalorder %s15, 1
      %p84 = por %p82, %p83
      %p85 = scmp.ne.s32.totalorder %s77, %s80
      %p86 = scmp.eq.s32.totalorder %s15, 0
      %p87 = por %p85, %p86
      %p88 = scmp.ne.s32.totalorder %s77, %s80
      %p89 = scmp.eq.s32.totalorder %s20, 1
      %p90 = por %p88, %p89
      %p91 = scmp.ne.s32.totalorder %s80, %s81
      %p92 = scmp.eq.s32.totalorder %s20, 0
      %p93 = por %p91, %p92
      %p94 = scmp.ne.s32.totalorder %s80, %s81
      %p95 = scmp.eq.s32.totalorder %s21, 1
      %p96 = por %p94, %p95
      %p98 = scmp.ne.s32.totalorder %s81, %s97
      %p99 = scmp.eq.s32.totalorder %s21, 0
      %p100 = por %p98, %p99
      %s101 = ssub.s32 %s15, %s22
      %p102 = scmp.eq.s32.totalorder %s101, 0
      %s104 = sadd.s32 %s103, 1
      %s105 = scalar_select %p102, %s103, %s104
      %p108 = pneg %p102
      %p109 = scmp.eq.s32.totalorder %s15, 1
      %p110 = por %p108, %p109
      %p111 = scmp.ne.s32.totalorder %s103, %s106
      %p112 = scmp.eq.s32.totalorder %s15, 0
      %p113 = por %p111, %p112
      %p114 = scmp.ne.s32.totalorder %s103, %s106
      %p115 = scmp.eq.s32.totalorder %s20, 1
      %p116 = por %p114, %p115
      %p117 = scmp.ne.s32.totalorder %s106, %s107
      %p118 = scmp.eq.s32.totalorder %s20, 0
      %p119 = por %p117, %p118
      %p120 = scmp.ne.s32.totalorder %s106, %s107
      %p121 = scmp.eq.s32.totalorder %s21, 1
      %p122 = por %p120, %p121
      %p124 = scmp.ne.s32.totalorder %s107, %s123
      %p125 = scmp.eq.s32.totalorder %s21, 0
      %p126 = por %p124, %p125
      %p127 = scmp.le.s32.totalorder 1, %s15
      %p128 = scmp.lt.s32.totalorder %s15, 3
      %p129 = pnand %p127, %p128
      %p130 = pneg %p129
      // Predicated region
      $region9: #{l_grad_inte.1} parent=5 // pred_check
        _
      $region10: #{l_grad_inte.1} parent=5 // pred_check_branch
        %132 = sbr.rel (%p129) target = $region12
      $region11: #{l_grad_inte.1} parent=5 // pred_region
        %s133 = ssub.s32 %s15, 1
      $region12: #{l_grad_inte.1} parent=5 // pred_fallthru
        _
      %p134 = scmp.lt.s32.totalorder %s15, 2
      // Predicated region
      $region13: #{l_grad_inte.1} parent=5 // pred_check
        %p135 = pneg %p134
      $region14: #{l_grad_inte.1} parent=5 // pred_check_branch
        %137 = sbr.rel (%p135) target = $region16
      $region15: #{l_grad_inte.1} parent=5 // pred_region
        // Predicated region
        $region17: #{l_grad_inte.1} parent=15 // pred_check
          %p138 = pneg %p35
        $region18: #{l_grad_inte.1} parent=15 // pred_check_branch
          %140 = sbr.rel (%p138) target = $region20
        $region19: #{l_grad_inte.1} parent=15 // pred_region
          %s141 = sand.u32 %s25, 1
          %s142 = scalar_lea.sflag [#allocation3], %s141
          %s143 = sand.u32 %s25, 1
          %s144 = smul.addr %s143, 16
          %s145 = scalar_lea.vmem [#allocation2], %s144
          %147 = vsyncadd %s142, 0
          %s148 = smul.addr %s15, 8
          %s149 = smul.addr %s148, 8
          %s150 = scalar_lea.hbm %s0, %s149
          %s151 = sshll.u32 %s150, 4
          %s152 = int_to_ptr.hbm [resolvable:$true] %s151
          %s153 = sshll.u32 %s145, 4
          %s154 = int_to_ptr.vmem [resolvable:$true] %s153
          %159 = dma.hbm_to_vmem [thread:$0]  %s152, 256, %s154, %s142, 128, 128, 8
        $region20: #{l_grad_inte.1} parent=15 // pred_fallthru
          _
        // Predicated region
        $region21: #{l_grad_inte.1} parent=15 // pred_check
          %p160 = pneg %p61
        $region22: #{l_grad_inte.1} parent=15 // pred_check_branch
          %162 = sbr.rel (%p160) target = $region24
        $region23: #{l_grad_inte.1} parent=15 // pred_region
          %s163 = sand.u32 %s15, 1
          %s164 = scalar_lea.sflag [#allocation5], %s163
          %s165 = sand.u32 %s51, 1
          %s166 = smul.addr %s165, 16
          %s167 = scalar_lea.vmem [#allocation4], %s166
          %169 = vsyncadd %s164, 0
          %s170 = smul.addr %s15, 8
          %s171 = smul.addr %s170, 8
          %s172 = scalar_lea.hbm %s1, %s171
          %s173 = sshll.u32 %s172, 4
          %s174 = int_to_ptr.hbm [resolvable:$true] %s173
          %s175 = sshll.u32 %s167, 4
          %s176 = int_to_ptr.vmem [resolvable:$true] %s175
          %181 = dma.hbm_to_vmem [thread:$0]  %s174, 256, %s176, %s164, 128, 128, 8
        $region24: #{l_grad_inte.1} parent=15 // pred_fallthru
          _
        // Predicated region
        $region25: #{l_grad_inte.1} parent=15 // pred_check
          %p182 = pneg %p87
        $region26: #{l_grad_inte.1} parent=15 // pred_check_branch
          %184 = sbr.rel (%p182) target = $region28
        $region27: #{l_grad_inte.1} parent=15 // pred_region
          %s185 = sand.u32 %s15, 1
          %s186 = scalar_lea.sflag [#allocation5], %s185
          %s187 = sand.u32 %s77, 1
          %s188 = smul.addr %s187, 16
          %s189 = scalar_lea.vmem [#allocation6], %s188
          %191 = vsyncadd %s186, 0
          %s192 = smul.addr %s15, 8
          %s193 = smul.addr %s192, 8
          %s194 = scalar_lea.hbm %s2, %s193
          %s195 = sshll.u32 %s194, 4
          %s196 = int_to_ptr.hbm [resolvable:$true] %s195
          %s197 = sshll.u32 %s189, 4
          %s198 = int_to_ptr.vmem [resolvable:$true] %s197
          %203 = dma.hbm_to_vmem [thread:$0]  %s196, 256, %s198, %s186, 128, 128, 8
        $region28: #{l_grad_inte.1} parent=15 // pred_fallthru
          _
      $region16: #{l_grad_inte.1} parent=5 // pred_fallthru
        _
      %p204 = scmp.le.s32.totalorder 1, %s15
      %p205 = scmp.lt.s32.totalorder %s15, 3
      %p206 = pnand %p204, %p205
      %p207 = pneg %p206
      // Predicated region
      $region29: #{l_grad_inte.1} parent=5 // pred_check
        _
      $region30: #{l_grad_inte.1} parent=5 // pred_check_branch
        %209 = sbr.rel (%p206) target = $region32
      $region31: #{l_grad_inte.1} parent=5 // pred_region
        %s210 = ssub.s32 %s15, 1
        %s211 = sand.u32 %s28, 1
        %s212 = scalar_lea.sflag [#allocation3], %s211
        %s213 = sand.u32 %s28, 1
        %s214 = smul.addr %s213, 16
        %s215 = scalar_lea.vmem [#allocation2], %s214
        // Predicated region
        $region33: #{l_grad_inte.1} parent=31 // pred_check
          %p216 = pneg %p41
        $region34: #{l_grad_inte.1} parent=31 // pred_check_branch
          %218 = sbr.rel (%p216) target = $region36
        $region35: #{l_grad_inte.1} parent=31 // pred_region
          %220 = dma.done %s212, 256
        $region36: #{l_grad_inte.1} parent=31 // pred_fallthru
          _
        %s221 = sand.u32 %s20, 1
        %s222 = scalar_lea.sflag [#allocation5], %s221
        %s223 = sand.u32 %s54, 1
        %s224 = smul.addr %s223, 16
        %s225 = scalar_lea.vmem [#allocation4], %s224
        // Predicated region
        $region37: #{l_grad_inte.1} parent=31 // pred_check
          %p226 = pneg %p67
        $region38: #{l_grad_inte.1} parent=31 // pred_check_branch
          %228 = sbr.rel (%p226) target = $region40
        $region39: #{l_grad_inte.1} parent=31 // pred_region
          %230 = dma.done %s222, 256
        $region40: #{l_grad_inte.1} parent=31 // pred_fallthru
          _
        %s231 = sand.u32 %s20, 1
        %s232 = scalar_lea.sflag [#allocation5], %s231
        %s233 = sand.u32 %s80, 1
        %s234 = smul.addr %s233, 16
        %s235 = scalar_lea.vmem [#allocation6], %s234
        // Predicated region
        $region41: #{l_grad_inte.1} parent=31 // pred_check
          %p236 = pneg %p93
        $region42: #{l_grad_inte.1} parent=31 // pred_check_branch
          %238 = sbr.rel (%p236) target = $region44
        $region43: #{l_grad_inte.1} parent=31 // pred_region
          %240 = dma.done %s232, 256
        $region44: #{l_grad_inte.1} parent=31 // pred_fallthru
          _
        %s241 = sand.u32 %s28, 1
        %s242 = scalar_lea.sflag [#allocation3], %s241
        %s243 = sand.u32 %s28, 1
        %s244 = smul.addr %s243, 16
        %s245 = scalar_lea.vmem [#allocation2], %s244
        %p246 = pneg %p41
        %p247 = pneg %p38
        %s248 = sand.u32 %s20, 1
        %s249 = scalar_lea.sflag [#allocation5], %s248
        %s250 = sand.u32 %s54, 1
        %s251 = smul.addr %s250, 16
        %s252 = scalar_lea.vmem [#allocation4], %s251
        %p253 = pneg %p67
        %p254 = pneg %p64
        %s255 = sand.u32 %s20, 1
        %s256 = scalar_lea.sflag [#allocation5], %s255
        %s257 = sand.u32 %s80, 1
        %s258 = smul.addr %s257, 16
        %s259 = scalar_lea.vmem [#allocation6], %s258
        %p260 = pneg %p93
        %p261 = pneg %p90
        %p262 = pneg %p119
        %p263 = pneg %p116
        %p264 = scmp.lt.s32.totalorder %s20, 1
        %s265 = scalar_select %p264, %s20, 1
        %s266 = smul.addr %s265, 8
        %s267 = scalar_lea.vmem %s3, %s266
        %p268 = scmp.lt.s32.totalorder %s20, 1
        %s269 = scalar_select %p268, %s20, 1
        %s270 = smul.addr %s269, 8
        %s271 = scalar_lea.vmem %s3, %s270
        %v272 = vld [vmem:[%s215] sm:$0xff]
        %v273 = vld [vmem:[%s215 + $0x8] sm:$0xff]
        %v274 = vld [vmem:[%s225] sm:$0xff]
        %v275 = vld [vmem:[%s225 + $0x8] sm:$0xff]
        %v276 = vld [vmem:[%s235] sm:$0xff]
        %v277 = vld [vmem:[%s235 + $0x8] sm:$0xff]
        %280 = vrot.lane.b32.xlu0 %v272, 1
        %v281 = vpop.permute.xlu0 %280
        %282 = vrot.lane.b32.xlu0 %v273, 1
        %v283 = vpop.permute.xlu0 %282
        %vm286 = vcmask 7168
        %v287 = vsel %vm286, 0.0, %v281
        %v288 = vsel %vm286, 0.0, %v283
        %289 = vrot.lane.b32.xlu0 %v272, 127
        %v290 = vpop.permute.xlu0 %289
        %291 = vrot.lane.b32.xlu0 %v273, 127
        %v292 = vpop.permute.xlu0 %291
        %vm295 = vcmask 121856
        %v296 = vsel %vm295, %v290, 0.0
        %v297 = vsel %vm295, %v292, 0.0
        %v298 = vmul.f32 %v272, 2.0
        %v299 = vmul.f32 %v273, 2.0
        %v300 = vadd.f32 %v287, %v298
        %v301 = vadd.f32 %v288, %v299
        %v302 = vadd.f32 %v300, %v296
        %v303 = vadd.f32 %v301, %v297
        %v304 = vsub.f32 %v296, %v287
        %v305 = vsub.f32 %v297, %v288
        %vm308 = vcmask 1040384
        %v309 = vrot.slane %v304, 7
        %v310 = vrot.slane %v305, 7
        %v311 = vsel %vm308, %v309, %v310
        %v314 = vsel %vm308, 0.0, %v309
        %vm315 = vcmask 1046528
        %v316 = vrot.slane %v304, 1
        %v317 = vrot.slane %v305, 1
        %v318 = vsel %vm315, %v316, %v317
        %v321 = vsel %vm315, %v317, 0.0
        %v324 = vrot.slane %v302, 7
        %v325 = vrot.slane %v303, 7
        %v326 = vsel %vm308, %v324, %v325
        %v329 = vsel %vm308, 0.0, %v324
        %v330 = vrot.slane %v302, 1
        %v331 = vrot.slane %v303, 1
        %v332 = vsel %vm315, %v330, %v331
        %v335 = vsel %vm315, %v331, 0.0
        %v336 = vmul.f32 %v304, 2.0
        %v337 = vmul.f32 %v305, 2.0
        %v338 = vadd.f32 %v314, %v336
        %v339 = vadd.f32 %v311, %v337
        %v340 = vadd.f32 %v338, %v318
        %v341 = vadd.f32 %v339, %v321
        %v342 = vsub.f32 %v329, %v332
        %v343 = vsub.f32 %v326, %v335
        %v344 = vand.u32 2147483647, %v340
        %v345 = vand.u32 2147483647, %v341
        %v346 = vand.u32 2147483647, %v342
        %v347 = vand.u32 2147483647, %v343
        %v348 = vadd.f32 %v344, %v346
        %v349 = vadd.f32 %v345, %v347
        %352 = vrot.lane.b32.xlu0 %v274, 1
        %v353 = vpop.permute.xlu0 %352
        %354 = vrot.lane.b32.xlu0 %v275, 1
        %v355 = vpop.permute.xlu0 %354
        %v358 = vsel %vm286, 0.0, %v353
        %v359 = vsel %vm286, 0.0, %v355
        %360 = vrot.lane.b32.xlu0 %v274, 127
        %v361 = vpop.permute.xlu0 %360
        %362 = vrot.lane.b32.xlu0 %v275, 127
        %v363 = vpop.permute.xlu0 %362
        %v366 = vsel %vm295, %v361, 0.0
        %v367 = vsel %vm295, %v363, 0.0
        %v368 = vmul.f32 %v274, 2.0
        %v369 = vmul.f32 %v275, 2.0
        %v370 = vadd.f32 %v358, %v368
        %v371 = vadd.f32 %v359, %v369
        %v372 = vadd.f32 %v370, %v366
        %v373 = vadd.f32 %v371, %v367
        %v374 = vsub.f32 %v366, %v358
        %v375 = vsub.f32 %v367, %v359
        %v378 = vrot.slane %v374, 7
        %v379 = vrot.slane %v375, 7
        %v380 = vsel %vm308, %v378, %v379
        %v383 = vsel %vm308, 0.0, %v378
        %v384 = vrot.slane %v374, 1
        %v385 = vrot.slane %v375, 1
        %v386 = vsel %vm315, %v384, %v385
        %v389 = vsel %vm315, %v385, 0.0
        %v392 = vrot.slane %v372, 7
        %v393 = vrot.slane %v373, 7
        %v394 = vsel %vm308, %v392, %v393
        %v397 = vsel %vm308, 0.0, %v392
        %v398 = vrot.slane %v372, 1
        %v399 = vrot.slane %v373, 1
        %v400 = vsel %vm315, %v398, %v399
        %v403 = vsel %vm315, %v399, 0.0
        %v404 = vmul.f32 %v374, 2.0
        %v405 = vmul.f32 %v375, 2.0
        %v406 = vadd.f32 %v383, %v404
        %v407 = vadd.f32 %v380, %v405
        %v408 = vadd.f32 %v406, %v386
        %v409 = vadd.f32 %v407, %v389
        %v410 = vsub.f32 %v397, %v400
        %v411 = vsub.f32 %v394, %v403
        %v412 = vand.u32 2147483647, %v408
        %v413 = vand.u32 2147483647, %v409
        %v414 = vand.u32 2147483647, %v410
        %v415 = vand.u32 2147483647, %v411
        %v416 = vadd.f32 %v412, %v414
        %v417 = vadd.f32 %v413, %v415
        %420 = vrot.lane.b32.xlu0 %v276, 1
        %v421 = vpop.permute.xlu0 %420
        %422 = vrot.lane.b32.xlu0 %v277, 1
        %v423 = vpop.permute.xlu0 %422
        %v426 = vsel %vm286, 0.0, %v421
        %v427 = vsel %vm286, 0.0, %v423
        %428 = vrot.lane.b32.xlu0 %v276, 127
        %v429 = vpop.permute.xlu0 %428
        %430 = vrot.lane.b32.xlu0 %v277, 127
        %v431 = vpop.permute.xlu0 %430
        %v434 = vsel %vm295, %v429, 0.0
        %v435 = vsel %vm295, %v431, 0.0
        %v436 = vmul.f32 %v276, 2.0
        %v437 = vmul.f32 %v277, 2.0
        %v438 = vadd.f32 %v426, %v436
        %v439 = vadd.f32 %v427, %v437
        %v440 = vadd.f32 %v438, %v434
        %v441 = vadd.f32 %v439, %v435
        %v442 = vsub.f32 %v434, %v426
        %v443 = vsub.f32 %v435, %v427
        %v446 = vrot.slane %v442, 7
        %v447 = vrot.slane %v443, 7
        %v448 = vsel %vm308, %v446, %v447
        %v451 = vsel %vm308, 0.0, %v446
        %v452 = vrot.slane %v442, 1
        %v453 = vrot.slane %v443, 1
        %v454 = vsel %vm315, %v452, %v453
        %v457 = vsel %vm315, %v453, 0.0
        %v460 = vrot.slane %v440, 7
        %v461 = vrot.slane %v441, 7
        %v462 = vsel %vm308, %v460, %v461
        %v465 = vsel %vm308, 0.0, %v460
        %v466 = vrot.slane %v440, 1
        %v467 = vrot.slane %v441, 1
        %v468 = vsel %vm315, %v466, %v467
        %v471 = vsel %vm315, %v467, 0.0
        %v472 = vmul.f32 %v442, 2.0
        %v473 = vmul.f32 %v443, 2.0
        %v474 = vadd.f32 %v451, %v472
        %v475 = vadd.f32 %v448, %v473
        %v476 = vadd.f32 %v474, %v454
        %v477 = vadd.f32 %v475, %v457
        %v478 = vsub.f32 %v465, %v468
        %v479 = vsub.f32 %v462, %v471
        %v480 = vand.u32 2147483647, %v476
        %v481 = vand.u32 2147483647, %v477
        %v482 = vand.u32 2147483647, %v478
        %v483 = vand.u32 2147483647, %v479
        %v484 = vadd.f32 %v480, %v482
        %v485 = vadd.f32 %v481, %v483
        %v486 = vmax.f32 %v348, %v416
        %v487 = vmax.f32 %v349, %v417
        %v488 = vsub.f32 %v484, %v486
        %v489 = vsub.f32 %v485, %v487
        %v490 = vand.u32 2147483647, %v488
        %v491 = vand.u32 2147483647, %v489
        %vm492 = vcmask 130048
        %v493 = vsel %vm492, %v490, 0.0
        %v494 = vsel %vm492, %v491, 0.0
        %v495 = vadd.f32 %v493, %v494
        %496 = vadd.xlane.f32.xlu0 %v495
        %v497 = vpop.xlane.xlu0 %496
        %v498 = vrot.slane %v497, 4
        %v499 = vadd.f32 %v497, %v498
        %v500 = vrot.slane %v499, 2
        %v501 = vadd.f32 %v499, %v500
        %v502 = vrot.slane %v501, 1
        %v503 = vadd.f32 %v501, %v502
        %s504 = vtos %v503
        %v505 = vmul.f32 %v272, %v348
        %v506 = vmul.f32 %v273, %v349
        %v507 = vmul.f32 %v274, %v416
        %v508 = vmul.f32 %v275, %v417
        %vm513 = vcmp.le.s32.totalorder %v505, 1073741823
        %vm514 = vcmp.le.s32.totalorder %v506, 1073741823
        %v515 = vsel %vm513, 1, 0
        %v516 = vsel %vm514, 1, 0
        %v517 = vsel %vm492, %v515, 0
        %v518 = vsel %vm492, %v516, 0
        %v519 = vadd.s32 %v517, %v518
        %v520 = vand.u32 %v519, 65535
        %v521 = vshrl.u32 %v519, 16
        %v522 = vcvt.s32.f32 %v520
        %v523 = vcvt.s32.f32 %v521
        %524 = vadd.xlane.f32.xlu0 %v522
        %v525 = vpop.xlane.xlu0 %524
        %526 = vadd.xlane.f32.xlu0 %v523
        %v527 = vpop.xlane.xlu0 %526
        %v528 = vcvt.f32.s32 %v525
        %v529 = vcvt.f32.s32 %v527
        %v530 = vshll.u32 %v529, 16
        %v531 = vadd.s32 %v530, %v528
        %v532 = vrot.slane %v531, 4
        %v533 = vadd.s32 %v531, %v532
        %v534 = vrot.slane %v533, 2
        %v535 = vadd.s32 %v533, %v534
        %v536 = vrot.slane %v535, 1
        %v537 = vadd.s32 %v535, %v536
        %s538 = vtos %v537
        %vm539 = vcmp.le.s32.totalorder %v507, 1073741823
        %vm540 = vcmp.le.s32.totalorder %v508, 1073741823
        %v541 = vsel %vm539, 1, 0
        %v542 = vsel %vm540, 1, 0
        %v543 = vsel %vm492, %v541, 0
        %v544 = vsel %vm492, %v542, 0
        %v545 = vadd.s32 %v543, %v544
        %v546 = vand.u32 %v545, 65535
        %v547 = vshrl.u32 %v545, 16
        %v548 = vcvt.s32.f32 %v546
        %v549 = vcvt.s32.f32 %v547
        %550 = vadd.xlane.f32.xlu0 %v548
        %v551 = vpop.xlane.xlu0 %550
        %552 = vadd.xlane.f32.xlu0 %v549
        %v553 = vpop.xlane.xlu0 %552
        %v554 = vcvt.f32.s32 %v551
        %v555 = vcvt.f32.s32 %v553
        %v556 = vshll.u32 %v555, 16
        %v557 = vadd.s32 %v556, %v554
        %v558 = vrot.slane %v557, 4
        %v559 = vadd.s32 %v557, %v558
        %v560 = vrot.slane %v559, 2
        %v561 = vadd.s32 %v559, %v560
        %v562 = vrot.slane %v561, 1
        %v563 = vadd.s32 %v561, %v562
        %s564 = vtos %v563
        %p565 = scmp.ge.s32.totalorder %s538, 205
        %s566 = scalar_select %p565, 0, 1073741824
        %p567 = scmp.ge.s32.totalorder %s564, 205
        %s568 = scalar_select %p567, 0, 1073741824
        %s569 = sor.u32 %s566, 536870911
        %s570 = sor.u32 %s568, 536870911
        %v571 = vstv %s569
        %vm572 = vcmp.le.s32.totalorder %v505, %v571
        %vm573 = vcmp.le.s32.totalorder %v506, %v571
        %v574 = vsel %vm572, 1, 0
        %v575 = vsel %vm573, 1, 0
        %v576 = vsel %vm492, %v574, 0
        %v577 = vsel %vm492, %v575, 0
        %v578 = vadd.s32 %v576, %v577
        %v579 = vand.u32 %v578, 65535
        %v580 = vshrl.u32 %v578, 16
        %v581 = vcvt.s32.f32 %v579
        %v582 = vcvt.s32.f32 %v580
        %583 = vadd.xlane.f32.xlu0 %v581
        %v584 = vpop.xlane.xlu0 %583
        %585 = vadd.xlane.f32.xlu0 %v582
        %v586 = vpop.xlane.xlu0 %585
        %v587 = vcvt.f32.s32 %v584
        %v588 = vcvt.f32.s32 %v586
        %v589 = vshll.u32 %v588, 16
        %v590 = vadd.s32 %v589, %v587
        %v591 = vrot.slane %v590, 4
        %v592 = vadd.s32 %v590, %v591
        %v593 = vrot.slane %v592, 2
        %v594 = vadd.s32 %v592, %v593
        %v595 = vrot.slane %v594, 1
        %v596 = vadd.s32 %v594, %v595
        %s597 = vtos %v596
        %v598 = vstv %s570
        %vm599 = vcmp.le.s32.totalorder %v507, %v598
        %vm600 = vcmp.le.s32.totalorder %v508, %v598
        %v601 = vsel %vm599, 1, 0
        %v602 = vsel %vm600, 1, 0
        %v603 = vsel %vm492, %v601, 0
        %v604 = vsel %vm492, %v602, 0
        %v605 = vadd.s32 %v603, %v604
        %v606 = vand.u32 %v605, 65535
        %v607 = vshrl.u32 %v605, 16
        %v608 = vcvt.s32.f32 %v606
        %v609 = vcvt.s32.f32 %v607
        %610 = vadd.xlane.f32.xlu0 %v608
        %v611 = vpop.xlane.xlu0 %610
        %612 = vadd.xlane.f32.xlu0 %v609
        %v613 = vpop.xlane.xlu0 %612
        %v614 = vcvt.f32.s32 %v611
        %v615 = vcvt.f32.s32 %v613
        %v616 = vshll.u32 %v615, 16
        %v617 = vadd.s32 %v616, %v614
        %v618 = vrot.slane %v617, 4
        %v619 = vadd.s32 %v617, %v618
        %v620 = vrot.slane %v619, 2
        %v621 = vadd.s32 %v619, %v620
        %v622 = vrot.slane %v621, 1
        %v623 = vadd.s32 %v621, %v622
        %s624 = vtos %v623
        %p625 = scmp.ge.s32.totalorder %s597, 205
        %s626 = sor.u32 %s566, 536870912
        %s627 = scalar_select %p625, %s566, %s626
        %p628 = scmp.ge.s32.totalorder %s624, 205
        %s629 = sor.u32 %s568, 536870912
        %s630 = scalar_select %p628, %s568, %s629
        %s631 = sor.u32 %s627, 268435455
        %s632 = sor.u32 %s630, 268435455
        %v633 = vstv %s631
        %vm634 = vcmp.le.s32.totalorder %v505, %v633
        %vm635 = vcmp.le.s32.totalorder %v506, %v633
        %v636 = vsel %vm634, 1, 0
        %v637 = vsel %vm635, 1, 0
        %v638 = vsel %vm492, %v636, 0
        %v639 = vsel %vm492, %v637, 0
        %v640 = vadd.s32 %v638, %v639
        %v641 = vand.u32 %v640, 65535
        %v642 = vshrl.u32 %v640, 16
        %v643 = vcvt.s32.f32 %v641
        %v644 = vcvt.s32.f32 %v642
        %645 = vadd.xlane.f32.xlu0 %v643
        %v646 = vpop.xlane.xlu0 %645
        %647 = vadd.xlane.f32.xlu0 %v644
        %v648 = vpop.xlane.xlu0 %647
        %v649 = vcvt.f32.s32 %v646
        %v650 = vcvt.f32.s32 %v648
        %v651 = vshll.u32 %v650, 16
        %v652 = vadd.s32 %v651, %v649
        %v653 = vrot.slane %v652, 4
        %v654 = vadd.s32 %v652, %v653
        %v655 = vrot.slane %v654, 2
        %v656 = vadd.s32 %v654, %v655
        %v657 = vrot.slane %v656, 1
        %v658 = vadd.s32 %v656, %v657
        %s659 = vtos %v658
        %v660 = vstv %s632
        %vm661 = vcmp.le.s32.totalorder %v507, %v660
        %vm662 = vcmp.le.s32.totalorder %v508, %v660
        %v663 = vsel %vm661, 1, 0
        %v664 = vsel %vm662, 1, 0
        %v665 = vsel %vm492, %v663, 0
        %v666 = vsel %vm492, %v664, 0
        %v667 = vadd.s32 %v665, %v666
        %v668 = vand.u32 %v667, 65535
        %v669 = vshrl.u32 %v667, 16
        %v670 = vcvt.s32.f32 %v668
        %v671 = vcvt.s32.f32 %v669
        %672 = vadd.xlane.f32.xlu0 %v670
        %v673 = vpop.xlane.xlu0 %672
        %674 = vadd.xlane.f32.xlu0 %v671
        %v675 = vpop.xlane.xlu0 %674
        %v676 = vcvt.f32.s32 %v673
        %v677 = vcvt.f32.s32 %v675
        %v678 = vshll.u32 %v677, 16
        %v679 = vadd.s32 %v678, %v676
        %v680 = vrot.slane %v679, 4
        %v681 = vadd.s32 %v679, %v680
        %v682 = vrot.slane %v681, 2
        %v683 = vadd.s32 %v681, %v682
        %v684 = vrot.slane %v683, 1
        %v685 = vadd.s32 %v683, %v684
        %s686 = vtos %v685
        %p687 = scmp.ge.s32.totalorder %s659, 205
        %s688 = sor.u32 %s627, 268435456
        %s689 = scalar_select %p687, %s627, %s688
        %p690 = scmp.ge.s32.totalorder %s686, 205
        %s691 = sor.u32 %s630, 268435456
        %s692 = scalar_select %p690, %s630, %s691
        %s693 = sor.u32 %s689, 134217727
        %s694 = sor.u32 %s692, 134217727
        %v695 = vstv %s693
        %vm696 = vcmp.le.s32.totalorder %v505, %v695
        %vm697 = vcmp.le.s32.totalorder %v506, %v695
        %v698 = vsel %vm696, 1, 0
        %v699 = vsel %vm697, 1, 0
        %v700 = vsel %vm492, %v698, 0
        %v701 = vsel %vm492, %v699, 0
        %v702 = vadd.s32 %v700, %v701
        %v703 = vand.u32 %v702, 65535
        %v704 = vshrl.u32 %v702, 16
        %v705 = vcvt.s32.f32 %v703
        %v706 = vcvt.s32.f32 %v704
        %707 = vadd.xlane.f32.xlu0 %v705
        %v708 = vpop.xlane.xlu0 %707
        %709 = vadd.xlane.f32.xlu0 %v706
        %v710 = vpop.xlane.xlu0 %709
        %v711 = vcvt.f32.s32 %v708
        %v712 = vcvt.f32.s32 %v710
        %v713 = vshll.u32 %v712, 16
        %v714 = vadd.s32 %v713, %v711
        %v715 = vrot.slane %v714, 4
        %v716 = vadd.s32 %v714, %v715
        %v717 = vrot.slane %v716, 2
        %v718 = vadd.s32 %v716, %v717
        %v719 = vrot.slane %v718, 1
        %v720 = vadd.s32 %v718, %v719
        %s721 = vtos %v720
        %v722 = vstv %s694
        %vm723 = vcmp.le.s32.totalorder %v507, %v722
        %vm724 = vcmp.le.s32.totalorder %v508, %v722
        %v725 = vsel %vm723, 1, 0
        %v726 = vsel %vm724, 1, 0
        %v727 = vsel %vm492, %v725, 0
        %v728 = vsel %vm492, %v726, 0
        %v729 = vadd.s32 %v727, %v728
        %v730 = vand.u32 %v729, 65535
        %v731 = vshrl.u32 %v729, 16
        %v732 = vcvt.s32.f32 %v730
        %v733 = vcvt.s32.f32 %v731
        %734 = vadd.xlane.f32.xlu0 %v732
        %v735 = vpop.xlane.xlu0 %734
        %736 = vadd.xlane.f32.xlu0 %v733
        %v737 = vpop.xlane.xlu0 %736
        %v738 = vcvt.f32.s32 %v735
        %v739 = vcvt.f32.s32 %v737
        %v740 = vshll.u32 %v739, 16
        %v741 = vadd.s32 %v740, %v738
        %v742 = vrot.slane %v741, 4
        %v743 = vadd.s32 %v741, %v742
        %v744 = vrot.slane %v743, 2
        %v745 = vadd.s32 %v743, %v744
        %v746 = vrot.slane %v745, 1
        %v747 = vadd.s32 %v745, %v746
        %s748 = vtos %v747
        %p749 = scmp.ge.s32.totalorder %s721, 205
        %s750 = sor.u32 %s689, 134217728
        %s751 = scalar_select %p749, %s689, %s750
        %p752 = scmp.ge.s32.totalorder %s748, 205
        %s753 = sor.u32 %s692, 134217728
        %s754 = scalar_select %p752, %s692, %s753
        %s755 = sor.u32 %s751, 67108863
        %s756 = sor.u32 %s754, 67108863
        %v757 = vstv %s755
        %vm758 = vcmp.le.s32.totalorder %v505, %v757
        %vm759 = vcmp.le.s32.totalorder %v506, %v757
        %v760 = vsel %vm758, 1, 0
        %v761 = vsel %vm759, 1, 0
        %v762 = vsel %vm492, %v760, 0
        %v763 = vsel %vm492, %v761, 0
        %v764 = vadd.s32 %v762, %v763
        %v765 = vand.u32 %v764, 65535
        %v766 = vshrl.u32 %v764, 16
        %v767 = vcvt.s32.f32 %v765
        %v768 = vcvt.s32.f32 %v766
        %769 = vadd.xlane.f32.xlu0 %v767
        %v770 = vpop.xlane.xlu0 %769
        %771 = vadd.xlane.f32.xlu0 %v768
        %v772 = vpop.xlane.xlu0 %771
        %v773 = vcvt.f32.s32 %v770
        %v774 = vcvt.f32.s32 %v772
        %v775 = vshll.u32 %v774, 16
        %v776 = vadd.s32 %v775, %v773
        %v777 = vrot.slane %v776, 4
        %v778 = vadd.s32 %v776, %v777
        %v779 = vrot.slane %v778, 2
        %v780 = vadd.s32 %v778, %v779
        %v781 = vrot.slane %v780, 1
        %v782 = vadd.s32 %v780, %v781
        %s783 = vtos %v782
        %v784 = vstv %s756
        %vm785 = vcmp.le.s32.totalorder %v507, %v784
        %vm786 = vcmp.le.s32.totalorder %v508, %v784
        %v787 = vsel %vm785, 1, 0
        %v788 = vsel %vm786, 1, 0
        %v789 = vsel %vm492, %v787, 0
        %v790 = vsel %vm492, %v788, 0
        %v791 = vadd.s32 %v789, %v790
        %v792 = vand.u32 %v791, 65535
        %v793 = vshrl.u32 %v791, 16
        %v794 = vcvt.s32.f32 %v792
        %v795 = vcvt.s32.f32 %v793
        %796 = vadd.xlane.f32.xlu0 %v794
        %v797 = vpop.xlane.xlu0 %796
        %798 = vadd.xlane.f32.xlu0 %v795
        %v799 = vpop.xlane.xlu0 %798
        %v800 = vcvt.f32.s32 %v797
        %v801 = vcvt.f32.s32 %v799
        %v802 = vshll.u32 %v801, 16
        %v803 = vadd.s32 %v802, %v800
        %v804 = vrot.slane %v803, 4
        %v805 = vadd.s32 %v803, %v804
        %v806 = vrot.slane %v805, 2
        %v807 = vadd.s32 %v805, %v806
        %v808 = vrot.slane %v807, 1
        %v809 = vadd.s32 %v807, %v808
        %s810 = vtos %v809
        %p811 = scmp.ge.s32.totalorder %s783, 205
        %s812 = sor.u32 %s751, 67108864
        %s813 = scalar_select %p811, %s751, %s812
        %p814 = scmp.ge.s32.totalorder %s810, 205
        %s815 = sor.u32 %s754, 67108864
        %s816 = scalar_select %p814, %s754, %s815
        %s817 = sor.u32 %s813, 33554431
        %s818 = sor.u32 %s816, 33554431
        %v819 = vstv %s817
        %vm820 = vcmp.le.s32.totalorder %v505, %v819
        %vm821 = vcmp.le.s32.totalorder %v506, %v819
        %v822 = vsel %vm820, 1, 0
        %v823 = vsel %vm821, 1, 0
        %v824 = vsel %vm492, %v822, 0
        %v825 = vsel %vm492, %v823, 0
        %v826 = vadd.s32 %v824, %v825
        %v827 = vand.u32 %v826, 65535
        %v828 = vshrl.u32 %v826, 16
        %v829 = vcvt.s32.f32 %v827
        %v830 = vcvt.s32.f32 %v828
        %831 = vadd.xlane.f32.xlu0 %v829
        %v832 = vpop.xlane.xlu0 %831
        %833 = vadd.xlane.f32.xlu0 %v830
        %v834 = vpop.xlane.xlu0 %833
        %v835 = vcvt.f32.s32 %v832
        %v836 = vcvt.f32.s32 %v834
        %v837 = vshll.u32 %v836, 16
        %v838 = vadd.s32 %v837, %v835
        %v839 = vrot.slane %v838, 4
        %v840 = vadd.s32 %v838, %v839
        %v841 = vrot.slane %v840, 2
        %v842 = vadd.s32 %v840, %v841
        %v843 = vrot.slane %v842, 1
        %v844 = vadd.s32 %v842, %v843
        %s845 = vtos %v844
        %v846 = vstv %s818
        %vm847 = vcmp.le.s32.totalorder %v507, %v846
        %vm848 = vcmp.le.s32.totalorder %v508, %v846
        %v849 = vsel %vm847, 1, 0
        %v850 = vsel %vm848, 1, 0
        %v851 = vsel %vm492, %v849, 0
        %v852 = vsel %vm492, %v850, 0
        %v853 = vadd.s32 %v851, %v852
        %v854 = vand.u32 %v853, 65535
        %v855 = vshrl.u32 %v853, 16
        %v856 = vcvt.s32.f32 %v854
        %v857 = vcvt.s32.f32 %v855
        %858 = vadd.xlane.f32.xlu0 %v856
        %v859 = vpop.xlane.xlu0 %858
        %860 = vadd.xlane.f32.xlu0 %v857
        %v861 = vpop.xlane.xlu0 %860
        %v862 = vcvt.f32.s32 %v859
        %v863 = vcvt.f32.s32 %v861
        %v864 = vshll.u32 %v863, 16
        %v865 = vadd.s32 %v864, %v862
        %v866 = vrot.slane %v865, 4
        %v867 = vadd.s32 %v865, %v866
        %v868 = vrot.slane %v867, 2
        %v869 = vadd.s32 %v867, %v868
        %v870 = vrot.slane %v869, 1
        %v871 = vadd.s32 %v869, %v870
        %s872 = vtos %v871
        %p873 = scmp.ge.s32.totalorder %s845, 205
        %s874 = sor.u32 %s813, 33554432
        %s875 = scalar_select %p873, %s813, %s874
        %p876 = scmp.ge.s32.totalorder %s872, 205
        %s877 = sor.u32 %s816, 33554432
        %s878 = scalar_select %p876, %s816, %s877
        %s879 = sor.u32 %s875, 16777215
        %s880 = sor.u32 %s878, 16777215
        %v881 = vstv %s879
        %vm882 = vcmp.le.s32.totalorder %v505, %v881
        %vm883 = vcmp.le.s32.totalorder %v506, %v881
        %v884 = vsel %vm882, 1, 0
        %v885 = vsel %vm883, 1, 0
        %v886 = vsel %vm492, %v884, 0
        %v887 = vsel %vm492, %v885, 0
        %v888 = vadd.s32 %v886, %v887
        %v889 = vand.u32 %v888, 65535
        %v890 = vshrl.u32 %v888, 16
        %v891 = vcvt.s32.f32 %v889
        %v892 = vcvt.s32.f32 %v890
        %893 = vadd.xlane.f32.xlu0 %v891
        %v894 = vpop.xlane.xlu0 %893
        %895 = vadd.xlane.f32.xlu0 %v892
        %v896 = vpop.xlane.xlu0 %895
        %v897 = vcvt.f32.s32 %v894
        %v898 = vcvt.f32.s32 %v896
        %v899 = vshll.u32 %v898, 16
        %v900 = vadd.s32 %v899, %v897
        %v901 = vrot.slane %v900, 4
        %v902 = vadd.s32 %v900, %v901
        %v903 = vrot.slane %v902, 2
        %v904 = vadd.s32 %v902, %v903
        %v905 = vrot.slane %v904, 1
        %v906 = vadd.s32 %v904, %v905
        %s907 = vtos %v906
        %v908 = vstv %s880
        %vm909 = vcmp.le.s32.totalorder %v507, %v908
        %vm910 = vcmp.le.s32.totalorder %v508, %v908
        %v911 = vsel %vm909, 1, 0
        %v912 = vsel %vm910, 1, 0
        %v913 = vsel %vm492, %v911, 0
        %v914 = vsel %vm492, %v912, 0
        %v915 = vadd.s32 %v913, %v914
        %v916 = vand.u32 %v915, 65535
        %v917 = vshrl.u32 %v915, 16
        %v918 = vcvt.s32.f32 %v916
        %v919 = vcvt.s32.f32 %v917
        %920 = vadd.xlane.f32.xlu0 %v918
        %v921 = vpop.xlane.xlu0 %920
        %922 = vadd.xlane.f32.xlu0 %v919
        %v923 = vpop.xlane.xlu0 %922
        %v924 = vcvt.f32.s32 %v921
        %v925 = vcvt.f32.s32 %v923
        %v926 = vshll.u32 %v925, 16
        %v927 = vadd.s32 %v926, %v924
        %v928 = vrot.slane %v927, 4
        %v929 = vadd.s32 %v927, %v928
        %v930 = vrot.slane %v929, 2
        %v931 = vadd.s32 %v929, %v930
        %v932 = vrot.slane %v931, 1
        %v933 = vadd.s32 %v931, %v932
        %s934 = vtos %v933
        %p935 = scmp.ge.s32.totalorder %s907, 205
        %s936 = sor.u32 %s875, 16777216
        %s937 = scalar_select %p935, %s875, %s936
        %p938 = scmp.ge.s32.totalorder %s934, 205
        %s939 = sor.u32 %s878, 16777216
        %s940 = scalar_select %p938, %s878, %s939
        %s941 = sor.u32 %s937, 8388607
        %s942 = sor.u32 %s940, 8388607
        %v943 = vstv %s941
        %vm944 = vcmp.le.s32.totalorder %v505, %v943
        %vm945 = vcmp.le.s32.totalorder %v506, %v943
        %v946 = vsel %vm944, 1, 0
        %v947 = vsel %vm945, 1, 0
        %v948 = vsel %vm492, %v946, 0
        %v949 = vsel %vm492, %v947, 0
        %v950 = vadd.s32 %v948, %v949
        %v951 = vand.u32 %v950, 65535
        %v952 = vshrl.u32 %v950, 16
        %v953 = vcvt.s32.f32 %v951
        %v954 = vcvt.s32.f32 %v952
        %955 = vadd.xlane.f32.xlu0 %v953
        %v956 = vpop.xlane.xlu0 %955
        %957 = vadd.xlane.f32.xlu0 %v954
        %v958 = vpop.xlane.xlu0 %957
        %v959 = vcvt.f32.s32 %v956
        %v960 = vcvt.f32.s32 %v958
        %v961 = vshll.u32 %v960, 16
        %v962 = vadd.s32 %v961, %v959
        %v963 = vrot.slane %v962, 4
        %v964 = vadd.s32 %v962, %v963
        %v965 = vrot.slane %v964, 2
        %v966 = vadd.s32 %v964, %v965
        %v967 = vrot.slane %v966, 1
        %v968 = vadd.s32 %v966, %v967
        %s969 = vtos %v968
        %v970 = vstv %s942
        %vm971 = vcmp.le.s32.totalorder %v507, %v970
        %vm972 = vcmp.le.s32.totalorder %v508, %v970
        %v973 = vsel %vm971, 1, 0
        %v974 = vsel %vm972, 1, 0
        %v975 = vsel %vm492, %v973, 0
        %v976 = vsel %vm492, %v974, 0
        %v977 = vadd.s32 %v975, %v976
        %v978 = vand.u32 %v977, 65535
        %v979 = vshrl.u32 %v977, 16
        %v980 = vcvt.s32.f32 %v978
        %v981 = vcvt.s32.f32 %v979
        %982 = vadd.xlane.f32.xlu0 %v980
        %v983 = vpop.xlane.xlu0 %982
        %984 = vadd.xlane.f32.xlu0 %v981
        %v985 = vpop.xlane.xlu0 %984
        %v986 = vcvt.f32.s32 %v983
        %v987 = vcvt.f32.s32 %v985
        %v988 = vshll.u32 %v987, 16
        %v989 = vadd.s32 %v988, %v986
        %v990 = vrot.slane %v989, 4
        %v991 = vadd.s32 %v989, %v990
        %v992 = vrot.slane %v991, 2
        %v993 = vadd.s32 %v991, %v992
        %v994 = vrot.slane %v993, 1
        %v995 = vadd.s32 %v993, %v994
        %s996 = vtos %v995
        %p997 = scmp.ge.s32.totalorder %s969, 205
        %s998 = sor.u32 %s937, 8388608
        %s999 = scalar_select %p997, %s937, %s998
        %p1000 = scmp.ge.s32.totalorder %s996, 205
        %s1001 = sor.u32 %s940, 8388608
        %s1002 = scalar_select %p1000, %s940, %s1001
        %s1003 = sor.u32 %s999, 4194303
        %s1004 = sor.u32 %s1002, 4194303
        %v1005 = vstv %s1003
        %vm1006 = vcmp.le.s32.totalorder %v505, %v1005
        %vm1007 = vcmp.le.s32.totalorder %v506, %v1005
        %v1008 = vsel %vm1006, 1, 0
        %v1009 = vsel %vm1007, 1, 0
        %v1010 = vsel %vm492, %v1008, 0
        %v1011 = vsel %vm492, %v1009, 0
        %v1012 = vadd.s32 %v1010, %v1011
        %v1013 = vand.u32 %v1012, 65535
        %v1014 = vshrl.u32 %v1012, 16
        %v1015 = vcvt.s32.f32 %v1013
        %v1016 = vcvt.s32.f32 %v1014
        %1017 = vadd.xlane.f32.xlu0 %v1015
        %v1018 = vpop.xlane.xlu0 %1017
        %1019 = vadd.xlane.f32.xlu0 %v1016
        %v1020 = vpop.xlane.xlu0 %1019
        %v1021 = vcvt.f32.s32 %v1018
        %v1022 = vcvt.f32.s32 %v1020
        %v1023 = vshll.u32 %v1022, 16
        %v1024 = vadd.s32 %v1023, %v1021
        %v1025 = vrot.slane %v1024, 4
        %v1026 = vadd.s32 %v1024, %v1025
        %v1027 = vrot.slane %v1026, 2
        %v1028 = vadd.s32 %v1026, %v1027
        %v1029 = vrot.slane %v1028, 1
        %v1030 = vadd.s32 %v1028, %v1029
        %s1031 = vtos %v1030
        %v1032 = vstv %s1004
        %vm1033 = vcmp.le.s32.totalorder %v507, %v1032
        %vm1034 = vcmp.le.s32.totalorder %v508, %v1032
        %v1035 = vsel %vm1033, 1, 0
        %v1036 = vsel %vm1034, 1, 0
        %v1037 = vsel %vm492, %v1035, 0
        %v1038 = vsel %vm492, %v1036, 0
        %v1039 = vadd.s32 %v1037, %v1038
        %v1040 = vand.u32 %v1039, 65535
        %v1041 = vshrl.u32 %v1039, 16
        %v1042 = vcvt.s32.f32 %v1040
        %v1043 = vcvt.s32.f32 %v1041
        %1044 = vadd.xlane.f32.xlu0 %v1042
        %v1045 = vpop.xlane.xlu0 %1044
        %1046 = vadd.xlane.f32.xlu0 %v1043
        %v1047 = vpop.xlane.xlu0 %1046
        %v1048 = vcvt.f32.s32 %v1045
        %v1049 = vcvt.f32.s32 %v1047
        %v1050 = vshll.u32 %v1049, 16
        %v1051 = vadd.s32 %v1050, %v1048
        %v1052 = vrot.slane %v1051, 4
        %v1053 = vadd.s32 %v1051, %v1052
        %v1054 = vrot.slane %v1053, 2
        %v1055 = vadd.s32 %v1053, %v1054
        %v1056 = vrot.slane %v1055, 1
        %v1057 = vadd.s32 %v1055, %v1056
        %s1058 = vtos %v1057
        %p1059 = scmp.ge.s32.totalorder %s1031, 205
        %s1060 = sor.u32 %s999, 4194304
        %s1061 = scalar_select %p1059, %s999, %s1060
        %p1062 = scmp.ge.s32.totalorder %s1058, 205
        %s1063 = sor.u32 %s1002, 4194304
        %s1064 = scalar_select %p1062, %s1002, %s1063
        %s1065 = sor.u32 %s1061, 2097151
        %s1066 = sor.u32 %s1064, 2097151
        %v1067 = vstv %s1065
        %vm1068 = vcmp.le.s32.totalorder %v505, %v1067
        %vm1069 = vcmp.le.s32.totalorder %v506, %v1067
        %v1070 = vsel %vm1068, 1, 0
        %v1071 = vsel %vm1069, 1, 0
        %v1072 = vsel %vm492, %v1070, 0
        %v1073 = vsel %vm492, %v1071, 0
        %v1074 = vadd.s32 %v1072, %v1073
        %v1075 = vand.u32 %v1074, 65535
        %v1076 = vshrl.u32 %v1074, 16
        %v1077 = vcvt.s32.f32 %v1075
        %v1078 = vcvt.s32.f32 %v1076
        %1079 = vadd.xlane.f32.xlu0 %v1077
        %v1080 = vpop.xlane.xlu0 %1079
        %1081 = vadd.xlane.f32.xlu0 %v1078
        %v1082 = vpop.xlane.xlu0 %1081
        %v1083 = vcvt.f32.s32 %v1080
        %v1084 = vcvt.f32.s32 %v1082
        %v1085 = vshll.u32 %v1084, 16
        %v1086 = vadd.s32 %v1085, %v1083
        %v1087 = vrot.slane %v1086, 4
        %v1088 = vadd.s32 %v1086, %v1087
        %v1089 = vrot.slane %v1088, 2
        %v1090 = vadd.s32 %v1088, %v1089
        %v1091 = vrot.slane %v1090, 1
        %v1092 = vadd.s32 %v1090, %v1091
        %s1093 = vtos %v1092
        %v1094 = vstv %s1066
        %vm1095 = vcmp.le.s32.totalorder %v507, %v1094
        %vm1096 = vcmp.le.s32.totalorder %v508, %v1094
        %v1097 = vsel %vm1095, 1, 0
        %v1098 = vsel %vm1096, 1, 0
        %v1099 = vsel %vm492, %v1097, 0
        %v1100 = vsel %vm492, %v1098, 0
        %v1101 = vadd.s32 %v1099, %v1100
        %v1102 = vand.u32 %v1101, 65535
        %v1103 = vshrl.u32 %v1101, 16
        %v1104 = vcvt.s32.f32 %v1102
        %v1105 = vcvt.s32.f32 %v1103
        %1106 = vadd.xlane.f32.xlu0 %v1104
        %v1107 = vpop.xlane.xlu0 %1106
        %1108 = vadd.xlane.f32.xlu0 %v1105
        %v1109 = vpop.xlane.xlu0 %1108
        %v1110 = vcvt.f32.s32 %v1107
        %v1111 = vcvt.f32.s32 %v1109
        %v1112 = vshll.u32 %v1111, 16
        %v1113 = vadd.s32 %v1112, %v1110
        %v1114 = vrot.slane %v1113, 4
        %v1115 = vadd.s32 %v1113, %v1114
        %v1116 = vrot.slane %v1115, 2
        %v1117 = vadd.s32 %v1115, %v1116
        %v1118 = vrot.slane %v1117, 1
        %v1119 = vadd.s32 %v1117, %v1118
        %s1120 = vtos %v1119
        %p1121 = scmp.ge.s32.totalorder %s1093, 205
        %s1122 = sor.u32 %s1061, 2097152
        %s1123 = scalar_select %p1121, %s1061, %s1122
        %p1124 = scmp.ge.s32.totalorder %s1120, 205
        %s1125 = sor.u32 %s1064, 2097152
        %s1126 = scalar_select %p1124, %s1064, %s1125
        %s1127 = sor.u32 %s1123, 1048575
        %s1128 = sor.u32 %s1126, 1048575
        %v1129 = vstv %s1127
        %vm1130 = vcmp.le.s32.totalorder %v505, %v1129
        %vm1131 = vcmp.le.s32.totalorder %v506, %v1129
        %v1132 = vsel %vm1130, 1, 0
        %v1133 = vsel %vm1131, 1, 0
        %v1134 = vsel %vm492, %v1132, 0
        %v1135 = vsel %vm492, %v1133, 0
        %v1136 = vadd.s32 %v1134, %v1135
        %v1137 = vand.u32 %v1136, 65535
        %v1138 = vshrl.u32 %v1136, 16
        %v1139 = vcvt.s32.f32 %v1137
        %v1140 = vcvt.s32.f32 %v1138
        %1141 = vadd.xlane.f32.xlu0 %v1139
        %v1142 = vpop.xlane.xlu0 %1141
        %1143 = vadd.xlane.f32.xlu0 %v1140
        %v1144 = vpop.xlane.xlu0 %1143
        %v1145 = vcvt.f32.s32 %v1142
        %v1146 = vcvt.f32.s32 %v1144
        %v1147 = vshll.u32 %v1146, 16
        %v1148 = vadd.s32 %v1147, %v1145
        %v1149 = vrot.slane %v1148, 4
        %v1150 = vadd.s32 %v1148, %v1149
        %v1151 = vrot.slane %v1150, 2
        %v1152 = vadd.s32 %v1150, %v1151
        %v1153 = vrot.slane %v1152, 1
        %v1154 = vadd.s32 %v1152, %v1153
        %s1155 = vtos %v1154
        %v1156 = vstv %s1128
        %vm1157 = vcmp.le.s32.totalorder %v507, %v1156
        %vm1158 = vcmp.le.s32.totalorder %v508, %v1156
        %v1159 = vsel %vm1157, 1, 0
        %v1160 = vsel %vm1158, 1, 0
        %v1161 = vsel %vm492, %v1159, 0
        %v1162 = vsel %vm492, %v1160, 0
        %v1163 = vadd.s32 %v1161, %v1162
        %v1164 = vand.u32 %v1163, 65535
        %v1165 = vshrl.u32 %v1163, 16
        %v1166 = vcvt.s32.f32 %v1164
        %v1167 = vcvt.s32.f32 %v1165
        %1168 = vadd.xlane.f32.xlu0 %v1166
        %v1169 = vpop.xlane.xlu0 %1168
        %1170 = vadd.xlane.f32.xlu0 %v1167
        %v1171 = vpop.xlane.xlu0 %1170
        %v1172 = vcvt.f32.s32 %v1169
        %v1173 = vcvt.f32.s32 %v1171
        %v1174 = vshll.u32 %v1173, 16
        %v1175 = vadd.s32 %v1174, %v1172
        %v1176 = vrot.slane %v1175, 4
        %v1177 = vadd.s32 %v1175, %v1176
        %v1178 = vrot.slane %v1177, 2
        %v1179 = vadd.s32 %v1177, %v1178
        %v1180 = vrot.slane %v1179, 1
        %v1181 = vadd.s32 %v1179, %v1180
        %s1182 = vtos %v1181
        %p1183 = scmp.ge.s32.totalorder %s1155, 205
        %s1184 = sor.u32 %s1123, 1048576
        %s1185 = scalar_select %p1183, %s1123, %s1184
        %p1186 = scmp.ge.s32.totalorder %s1182, 205
        %s1187 = sor.u32 %s1126, 1048576
        %s1188 = scalar_select %p1186, %s1126, %s1187
        %s1189 = sor.u32 %s1185, 524287
        %s1190 = sor.u32 %s1188, 524287
        %v1191 = vstv %s1189
        %vm1192 = vcmp.le.s32.totalorder %v505, %v1191
        %vm1193 = vcmp.le.s32.totalorder %v506, %v1191
        %v1194 = vsel %vm1192, 1, 0
        %v1195 = vsel %vm1193, 1, 0
        %v1196 = vsel %vm492, %v1194, 0
        %v1197 = vsel %vm492, %v1195, 0
        %v1198 = vadd.s32 %v1196, %v1197
        %v1199 = vand.u32 %v1198, 65535
        %v1200 = vshrl.u32 %v1198, 16
        %v1201 = vcvt.s32.f32 %v1199
        %v1202 = vcvt.s32.f32 %v1200
        %1203 = vadd.xlane.f32.xlu0 %v1201
        %v1204 = vpop.xlane.xlu0 %1203
        %1205 = vadd.xlane.f32.xlu0 %v1202
        %v1206 = vpop.xlane.xlu0 %1205
        %v1207 = vcvt.f32.s32 %v1204
        %v1208 = vcvt.f32.s32 %v1206
        %v1209 = vshll.u32 %v1208, 16
        %v1210 = vadd.s32 %v1209, %v1207
        %v1211 = vrot.slane %v1210, 4
        %v1212 = vadd.s32 %v1210, %v1211
        %v1213 = vrot.slane %v1212, 2
        %v1214 = vadd.s32 %v1212, %v1213
        %v1215 = vrot.slane %v1214, 1
        %v1216 = vadd.s32 %v1214, %v1215
        %s1217 = vtos %v1216
        %v1218 = vstv %s1190
        %vm1219 = vcmp.le.s32.totalorder %v507, %v1218
        %vm1220 = vcmp.le.s32.totalorder %v508, %v1218
        %v1221 = vsel %vm1219, 1, 0
        %v1222 = vsel %vm1220, 1, 0
        %v1223 = vsel %vm492, %v1221, 0
        %v1224 = vsel %vm492, %v1222, 0
        %v1225 = vadd.s32 %v1223, %v1224
        %v1226 = vand.u32 %v1225, 65535
        %v1227 = vshrl.u32 %v1225, 16
        %v1228 = vcvt.s32.f32 %v1226
        %v1229 = vcvt.s32.f32 %v1227
        %1230 = vadd.xlane.f32.xlu0 %v1228
        %v1231 = vpop.xlane.xlu0 %1230
        %1232 = vadd.xlane.f32.xlu0 %v1229
        %v1233 = vpop.xlane.xlu0 %1232
        %v1234 = vcvt.f32.s32 %v1231
        %v1235 = vcvt.f32.s32 %v1233
        %v1236 = vshll.u32 %v1235, 16
        %v1237 = vadd.s32 %v1236, %v1234
        %v1238 = vrot.slane %v1237, 4
        %v1239 = vadd.s32 %v1237, %v1238
        %v1240 = vrot.slane %v1239, 2
        %v1241 = vadd.s32 %v1239, %v1240
        %v1242 = vrot.slane %v1241, 1
        %v1243 = vadd.s32 %v1241, %v1242
        %s1244 = vtos %v1243
        %p1245 = scmp.ge.s32.totalorder %s1217, 205
        %s1246 = sor.u32 %s1185, 524288
        %s1247 = scalar_select %p1245, %s1185, %s1246
        %p1248 = scmp.ge.s32.totalorder %s1244, 205
        %s1249 = sor.u32 %s1188, 524288
        %s1250 = scalar_select %p1248, %s1188, %s1249
        %s1251 = sor.u32 %s1247, 262143
        %s1252 = sor.u32 %s1250, 262143
        %v1253 = vstv %s1251
        %vm1254 = vcmp.le.s32.totalorder %v505, %v1253
        %vm1255 = vcmp.le.s32.totalorder %v506, %v1253
        %v1256 = vsel %vm1254, 1, 0
        %v1257 = vsel %vm1255, 1, 0
        %v1258 = vsel %vm492, %v1256, 0
        %v1259 = vsel %vm492, %v1257, 0
        %v1260 = vadd.s32 %v1258, %v1259
        %v1261 = vand.u32 %v1260, 65535
        %v1262 = vshrl.u32 %v1260, 16
        %v1263 = vcvt.s32.f32 %v1261
        %v1264 = vcvt.s32.f32 %v1262
        %1265 = vadd.xlane.f32.xlu0 %v1263
        %v1266 = vpop.xlane.xlu0 %1265
        %1267 = vadd.xlane.f32.xlu0 %v1264
        %v1268 = vpop.xlane.xlu0 %1267
        %v1269 = vcvt.f32.s32 %v1266
        %v1270 = vcvt.f32.s32 %v1268
        %v1271 = vshll.u32 %v1270, 16
        %v1272 = vadd.s32 %v1271, %v1269
        %v1273 = vrot.slane %v1272, 4
        %v1274 = vadd.s32 %v1272, %v1273
        %v1275 = vrot.slane %v1274, 2
        %v1276 = vadd.s32 %v1274, %v1275
        %v1277 = vrot.slane %v1276, 1
        %v1278 = vadd.s32 %v1276, %v1277
        %s1279 = vtos %v1278
        %v1280 = vstv %s1252
        %vm1281 = vcmp.le.s32.totalorder %v507, %v1280
        %vm1282 = vcmp.le.s32.totalorder %v508, %v1280
        %v1283 = vsel %vm1281, 1, 0
        %v1284 = vsel %vm1282, 1, 0
        %v1285 = vsel %vm492, %v1283, 0
        %v1286 = vsel %vm492, %v1284, 0
        %v1287 = vadd.s32 %v1285, %v1286
        %v1288 = vand.u32 %v1287, 65535
        %v1289 = vshrl.u32 %v1287, 16
        %v1290 = vcvt.s32.f32 %v1288
        %v1291 = vcvt.s32.f32 %v1289
        %1292 = vadd.xlane.f32.xlu0 %v1290
        %v1293 = vpop.xlane.xlu0 %1292
        %1294 = vadd.xlane.f32.xlu0 %v1291
        %v1295 = vpop.xlane.xlu0 %1294
        %v1296 = vcvt.f32.s32 %v1293
        %v1297 = vcvt.f32.s32 %v1295
        %v1298 = vshll.u32 %v1297, 16
        %v1299 = vadd.s32 %v1298, %v1296
        %v1300 = vrot.slane %v1299, 4
        %v1301 = vadd.s32 %v1299, %v1300
        %v1302 = vrot.slane %v1301, 2
        %v1303 = vadd.s32 %v1301, %v1302
        %v1304 = vrot.slane %v1303, 1
        %v1305 = vadd.s32 %v1303, %v1304
        %s1306 = vtos %v1305
        %p1307 = scmp.ge.s32.totalorder %s1279, 205
        %s1308 = sor.u32 %s1247, 262144
        %s1309 = scalar_select %p1307, %s1247, %s1308
        %p1310 = scmp.ge.s32.totalorder %s1306, 205
        %s1311 = sor.u32 %s1250, 262144
        %s1312 = scalar_select %p1310, %s1250, %s1311
        %s1313 = sor.u32 %s1309, 131071
        %s1314 = sor.u32 %s1312, 131071
        %v1315 = vstv %s1313
        %vm1316 = vcmp.le.s32.totalorder %v505, %v1315
        %vm1317 = vcmp.le.s32.totalorder %v506, %v1315
        %v1318 = vsel %vm1316, 1, 0
        %v1319 = vsel %vm1317, 1, 0
        %v1320 = vsel %vm492, %v1318, 0
        %v1321 = vsel %vm492, %v1319, 0
        %v1322 = vadd.s32 %v1320, %v1321
        %v1323 = vand.u32 %v1322, 65535
        %v1324 = vshrl.u32 %v1322, 16
        %v1325 = vcvt.s32.f32 %v1323
        %v1326 = vcvt.s32.f32 %v1324
        %1327 = vadd.xlane.f32.xlu0 %v1325
        %v1328 = vpop.xlane.xlu0 %1327
        %1329 = vadd.xlane.f32.xlu0 %v1326
        %v1330 = vpop.xlane.xlu0 %1329
        %v1331 = vcvt.f32.s32 %v1328
        %v1332 = vcvt.f32.s32 %v1330
        %v1333 = vshll.u32 %v1332, 16
        %v1334 = vadd.s32 %v1333, %v1331
        %v1335 = vrot.slane %v1334, 4
        %v1336 = vadd.s32 %v1334, %v1335
        %v1337 = vrot.slane %v1336, 2
        %v1338 = vadd.s32 %v1336, %v1337
        %v1339 = vrot.slane %v1338, 1
        %v1340 = vadd.s32 %v1338, %v1339
        %s1341 = vtos %v1340
        %v1342 = vstv %s1314
        %vm1343 = vcmp.le.s32.totalorder %v507, %v1342
        %vm1344 = vcmp.le.s32.totalorder %v508, %v1342
        %v1345 = vsel %vm1343, 1, 0
        %v1346 = vsel %vm1344, 1, 0
        %v1347 = vsel %vm492, %v1345, 0
        %v1348 = vsel %vm492, %v1346, 0
        %v1349 = vadd.s32 %v1347, %v1348
        %v1350 = vand.u32 %v1349, 65535
        %v1351 = vshrl.u32 %v1349, 16
        %v1352 = vcvt.s32.f32 %v1350
        %v1353 = vcvt.s32.f32 %v1351
        %1354 = vadd.xlane.f32.xlu0 %v1352
        %v1355 = vpop.xlane.xlu0 %1354
        %1356 = vadd.xlane.f32.xlu0 %v1353
        %v1357 = vpop.xlane.xlu0 %1356
        %v1358 = vcvt.f32.s32 %v1355
        %v1359 = vcvt.f32.s32 %v1357
        %v1360 = vshll.u32 %v1359, 16
        %v1361 = vadd.s32 %v1360, %v1358
        %v1362 = vrot.slane %v1361, 4
        %v1363 = vadd.s32 %v1361, %v1362
        %v1364 = vrot.slane %v1363, 2
        %v1365 = vadd.s32 %v1363, %v1364
        %v1366 = vrot.slane %v1365, 1
        %v1367 = vadd.s32 %v1365, %v1366
        %s1368 = vtos %v1367
        %p1369 = scmp.ge.s32.totalorder %s1341, 205
        %s1370 = sor.u32 %s1309, 131072
        %s1371 = scalar_select %p1369, %s1309, %s1370
        %p1372 = scmp.ge.s32.totalorder %s1368, 205
        %s1373 = sor.u32 %s1312, 131072
        %s1374 = scalar_select %p1372, %s1312, %s1373
        %s1375 = sor.u32 %s1371, 65535
        %s1376 = sor.u32 %s1374, 65535
        %v1377 = vstv %s1375
        %vm1378 = vcmp.le.s32.totalorder %v505, %v1377
        %vm1379 = vcmp.le.s32.totalorder %v506, %v1377
        %v1380 = vsel %vm1378, 1, 0
        %v1381 = vsel %vm1379, 1, 0
        %v1382 = vsel %vm492, %v1380, 0
        %v1383 = vsel %vm492, %v1381, 0
        %v1384 = vadd.s32 %v1382, %v1383
        %v1385 = vand.u32 %v1384, 65535
        %v1386 = vshrl.u32 %v1384, 16
        %v1387 = vcvt.s32.f32 %v1385
        %v1388 = vcvt.s32.f32 %v1386
        %1389 = vadd.xlane.f32.xlu0 %v1387
        %v1390 = vpop.xlane.xlu0 %1389
        %1391 = vadd.xlane.f32.xlu0 %v1388
        %v1392 = vpop.xlane.xlu0 %1391
        %v1393 = vcvt.f32.s32 %v1390
        %v1394 = vcvt.f32.s32 %v1392
        %v1395 = vshll.u32 %v1394, 16
        %v1396 = vadd.s32 %v1395, %v1393
        %v1397 = vrot.slane %v1396, 4
        %v1398 = vadd.s32 %v1396, %v1397
        %v1399 = vrot.slane %v1398, 2
        %v1400 = vadd.s32 %v1398, %v1399
        %v1401 = vrot.slane %v1400, 1
        %v1402 = vadd.s32 %v1400, %v1401
        %s1403 = vtos %v1402
        %v1404 = vstv %s1376
        %vm1405 = vcmp.le.s32.totalorder %v507, %v1404
        %vm1406 = vcmp.le.s32.totalorder %v508, %v1404
        %v1407 = vsel %vm1405, 1, 0
        %v1408 = vsel %vm1406, 1, 0
        %v1409 = vsel %vm492, %v1407, 0
        %v1410 = vsel %vm492, %v1408, 0
        %v1411 = vadd.s32 %v1409, %v1410
        %v1412 = vand.u32 %v1411, 65535
        %v1413 = vshrl.u32 %v1411, 16
        %v1414 = vcvt.s32.f32 %v1412
        %v1415 = vcvt.s32.f32 %v1413
        %1416 = vadd.xlane.f32.xlu0 %v1414
        %v1417 = vpop.xlane.xlu0 %1416
        %1418 = vadd.xlane.f32.xlu0 %v1415
        %v1419 = vpop.xlane.xlu0 %1418
        %v1420 = vcvt.f32.s32 %v1417
        %v1421 = vcvt.f32.s32 %v1419
        %v1422 = vshll.u32 %v1421, 16
        %v1423 = vadd.s32 %v1422, %v1420
        %v1424 = vrot.slane %v1423, 4
        %v1425 = vadd.s32 %v1423, %v1424
        %v1426 = vrot.slane %v1425, 2
        %v1427 = vadd.s32 %v1425, %v1426
        %v1428 = vrot.slane %v1427, 1
        %v1429 = vadd.s32 %v1427, %v1428
        %s1430 = vtos %v1429
        %p1431 = scmp.ge.s32.totalorder %s1403, 205
        %s1432 = sor.u32 %s1371, 65536
        %s1433 = scalar_select %p1431, %s1371, %s1432
        %p1434 = scmp.ge.s32.totalorder %s1430, 205
        %s1435 = sor.u32 %s1374, 65536
        %s1436 = scalar_select %p1434, %s1374, %s1435
        %s1437 = sor.u32 %s1433, 32767
        %s1438 = sor.u32 %s1436, 32767
        %v1439 = vstv %s1437
        %vm1440 = vcmp.le.s32.totalorder %v505, %v1439
        %vm1441 = vcmp.le.s32.totalorder %v506, %v1439
        %v1442 = vsel %vm1440, 1, 0
        %v1443 = vsel %vm1441, 1, 0
        %v1444 = vsel %vm492, %v1442, 0
        %v1445 = vsel %vm492, %v1443, 0
        %v1446 = vadd.s32 %v1444, %v1445
        %v1447 = vand.u32 %v1446, 65535
        %v1448 = vshrl.u32 %v1446, 16
        %v1449 = vcvt.s32.f32 %v1447
        %v1450 = vcvt.s32.f32 %v1448
        %1451 = vadd.xlane.f32.xlu0 %v1449
        %v1452 = vpop.xlane.xlu0 %1451
        %1453 = vadd.xlane.f32.xlu0 %v1450
        %v1454 = vpop.xlane.xlu0 %1453
        %v1455 = vcvt.f32.s32 %v1452
        %v1456 = vcvt.f32.s32 %v1454
        %v1457 = vshll.u32 %v1456, 16
        %v1458 = vadd.s32 %v1457, %v1455
        %v1459 = vrot.slane %v1458, 4
        %v1460 = vadd.s32 %v1458, %v1459
        %v1461 = vrot.slane %v1460, 2
        %v1462 = vadd.s32 %v1460, %v1461
        %v1463 = vrot.slane %v1462, 1
        %v1464 = vadd.s32 %v1462, %v1463
        %s1465 = vtos %v1464
        %v1466 = vstv %s1438
        %vm1467 = vcmp.le.s32.totalorder %v507, %v1466
        %vm1468 = vcmp.le.s32.totalorder %v508, %v1466
        %v1469 = vsel %vm1467, 1, 0
        %v1470 = vsel %vm1468, 1, 0
        %v1471 = vsel %vm492, %v1469, 0
        %v1472 = vsel %vm492, %v1470, 0
        %v1473 = vadd.s32 %v1471, %v1472
        %v1474 = vand.u32 %v1473, 65535
        %v1475 = vshrl.u32 %v1473, 16
        %v1476 = vcvt.s32.f32 %v1474
        %v1477 = vcvt.s32.f32 %v1475
        %1478 = vadd.xlane.f32.xlu0 %v1476
        %v1479 = vpop.xlane.xlu0 %1478
        %1480 = vadd.xlane.f32.xlu0 %v1477
        %v1481 = vpop.xlane.xlu0 %1480
        %v1482 = vcvt.f32.s32 %v1479
        %v1483 = vcvt.f32.s32 %v1481
        %v1484 = vshll.u32 %v1483, 16
        %v1485 = vadd.s32 %v1484, %v1482
        %v1486 = vrot.slane %v1485, 4
        %v1487 = vadd.s32 %v1485, %v1486
        %v1488 = vrot.slane %v1487, 2
        %v1489 = vadd.s32 %v1487, %v1488
        %v1490 = vrot.slane %v1489, 1
        %v1491 = vadd.s32 %v1489, %v1490
        %s1492 = vtos %v1491
        %p1493 = scmp.ge.s32.totalorder %s1465, 205
        %s1494 = sor.u32 %s1433, 32768
        %s1495 = scalar_select %p1493, %s1433, %s1494
        %p1496 = scmp.ge.s32.totalorder %s1492, 205
        %s1497 = sor.u32 %s1436, 32768
        %s1498 = scalar_select %p1496, %s1436, %s1497
        %s1499 = sor.u32 %s1495, 16383
        %s1500 = sor.u32 %s1498, 16383
        %v1501 = vstv %s1499
        %vm1502 = vcmp.le.s32.totalorder %v505, %v1501
        %vm1503 = vcmp.le.s32.totalorder %v506, %v1501
        %v1504 = vsel %vm1502, 1, 0
        %v1505 = vsel %vm1503, 1, 0
        %v1506 = vsel %vm492, %v1504, 0
        %v1507 = vsel %vm492, %v1505, 0
        %v1508 = vadd.s32 %v1506, %v1507
        %v1509 = vand.u32 %v1508, 65535
        %v1510 = vshrl.u32 %v1508, 16
        %v1511 = vcvt.s32.f32 %v1509
        %v1512 = vcvt.s32.f32 %v1510
        %1513 = vadd.xlane.f32.xlu0 %v1511
        %v1514 = vpop.xlane.xlu0 %1513
        %1515 = vadd.xlane.f32.xlu0 %v1512
        %v1516 = vpop.xlane.xlu0 %1515
        %v1517 = vcvt.f32.s32 %v1514
        %v1518 = vcvt.f32.s32 %v1516
        %v1519 = vshll.u32 %v1518, 16
        %v1520 = vadd.s32 %v1519, %v1517
        %v1521 = vrot.slane %v1520, 4
        %v1522 = vadd.s32 %v1520, %v1521
        %v1523 = vrot.slane %v1522, 2
        %v1524 = vadd.s32 %v1522, %v1523
        %v1525 = vrot.slane %v1524, 1
        %v1526 = vadd.s32 %v1524, %v1525
        %s1527 = vtos %v1526
        %v1528 = vstv %s1500
        %vm1529 = vcmp.le.s32.totalorder %v507, %v1528
        %vm1530 = vcmp.le.s32.totalorder %v508, %v1528
        %v1531 = vsel %vm1529, 1, 0
        %v1532 = vsel %vm1530, 1, 0
        %v1533 = vsel %vm492, %v1531, 0
        %v1534 = vsel %vm492, %v1532, 0
        %v1535 = vadd.s32 %v1533, %v1534
        %v1536 = vand.u32 %v1535, 65535
        %v1537 = vshrl.u32 %v1535, 16
        %v1538 = vcvt.s32.f32 %v1536
        %v1539 = vcvt.s32.f32 %v1537
        %1540 = vadd.xlane.f32.xlu0 %v1538
        %v1541 = vpop.xlane.xlu0 %1540
        %1542 = vadd.xlane.f32.xlu0 %v1539
        %v1543 = vpop.xlane.xlu0 %1542
        %v1544 = vcvt.f32.s32 %v1541
        %v1545 = vcvt.f32.s32 %v1543
        %v1546 = vshll.u32 %v1545, 16
        %v1547 = vadd.s32 %v1546, %v1544
        %v1548 = vrot.slane %v1547, 4
        %v1549 = vadd.s32 %v1547, %v1548
        %v1550 = vrot.slane %v1549, 2
        %v1551 = vadd.s32 %v1549, %v1550
        %v1552 = vrot.slane %v1551, 1
        %v1553 = vadd.s32 %v1551, %v1552
        %s1554 = vtos %v1553
        %p1555 = scmp.ge.s32.totalorder %s1527, 205
        %s1556 = sor.u32 %s1495, 16384
        %s1557 = scalar_select %p1555, %s1495, %s1556
        %p1558 = scmp.ge.s32.totalorder %s1554, 205
        %s1559 = sor.u32 %s1498, 16384
        %s1560 = scalar_select %p1558, %s1498, %s1559
        %s1561 = sor.u32 %s1557, 8191
        %s1562 = sor.u32 %s1560, 8191
        %v1563 = vstv %s1561
        %vm1564 = vcmp.le.s32.totalorder %v505, %v1563
        %vm1565 = vcmp.le.s32.totalorder %v506, %v1563
        %v1566 = vsel %vm1564, 1, 0
        %v1567 = vsel %vm1565, 1, 0
        %v1568 = vsel %vm492, %v1566, 0
        %v1569 = vsel %vm492, %v1567, 0
        %v1570 = vadd.s32 %v1568, %v1569
        %v1571 = vand.u32 %v1570, 65535
        %v1572 = vshrl.u32 %v1570, 16
        %v1573 = vcvt.s32.f32 %v1571
        %v1574 = vcvt.s32.f32 %v1572
        %1575 = vadd.xlane.f32.xlu0 %v1573
        %v1576 = vpop.xlane.xlu0 %1575
        %1577 = vadd.xlane.f32.xlu0 %v1574
        %v1578 = vpop.xlane.xlu0 %1577
        %v1579 = vcvt.f32.s32 %v1576
        %v1580 = vcvt.f32.s32 %v1578
        %v1581 = vshll.u32 %v1580, 16
        %v1582 = vadd.s32 %v1581, %v1579
        %v1583 = vrot.slane %v1582, 4
        %v1584 = vadd.s32 %v1582, %v1583
        %v1585 = vrot.slane %v1584, 2
        %v1586 = vadd.s32 %v1584, %v1585
        %v1587 = vrot.slane %v1586, 1
        %v1588 = vadd.s32 %v1586, %v1587
        %s1589 = vtos %v1588
        %v1590 = vstv %s1562
        %vm1591 = vcmp.le.s32.totalorder %v507, %v1590
        %vm1592 = vcmp.le.s32.totalorder %v508, %v1590
        %v1593 = vsel %vm1591, 1, 0
        %v1594 = vsel %vm1592, 1, 0
        %v1595 = vsel %vm492, %v1593, 0
        %v1596 = vsel %vm492, %v1594, 0
        %v1597 = vadd.s32 %v1595, %v1596
        %v1598 = vand.u32 %v1597, 65535
        %v1599 = vshrl.u32 %v1597, 16
        %v1600 = vcvt.s32.f32 %v1598
        %v1601 = vcvt.s32.f32 %v1599
        %1602 = vadd.xlane.f32.xlu0 %v1600
        %v1603 = vpop.xlane.xlu0 %1602
        %1604 = vadd.xlane.f32.xlu0 %v1601
        %v1605 = vpop.xlane.xlu0 %1604
        %v1606 = vcvt.f32.s32 %v1603
        %v1607 = vcvt.f32.s32 %v1605
        %v1608 = vshll.u32 %v1607, 16
        %v1609 = vadd.s32 %v1608, %v1606
        %v1610 = vrot.slane %v1609, 4
        %v1611 = vadd.s32 %v1609, %v1610
        %v1612 = vrot.slane %v1611, 2
        %v1613 = vadd.s32 %v1611, %v1612
        %v1614 = vrot.slane %v1613, 1
        %v1615 = vadd.s32 %v1613, %v1614
        %s1616 = vtos %v1615
        %p1617 = scmp.ge.s32.totalorder %s1589, 205
        %s1618 = sor.u32 %s1557, 8192
        %s1619 = scalar_select %p1617, %s1557, %s1618
        %p1620 = scmp.ge.s32.totalorder %s1616, 205
        %s1621 = sor.u32 %s1560, 8192
        %s1622 = scalar_select %p1620, %s1560, %s1621
        %s1623 = sor.u32 %s1619, 4095
        %s1624 = sor.u32 %s1622, 4095
        %v1625 = vstv %s1623
        %vm1626 = vcmp.le.s32.totalorder %v505, %v1625
        %vm1627 = vcmp.le.s32.totalorder %v506, %v1625
        %v1628 = vsel %vm1626, 1, 0
        %v1629 = vsel %vm1627, 1, 0
        %v1630 = vsel %vm492, %v1628, 0
        %v1631 = vsel %vm492, %v1629, 0
        %v1632 = vadd.s32 %v1630, %v1631
        %v1633 = vand.u32 %v1632, 65535
        %v1634 = vshrl.u32 %v1632, 16
        %v1635 = vcvt.s32.f32 %v1633
        %v1636 = vcvt.s32.f32 %v1634
        %1637 = vadd.xlane.f32.xlu0 %v1635
        %v1638 = vpop.xlane.xlu0 %1637
        %1639 = vadd.xlane.f32.xlu0 %v1636
        %v1640 = vpop.xlane.xlu0 %1639
        %v1641 = vcvt.f32.s32 %v1638
        %v1642 = vcvt.f32.s32 %v1640
        %v1643 = vshll.u32 %v1642, 16
        %v1644 = vadd.s32 %v1643, %v1641
        %v1645 = vrot.slane %v1644, 4
        %v1646 = vadd.s32 %v1644, %v1645
        %v1647 = vrot.slane %v1646, 2
        %v1648 = vadd.s32 %v1646, %v1647
        %v1649 = vrot.slane %v1648, 1
        %v1650 = vadd.s32 %v1648, %v1649
        %s1651 = vtos %v1650
        %v1652 = vstv %s1624
        %vm1653 = vcmp.le.s32.totalorder %v507, %v1652
        %vm1654 = vcmp.le.s32.totalorder %v508, %v1652
        %v1655 = vsel %vm1653, 1, 0
        %v1656 = vsel %vm1654, 1, 0
        %v1657 = vsel %vm492, %v1655, 0
        %v1658 = vsel %vm492, %v1656, 0
        %v1659 = vadd.s32 %v1657, %v1658
        %v1660 = vand.u32 %v1659, 65535
        %v1661 = vshrl.u32 %v1659, 16
        %v1662 = vcvt.s32.f32 %v1660
        %v1663 = vcvt.s32.f32 %v1661
        %1664 = vadd.xlane.f32.xlu0 %v1662
        %v1665 = vpop.xlane.xlu0 %1664
        %1666 = vadd.xlane.f32.xlu0 %v1663
        %v1667 = vpop.xlane.xlu0 %1666
        %v1668 = vcvt.f32.s32 %v1665
        %v1669 = vcvt.f32.s32 %v1667
        %v1670 = vshll.u32 %v1669, 16
        %v1671 = vadd.s32 %v1670, %v1668
        %v1672 = vrot.slane %v1671, 4
        %v1673 = vadd.s32 %v1671, %v1672
        %v1674 = vrot.slane %v1673, 2
        %v1675 = vadd.s32 %v1673, %v1674
        %v1676 = vrot.slane %v1675, 1
        %v1677 = vadd.s32 %v1675, %v1676
        %s1678 = vtos %v1677
        %p1679 = scmp.ge.s32.totalorder %s1651, 205
        %s1680 = sor.u32 %s1619, 4096
        %s1681 = scalar_select %p1679, %s1619, %s1680
        %p1682 = scmp.ge.s32.totalorder %s1678, 205
        %s1683 = sor.u32 %s1622, 4096
        %s1684 = scalar_select %p1682, %s1622, %s1683
        %s1685 = sor.u32 %s1681, 2047
        %s1686 = sor.u32 %s1684, 2047
        %v1687 = vstv %s1685
        %vm1688 = vcmp.le.s32.totalorder %v505, %v1687
        %vm1689 = vcmp.le.s32.totalorder %v506, %v1687
        %v1690 = vsel %vm1688, 1, 0
        %v1691 = vsel %vm1689, 1, 0
        %v1692 = vsel %vm492, %v1690, 0
        %v1693 = vsel %vm492, %v1691, 0
        %v1694 = vadd.s32 %v1692, %v1693
        %v1695 = vand.u32 %v1694, 65535
        %v1696 = vshrl.u32 %v1694, 16
        %v1697 = vcvt.s32.f32 %v1695
        %v1698 = vcvt.s32.f32 %v1696
        %1699 = vadd.xlane.f32.xlu0 %v1697
        %v1700 = vpop.xlane.xlu0 %1699
        %1701 = vadd.xlane.f32.xlu0 %v1698
        %v1702 = vpop.xlane.xlu0 %1701
        %v1703 = vcvt.f32.s32 %v1700
        %v1704 = vcvt.f32.s32 %v1702
        %v1705 = vshll.u32 %v1704, 16
        %v1706 = vadd.s32 %v1705, %v1703
        %v1707 = vrot.slane %v1706, 4
        %v1708 = vadd.s32 %v1706, %v1707
        %v1709 = vrot.slane %v1708, 2
        %v1710 = vadd.s32 %v1708, %v1709
        %v1711 = vrot.slane %v1710, 1
        %v1712 = vadd.s32 %v1710, %v1711
        %s1713 = vtos %v1712
        %v1714 = vstv %s1686
        %vm1715 = vcmp.le.s32.totalorder %v507, %v1714
        %vm1716 = vcmp.le.s32.totalorder %v508, %v1714
        %v1717 = vsel %vm1715, 1, 0
        %v1718 = vsel %vm1716, 1, 0
        %v1719 = vsel %vm492, %v1717, 0
        %v1720 = vsel %vm492, %v1718, 0
        %v1721 = vadd.s32 %v1719, %v1720
        %v1722 = vand.u32 %v1721, 65535
        %v1723 = vshrl.u32 %v1721, 16
        %v1724 = vcvt.s32.f32 %v1722
        %v1725 = vcvt.s32.f32 %v1723
        %1726 = vadd.xlane.f32.xlu0 %v1724
        %v1727 = vpop.xlane.xlu0 %1726
        %1728 = vadd.xlane.f32.xlu0 %v1725
        %v1729 = vpop.xlane.xlu0 %1728
        %v1730 = vcvt.f32.s32 %v1727
        %v1731 = vcvt.f32.s32 %v1729
        %v1732 = vshll.u32 %v1731, 16
        %v1733 = vadd.s32 %v1732, %v1730
        %v1734 = vrot.slane %v1733, 4
        %v1735 = vadd.s32 %v1733, %v1734
        %v1736 = vrot.slane %v1735, 2
        %v1737 = vadd.s32 %v1735, %v1736
        %v1738 = vrot.slane %v1737, 1
        %v1739 = vadd.s32 %v1737, %v1738
        %s1740 = vtos %v1739
        %p1741 = scmp.ge.s32.totalorder %s1713, 205
        %s1742 = sor.u32 %s1681, 2048
        %s1743 = scalar_select %p1741, %s1681, %s1742
        %p1744 = scmp.ge.s32.totalorder %s1740, 205
        %s1745 = sor.u32 %s1684, 2048
        %s1746 = scalar_select %p1744, %s1684, %s1745
        %s1747 = sor.u32 %s1743, 1023
        %s1748 = sor.u32 %s1746, 1023
        %v1749 = vstv %s1747
        %vm1750 = vcmp.le.s32.totalorder %v505, %v1749
        %vm1751 = vcmp.le.s32.totalorder %v506, %v1749
        %v1752 = vsel %vm1750, 1, 0
        %v1753 = vsel %vm1751, 1, 0
        %v1754 = vsel %vm492, %v1752, 0
        %v1755 = vsel %vm492, %v1753, 0
        %v1756 = vadd.s32 %v1754, %v1755
        %v1757 = vand.u32 %v1756, 65535
        %v1758 = vshrl.u32 %v1756, 16
        %v1759 = vcvt.s32.f32 %v1757
        %v1760 = vcvt.s32.f32 %v1758
        %1761 = vadd.xlane.f32.xlu0 %v1759
        %v1762 = vpop.xlane.xlu0 %1761
        %1763 = vadd.xlane.f32.xlu0 %v1760
        %v1764 = vpop.xlane.xlu0 %1763
        %v1765 = vcvt.f32.s32 %v1762
        %v1766 = vcvt.f32.s32 %v1764
        %v1767 = vshll.u32 %v1766, 16
        %v1768 = vadd.s32 %v1767, %v1765
        %v1769 = vrot.slane %v1768, 4
        %v1770 = vadd.s32 %v1768, %v1769
        %v1771 = vrot.slane %v1770, 2
        %v1772 = vadd.s32 %v1770, %v1771
        %v1773 = vrot.slane %v1772, 1
        %v1774 = vadd.s32 %v1772, %v1773
        %s1775 = vtos %v1774
        %v1776 = vstv %s1748
        %vm1777 = vcmp.le.s32.totalorder %v507, %v1776
        %vm1778 = vcmp.le.s32.totalorder %v508, %v1776
        %v1779 = vsel %vm1777, 1, 0
        %v1780 = vsel %vm1778, 1, 0
        %v1781 = vsel %vm492, %v1779, 0
        %v1782 = vsel %vm492, %v1780, 0
        %v1783 = vadd.s32 %v1781, %v1782
        %v1784 = vand.u32 %v1783, 65535
        %v1785 = vshrl.u32 %v1783, 16
        %v1786 = vcvt.s32.f32 %v1784
        %v1787 = vcvt.s32.f32 %v1785
        %1788 = vadd.xlane.f32.xlu0 %v1786
        %v1789 = vpop.xlane.xlu0 %1788
        %1790 = vadd.xlane.f32.xlu0 %v1787
        %v1791 = vpop.xlane.xlu0 %1790
        %v1792 = vcvt.f32.s32 %v1789
        %v1793 = vcvt.f32.s32 %v1791
        %v1794 = vshll.u32 %v1793, 16
        %v1795 = vadd.s32 %v1794, %v1792
        %v1796 = vrot.slane %v1795, 4
        %v1797 = vadd.s32 %v1795, %v1796
        %v1798 = vrot.slane %v1797, 2
        %v1799 = vadd.s32 %v1797, %v1798
        %v1800 = vrot.slane %v1799, 1
        %v1801 = vadd.s32 %v1799, %v1800
        %s1802 = vtos %v1801
        %p1803 = scmp.ge.s32.totalorder %s1775, 205
        %s1804 = sor.u32 %s1743, 1024
        %s1805 = scalar_select %p1803, %s1743, %s1804
        %p1806 = scmp.ge.s32.totalorder %s1802, 205
        %s1807 = sor.u32 %s1746, 1024
        %s1808 = scalar_select %p1806, %s1746, %s1807
        %s1809 = sor.u32 %s1805, 511
        %s1810 = sor.u32 %s1808, 511
        %v1811 = vstv %s1809
        %vm1812 = vcmp.le.s32.totalorder %v505, %v1811
        %vm1813 = vcmp.le.s32.totalorder %v506, %v1811
        %v1814 = vsel %vm1812, 1, 0
        %v1815 = vsel %vm1813, 1, 0
        %v1816 = vsel %vm492, %v1814, 0
        %v1817 = vsel %vm492, %v1815, 0
        %v1818 = vadd.s32 %v1816, %v1817
        %v1819 = vand.u32 %v1818, 65535
        %v1820 = vshrl.u32 %v1818, 16
        %v1821 = vcvt.s32.f32 %v1819
        %v1822 = vcvt.s32.f32 %v1820
        %1823 = vadd.xlane.f32.xlu0 %v1821
        %v1824 = vpop.xlane.xlu0 %1823
        %1825 = vadd.xlane.f32.xlu0 %v1822
        %v1826 = vpop.xlane.xlu0 %1825
        %v1827 = vcvt.f32.s32 %v1824
        %v1828 = vcvt.f32.s32 %v1826
        %v1829 = vshll.u32 %v1828, 16
        %v1830 = vadd.s32 %v1829, %v1827
        %v1831 = vrot.slane %v1830, 4
        %v1832 = vadd.s32 %v1830, %v1831
        %v1833 = vrot.slane %v1832, 2
        %v1834 = vadd.s32 %v1832, %v1833
        %v1835 = vrot.slane %v1834, 1
        %v1836 = vadd.s32 %v1834, %v1835
        %s1837 = vtos %v1836
        %v1838 = vstv %s1810
        %vm1839 = vcmp.le.s32.totalorder %v507, %v1838
        %vm1840 = vcmp.le.s32.totalorder %v508, %v1838
        %v1841 = vsel %vm1839, 1, 0
        %v1842 = vsel %vm1840, 1, 0
        %v1843 = vsel %vm492, %v1841, 0
        %v1844 = vsel %vm492, %v1842, 0
        %v1845 = vadd.s32 %v1843, %v1844
        %v1846 = vand.u32 %v1845, 65535
        %v1847 = vshrl.u32 %v1845, 16
        %v1848 = vcvt.s32.f32 %v1846
        %v1849 = vcvt.s32.f32 %v1847
        %1850 = vadd.xlane.f32.xlu0 %v1848
        %v1851 = vpop.xlane.xlu0 %1850
        %1852 = vadd.xlane.f32.xlu0 %v1849
        %v1853 = vpop.xlane.xlu0 %1852
        %v1854 = vcvt.f32.s32 %v1851
        %v1855 = vcvt.f32.s32 %v1853
        %v1856 = vshll.u32 %v1855, 16
        %v1857 = vadd.s32 %v1856, %v1854
        %v1858 = vrot.slane %v1857, 4
        %v1859 = vadd.s32 %v1857, %v1858
        %v1860 = vrot.slane %v1859, 2
        %v1861 = vadd.s32 %v1859, %v1860
        %v1862 = vrot.slane %v1861, 1
        %v1863 = vadd.s32 %v1861, %v1862
        %s1864 = vtos %v1863
        %p1865 = scmp.ge.s32.totalorder %s1837, 205
        %s1866 = sor.u32 %s1805, 512
        %s1867 = scalar_select %p1865, %s1805, %s1866
        %p1868 = scmp.ge.s32.totalorder %s1864, 205
        %s1869 = sor.u32 %s1808, 512
        %s1870 = scalar_select %p1868, %s1808, %s1869
        %s1871 = sor.u32 %s1867, 255
        %s1872 = sor.u32 %s1870, 255
        %v1873 = vstv %s1871
        %vm1874 = vcmp.le.s32.totalorder %v505, %v1873
        %vm1875 = vcmp.le.s32.totalorder %v506, %v1873
        %v1876 = vsel %vm1874, 1, 0
        %v1877 = vsel %vm1875, 1, 0
        %v1878 = vsel %vm492, %v1876, 0
        %v1879 = vsel %vm492, %v1877, 0
        %v1880 = vadd.s32 %v1878, %v1879
        %v1881 = vand.u32 %v1880, 65535
        %v1882 = vshrl.u32 %v1880, 16
        %v1883 = vcvt.s32.f32 %v1881
        %v1884 = vcvt.s32.f32 %v1882
        %1885 = vadd.xlane.f32.xlu0 %v1883
        %v1886 = vpop.xlane.xlu0 %1885
        %1887 = vadd.xlane.f32.xlu0 %v1884
        %v1888 = vpop.xlane.xlu0 %1887
        %v1889 = vcvt.f32.s32 %v1886
        %v1890 = vcvt.f32.s32 %v1888
        %v1891 = vshll.u32 %v1890, 16
        %v1892 = vadd.s32 %v1891, %v1889
        %v1893 = vrot.slane %v1892, 4
        %v1894 = vadd.s32 %v1892, %v1893
        %v1895 = vrot.slane %v1894, 2
        %v1896 = vadd.s32 %v1894, %v1895
        %v1897 = vrot.slane %v1896, 1
        %v1898 = vadd.s32 %v1896, %v1897
        %s1899 = vtos %v1898
        %v1900 = vstv %s1872
        %vm1901 = vcmp.le.s32.totalorder %v507, %v1900
        %vm1902 = vcmp.le.s32.totalorder %v508, %v1900
        %v1903 = vsel %vm1901, 1, 0
        %v1904 = vsel %vm1902, 1, 0
        %v1905 = vsel %vm492, %v1903, 0
        %v1906 = vsel %vm492, %v1904, 0
        %v1907 = vadd.s32 %v1905, %v1906
        %v1908 = vand.u32 %v1907, 65535
        %v1909 = vshrl.u32 %v1907, 16
        %v1910 = vcvt.s32.f32 %v1908
        %v1911 = vcvt.s32.f32 %v1909
        %1912 = vadd.xlane.f32.xlu0 %v1910
        %v1913 = vpop.xlane.xlu0 %1912
        %1914 = vadd.xlane.f32.xlu0 %v1911
        %v1915 = vpop.xlane.xlu0 %1914
        %v1916 = vcvt.f32.s32 %v1913
        %v1917 = vcvt.f32.s32 %v1915
        %v1918 = vshll.u32 %v1917, 16
        %v1919 = vadd.s32 %v1918, %v1916
        %v1920 = vrot.slane %v1919, 4
        %v1921 = vadd.s32 %v1919, %v1920
        %v1922 = vrot.slane %v1921, 2
        %v1923 = vadd.s32 %v1921, %v1922
        %v1924 = vrot.slane %v1923, 1
        %v1925 = vadd.s32 %v1923, %v1924
        %s1926 = vtos %v1925
        %p1927 = scmp.ge.s32.totalorder %s1899, 205
        %s1928 = sor.u32 %s1867, 256
        %s1929 = scalar_select %p1927, %s1867, %s1928
        %p1930 = scmp.ge.s32.totalorder %s1926, 205
        %s1931 = sor.u32 %s1870, 256
        %s1932 = scalar_select %p1930, %s1870, %s1931
        %s1933 = sor.u32 %s1929, 127
        %s1934 = sor.u32 %s1932, 127
        %v1935 = vstv %s1933
        %vm1936 = vcmp.le.s32.totalorder %v505, %v1935
        %vm1937 = vcmp.le.s32.totalorder %v506, %v1935
        %v1938 = vsel %vm1936, 1, 0
        %v1939 = vsel %vm1937, 1, 0
        %v1940 = vsel %vm492, %v1938, 0
        %v1941 = vsel %vm492, %v1939, 0
        %v1942 = vadd.s32 %v1940, %v1941
        %v1943 = vand.u32 %v1942, 65535
        %v1944 = vshrl.u32 %v1942, 16
        %v1945 = vcvt.s32.f32 %v1943
        %v1946 = vcvt.s32.f32 %v1944
        %1947 = vadd.xlane.f32.xlu0 %v1945
        %v1948 = vpop.xlane.xlu0 %1947
        %1949 = vadd.xlane.f32.xlu0 %v1946
        %v1950 = vpop.xlane.xlu0 %1949
        %v1951 = vcvt.f32.s32 %v1948
        %v1952 = vcvt.f32.s32 %v1950
        %v1953 = vshll.u32 %v1952, 16
        %v1954 = vadd.s32 %v1953, %v1951
        %v1955 = vrot.slane %v1954, 4
        %v1956 = vadd.s32 %v1954, %v1955
        %v1957 = vrot.slane %v1956, 2
        %v1958 = vadd.s32 %v1956, %v1957
        %v1959 = vrot.slane %v1958, 1
        %v1960 = vadd.s32 %v1958, %v1959
        %s1961 = vtos %v1960
        %v1962 = vstv %s1934
        %vm1963 = vcmp.le.s32.totalorder %v507, %v1962
        %vm1964 = vcmp.le.s32.totalorder %v508, %v1962
        %v1965 = vsel %vm1963, 1, 0
        %v1966 = vsel %vm1964, 1, 0
        %v1967 = vsel %vm492, %v1965, 0
        %v1968 = vsel %vm492, %v1966, 0
        %v1969 = vadd.s32 %v1967, %v1968
        %v1970 = vand.u32 %v1969, 65535
        %v1971 = vshrl.u32 %v1969, 16
        %v1972 = vcvt.s32.f32 %v1970
        %v1973 = vcvt.s32.f32 %v1971
        %1974 = vadd.xlane.f32.xlu0 %v1972
        %v1975 = vpop.xlane.xlu0 %1974
        %1976 = vadd.xlane.f32.xlu0 %v1973
        %v1977 = vpop.xlane.xlu0 %1976
        %v1978 = vcvt.f32.s32 %v1975
        %v1979 = vcvt.f32.s32 %v1977
        %v1980 = vshll.u32 %v1979, 16
        %v1981 = vadd.s32 %v1980, %v1978
        %v1982 = vrot.slane %v1981, 4
        %v1983 = vadd.s32 %v1981, %v1982
        %v1984 = vrot.slane %v1983, 2
        %v1985 = vadd.s32 %v1983, %v1984
        %v1986 = vrot.slane %v1985, 1
        %v1987 = vadd.s32 %v1985, %v1986
        %s1988 = vtos %v1987
        %p1989 = scmp.ge.s32.totalorder %s1961, 205
        %s1990 = sor.u32 %s1929, 128
        %s1991 = scalar_select %p1989, %s1929, %s1990
        %p1992 = scmp.ge.s32.totalorder %s1988, 205
        %s1993 = sor.u32 %s1932, 128
        %s1994 = scalar_select %p1992, %s1932, %s1993
        %s1995 = sor.u32 %s1991, 63
        %s1996 = sor.u32 %s1994, 63
        %v1997 = vstv %s1995
        %vm1998 = vcmp.le.s32.totalorder %v505, %v1997
        %vm1999 = vcmp.le.s32.totalorder %v506, %v1997
        %v2000 = vsel %vm1998, 1, 0
        %v2001 = vsel %vm1999, 1, 0
        %v2002 = vsel %vm492, %v2000, 0
        %v2003 = vsel %vm492, %v2001, 0
        %v2004 = vadd.s32 %v2002, %v2003
        %v2005 = vand.u32 %v2004, 65535
        %v2006 = vshrl.u32 %v2004, 16
        %v2007 = vcvt.s32.f32 %v2005
        %v2008 = vcvt.s32.f32 %v2006
        %2009 = vadd.xlane.f32.xlu0 %v2007
        %v2010 = vpop.xlane.xlu0 %2009
        %2011 = vadd.xlane.f32.xlu0 %v2008
        %v2012 = vpop.xlane.xlu0 %2011
        %v2013 = vcvt.f32.s32 %v2010
        %v2014 = vcvt.f32.s32 %v2012
        %v2015 = vshll.u32 %v2014, 16
        %v2016 = vadd.s32 %v2015, %v2013
        %v2017 = vrot.slane %v2016, 4
        %v2018 = vadd.s32 %v2016, %v2017
        %v2019 = vrot.slane %v2018, 2
        %v2020 = vadd.s32 %v2018, %v2019
        %v2021 = vrot.slane %v2020, 1
        %v2022 = vadd.s32 %v2020, %v2021
        %s2023 = vtos %v2022
        %v2024 = vstv %s1996
        %vm2025 = vcmp.le.s32.totalorder %v507, %v2024
        %vm2026 = vcmp.le.s32.totalorder %v508, %v2024
        %v2027 = vsel %vm2025, 1, 0
        %v2028 = vsel %vm2026, 1, 0
        %v2029 = vsel %vm492, %v2027, 0
        %v2030 = vsel %vm492, %v2028, 0
        %v2031 = vadd.s32 %v2029, %v2030
        %v2032 = vand.u32 %v2031, 65535
        %v2033 = vshrl.u32 %v2031, 16
        %v2034 = vcvt.s32.f32 %v2032
        %v2035 = vcvt.s32.f32 %v2033
        %2036 = vadd.xlane.f32.xlu0 %v2034
        %v2037 = vpop.xlane.xlu0 %2036
        %2038 = vadd.xlane.f32.xlu0 %v2035
        %v2039 = vpop.xlane.xlu0 %2038
        %v2040 = vcvt.f32.s32 %v2037
        %v2041 = vcvt.f32.s32 %v2039
        %v2042 = vshll.u32 %v2041, 16
        %v2043 = vadd.s32 %v2042, %v2040
        %v2044 = vrot.slane %v2043, 4
        %v2045 = vadd.s32 %v2043, %v2044
        %v2046 = vrot.slane %v2045, 2
        %v2047 = vadd.s32 %v2045, %v2046
        %v2048 = vrot.slane %v2047, 1
        %v2049 = vadd.s32 %v2047, %v2048
        %s2050 = vtos %v2049
        %p2051 = scmp.ge.s32.totalorder %s2023, 205
        %s2052 = sor.u32 %s1991, 64
        %s2053 = scalar_select %p2051, %s1991, %s2052
        %p2054 = scmp.ge.s32.totalorder %s2050, 205
        %s2055 = sor.u32 %s1994, 64
        %s2056 = scalar_select %p2054, %s1994, %s2055
        %s2057 = sor.u32 %s2053, 31
        %s2058 = sor.u32 %s2056, 31
        %v2059 = vstv %s2057
        %vm2060 = vcmp.le.s32.totalorder %v505, %v2059
        %vm2061 = vcmp.le.s32.totalorder %v506, %v2059
        %v2062 = vsel %vm2060, 1, 0
        %v2063 = vsel %vm2061, 1, 0
        %v2064 = vsel %vm492, %v2062, 0
        %v2065 = vsel %vm492, %v2063, 0
        %v2066 = vadd.s32 %v2064, %v2065
        %v2067 = vand.u32 %v2066, 65535
        %v2068 = vshrl.u32 %v2066, 16
        %v2069 = vcvt.s32.f32 %v2067
        %v2070 = vcvt.s32.f32 %v2068
        %2071 = vadd.xlane.f32.xlu0 %v2069
        %v2072 = vpop.xlane.xlu0 %2071
        %2073 = vadd.xlane.f32.xlu0 %v2070
        %v2074 = vpop.xlane.xlu0 %2073
        %v2075 = vcvt.f32.s32 %v2072
        %v2076 = vcvt.f32.s32 %v2074
        %v2077 = vshll.u32 %v2076, 16
        %v2078 = vadd.s32 %v2077, %v2075
        %v2079 = vrot.slane %v2078, 4
        %v2080 = vadd.s32 %v2078, %v2079
        %v2081 = vrot.slane %v2080, 2
        %v2082 = vadd.s32 %v2080, %v2081
        %v2083 = vrot.slane %v2082, 1
        %v2084 = vadd.s32 %v2082, %v2083
        %s2085 = vtos %v2084
        %v2086 = vstv %s2058
        %vm2087 = vcmp.le.s32.totalorder %v507, %v2086
        %vm2088 = vcmp.le.s32.totalorder %v508, %v2086
        %v2089 = vsel %vm2087, 1, 0
        %v2090 = vsel %vm2088, 1, 0
        %v2091 = vsel %vm492, %v2089, 0
        %v2092 = vsel %vm492, %v2090, 0
        %v2093 = vadd.s32 %v2091, %v2092
        %v2094 = vand.u32 %v2093, 65535
        %v2095 = vshrl.u32 %v2093, 16
        %v2096 = vcvt.s32.f32 %v2094
        %v2097 = vcvt.s32.f32 %v2095
        %2098 = vadd.xlane.f32.xlu0 %v2096
        %v2099 = vpop.xlane.xlu0 %2098
        %2100 = vadd.xlane.f32.xlu0 %v2097
        %v2101 = vpop.xlane.xlu0 %2100
        %v2102 = vcvt.f32.s32 %v2099
        %v2103 = vcvt.f32.s32 %v2101
        %v2104 = vshll.u32 %v2103, 16
        %v2105 = vadd.s32 %v2104, %v2102
        %v2106 = vrot.slane %v2105, 4
        %v2107 = vadd.s32 %v2105, %v2106
        %v2108 = vrot.slane %v2107, 2
        %v2109 = vadd.s32 %v2107, %v2108
        %v2110 = vrot.slane %v2109, 1
        %v2111 = vadd.s32 %v2109, %v2110
        %s2112 = vtos %v2111
        %p2113 = scmp.ge.s32.totalorder %s2085, 205
        %s2114 = sor.u32 %s2053, 32
        %s2115 = scalar_select %p2113, %s2053, %s2114
        %p2116 = scmp.ge.s32.totalorder %s2112, 205
        %s2117 = sor.u32 %s2056, 32
        %s2118 = scalar_select %p2116, %s2056, %s2117
        %s2119 = sor.u32 %s2115, 15
        %s2120 = sor.u32 %s2118, 15
        %v2121 = vstv %s2119
        %vm2122 = vcmp.le.s32.totalorder %v505, %v2121
        %vm2123 = vcmp.le.s32.totalorder %v506, %v2121
        %v2124 = vsel %vm2122, 1, 0
        %v2125 = vsel %vm2123, 1, 0
        %v2126 = vsel %vm492, %v2124, 0
        %v2127 = vsel %vm492, %v2125, 0
        %v2128 = vadd.s32 %v2126, %v2127
        %v2129 = vand.u32 %v2128, 65535
        %v2130 = vshrl.u32 %v2128, 16
        %v2131 = vcvt.s32.f32 %v2129
        %v2132 = vcvt.s32.f32 %v2130
        %2133 = vadd.xlane.f32.xlu0 %v2131
        %v2134 = vpop.xlane.xlu0 %2133
        %2135 = vadd.xlane.f32.xlu0 %v2132
        %v2136 = vpop.xlane.xlu0 %2135
        %v2137 = vcvt.f32.s32 %v2134
        %v2138 = vcvt.f32.s32 %v2136
        %v2139 = vshll.u32 %v2138, 16
        %v2140 = vadd.s32 %v2139, %v2137
        %v2141 = vrot.slane %v2140, 4
        %v2142 = vadd.s32 %v2140, %v2141
        %v2143 = vrot.slane %v2142, 2
        %v2144 = vadd.s32 %v2142, %v2143
        %v2145 = vrot.slane %v2144, 1
        %v2146 = vadd.s32 %v2144, %v2145
        %s2147 = vtos %v2146
        %v2148 = vstv %s2120
        %vm2149 = vcmp.le.s32.totalorder %v507, %v2148
        %vm2150 = vcmp.le.s32.totalorder %v508, %v2148
        %v2151 = vsel %vm2149, 1, 0
        %v2152 = vsel %vm2150, 1, 0
        %v2153 = vsel %vm492, %v2151, 0
        %v2154 = vsel %vm492, %v2152, 0
        %v2155 = vadd.s32 %v2153, %v2154
        %v2156 = vand.u32 %v2155, 65535
        %v2157 = vshrl.u32 %v2155, 16
        %v2158 = vcvt.s32.f32 %v2156
        %v2159 = vcvt.s32.f32 %v2157
        %2160 = vadd.xlane.f32.xlu0 %v2158
        %v2161 = vpop.xlane.xlu0 %2160
        %2162 = vadd.xlane.f32.xlu0 %v2159
        %v2163 = vpop.xlane.xlu0 %2162
        %v2164 = vcvt.f32.s32 %v2161
        %v2165 = vcvt.f32.s32 %v2163
        %v2166 = vshll.u32 %v2165, 16
        %v2167 = vadd.s32 %v2166, %v2164
        %v2168 = vrot.slane %v2167, 4
        %v2169 = vadd.s32 %v2167, %v2168
        %v2170 = vrot.slane %v2169, 2
        %v2171 = vadd.s32 %v2169, %v2170
        %v2172 = vrot.slane %v2171, 1
        %v2173 = vadd.s32 %v2171, %v2172
        %s2174 = vtos %v2173
        %p2175 = scmp.ge.s32.totalorder %s2147, 205
        %s2176 = sor.u32 %s2115, 16
        %s2177 = scalar_select %p2175, %s2115, %s2176
        %p2178 = scmp.ge.s32.totalorder %s2174, 205
        %s2179 = sor.u32 %s2118, 16
        %s2180 = scalar_select %p2178, %s2118, %s2179
        %s2181 = sor.u32 %s2177, 7
        %s2182 = sor.u32 %s2180, 7
        %v2183 = vstv %s2181
        %vm2184 = vcmp.le.s32.totalorder %v505, %v2183
        %vm2185 = vcmp.le.s32.totalorder %v506, %v2183
        %v2186 = vsel %vm2184, 1, 0
        %v2187 = vsel %vm2185, 1, 0
        %v2188 = vsel %vm492, %v2186, 0
        %v2189 = vsel %vm492, %v2187, 0
        %v2190 = vadd.s32 %v2188, %v2189
        %v2191 = vand.u32 %v2190, 65535
        %v2192 = vshrl.u32 %v2190, 16
        %v2193 = vcvt.s32.f32 %v2191
        %v2194 = vcvt.s32.f32 %v2192
        %2195 = vadd.xlane.f32.xlu0 %v2193
        %v2196 = vpop.xlane.xlu0 %2195
        %2197 = vadd.xlane.f32.xlu0 %v2194
        %v2198 = vpop.xlane.xlu0 %2197
        %v2199 = vcvt.f32.s32 %v2196
        %v2200 = vcvt.f32.s32 %v2198
        %v2201 = vshll.u32 %v2200, 16
        %v2202 = vadd.s32 %v2201, %v2199
        %v2203 = vrot.slane %v2202, 4
        %v2204 = vadd.s32 %v2202, %v2203
        %v2205 = vrot.slane %v2204, 2
        %v2206 = vadd.s32 %v2204, %v2205
        %v2207 = vrot.slane %v2206, 1
        %v2208 = vadd.s32 %v2206, %v2207
        %s2209 = vtos %v2208
        %v2210 = vstv %s2182
        %vm2211 = vcmp.le.s32.totalorder %v507, %v2210
        %vm2212 = vcmp.le.s32.totalorder %v508, %v2210
        %v2213 = vsel %vm2211, 1, 0
        %v2214 = vsel %vm2212, 1, 0
        %v2215 = vsel %vm492, %v2213, 0
        %v2216 = vsel %vm492, %v2214, 0
        %v2217 = vadd.s32 %v2215, %v2216
        %v2218 = vand.u32 %v2217, 65535
        %v2219 = vshrl.u32 %v2217, 16
        %v2220 = vcvt.s32.f32 %v2218
        %v2221 = vcvt.s32.f32 %v2219
        %2222 = vadd.xlane.f32.xlu0 %v2220
        %v2223 = vpop.xlane.xlu0 %2222
        %2224 = vadd.xlane.f32.xlu0 %v2221
        %v2225 = vpop.xlane.xlu0 %2224
        %v2226 = vcvt.f32.s32 %v2223
        %v2227 = vcvt.f32.s32 %v2225
        %v2228 = vshll.u32 %v2227, 16
        %v2229 = vadd.s32 %v2228, %v2226
        %v2230 = vrot.slane %v2229, 4
        %v2231 = vadd.s32 %v2229, %v2230
        %v2232 = vrot.slane %v2231, 2
        %v2233 = vadd.s32 %v2231, %v2232
        %v2234 = vrot.slane %v2233, 1
        %v2235 = vadd.s32 %v2233, %v2234
        %s2236 = vtos %v2235
        %p2237 = scmp.ge.s32.totalorder %s2209, 205
        %s2238 = sor.u32 %s2177, 8
        %s2239 = scalar_select %p2237, %s2177, %s2238
        %p2240 = scmp.ge.s32.totalorder %s2236, 205
        %s2241 = sor.u32 %s2180, 8
        %s2242 = scalar_select %p2240, %s2180, %s2241
        %s2243 = sor.u32 %s2239, 3
        %s2244 = sor.u32 %s2242, 3
        %v2245 = vstv %s2243
        %vm2246 = vcmp.le.s32.totalorder %v505, %v2245
        %vm2247 = vcmp.le.s32.totalorder %v506, %v2245
        %v2248 = vsel %vm2246, 1, 0
        %v2249 = vsel %vm2247, 1, 0
        %v2250 = vsel %vm492, %v2248, 0
        %v2251 = vsel %vm492, %v2249, 0
        %v2252 = vadd.s32 %v2250, %v2251
        %v2253 = vand.u32 %v2252, 65535
        %v2254 = vshrl.u32 %v2252, 16
        %v2255 = vcvt.s32.f32 %v2253
        %v2256 = vcvt.s32.f32 %v2254
        %2257 = vadd.xlane.f32.xlu0 %v2255
        %v2258 = vpop.xlane.xlu0 %2257
        %2259 = vadd.xlane.f32.xlu0 %v2256
        %v2260 = vpop.xlane.xlu0 %2259
        %v2261 = vcvt.f32.s32 %v2258
        %v2262 = vcvt.f32.s32 %v2260
        %v2263 = vshll.u32 %v2262, 16
        %v2264 = vadd.s32 %v2263, %v2261
        %v2265 = vrot.slane %v2264, 4
        %v2266 = vadd.s32 %v2264, %v2265
        %v2267 = vrot.slane %v2266, 2
        %v2268 = vadd.s32 %v2266, %v2267
        %v2269 = vrot.slane %v2268, 1
        %v2270 = vadd.s32 %v2268, %v2269
        %s2271 = vtos %v2270
        %v2272 = vstv %s2244
        %vm2273 = vcmp.le.s32.totalorder %v507, %v2272
        %vm2274 = vcmp.le.s32.totalorder %v508, %v2272
        %v2275 = vsel %vm2273, 1, 0
        %v2276 = vsel %vm2274, 1, 0
        %v2277 = vsel %vm492, %v2275, 0
        %v2278 = vsel %vm492, %v2276, 0
        %v2279 = vadd.s32 %v2277, %v2278
        %v2280 = vand.u32 %v2279, 65535
        %v2281 = vshrl.u32 %v2279, 16
        %v2282 = vcvt.s32.f32 %v2280
        %v2283 = vcvt.s32.f32 %v2281
        %2284 = vadd.xlane.f32.xlu0 %v2282
        %v2285 = vpop.xlane.xlu0 %2284
        %2286 = vadd.xlane.f32.xlu0 %v2283
        %v2287 = vpop.xlane.xlu0 %2286
        %v2288 = vcvt.f32.s32 %v2285
        %v2289 = vcvt.f32.s32 %v2287
        %v2290 = vshll.u32 %v2289, 16
        %v2291 = vadd.s32 %v2290, %v2288
        %v2292 = vrot.slane %v2291, 4
        %v2293 = vadd.s32 %v2291, %v2292
        %v2294 = vrot.slane %v2293, 2
        %v2295 = vadd.s32 %v2293, %v2294
        %v2296 = vrot.slane %v2295, 1
        %v2297 = vadd.s32 %v2295, %v2296
        %s2298 = vtos %v2297
        %p2299 = scmp.ge.s32.totalorder %s2271, 205
        %s2300 = sor.u32 %s2239, 4
        %s2301 = scalar_select %p2299, %s2239, %s2300
        %p2302 = scmp.ge.s32.totalorder %s2298, 205
        %s2303 = sor.u32 %s2242, 4
        %s2304 = scalar_select %p2302, %s2242, %s2303
        %s2305 = sor.u32 %s2301, 1
        %s2306 = sor.u32 %s2304, 1
        %v2307 = vstv %s2305
        %vm2308 = vcmp.le.s32.totalorder %v505, %v2307
        %vm2309 = vcmp.le.s32.totalorder %v506, %v2307
        %v2310 = vsel %vm2308, 1, 0
        %v2311 = vsel %vm2309, 1, 0
        %v2312 = vsel %vm492, %v2310, 0
        %v2313 = vsel %vm492, %v2311, 0
        %v2314 = vadd.s32 %v2312, %v2313
        %v2315 = vand.u32 %v2314, 65535
        %v2316 = vshrl.u32 %v2314, 16
        %v2317 = vcvt.s32.f32 %v2315
        %v2318 = vcvt.s32.f32 %v2316
        %2319 = vadd.xlane.f32.xlu0 %v2317
        %v2320 = vpop.xlane.xlu0 %2319
        %2321 = vadd.xlane.f32.xlu0 %v2318
        %v2322 = vpop.xlane.xlu0 %2321
        %v2323 = vcvt.f32.s32 %v2320
        %v2324 = vcvt.f32.s32 %v2322
        %v2325 = vshll.u32 %v2324, 16
        %v2326 = vadd.s32 %v2325, %v2323
        %v2327 = vrot.slane %v2326, 4
        %v2328 = vadd.s32 %v2326, %v2327
        %v2329 = vrot.slane %v2328, 2
        %v2330 = vadd.s32 %v2328, %v2329
        %v2331 = vrot.slane %v2330, 1
        %v2332 = vadd.s32 %v2330, %v2331
        %s2333 = vtos %v2332
        %v2334 = vstv %s2306
        %vm2335 = vcmp.le.s32.totalorder %v507, %v2334
        %vm2336 = vcmp.le.s32.totalorder %v508, %v2334
        %v2337 = vsel %vm2335, 1, 0
        %v2338 = vsel %vm2336, 1, 0
        %v2339 = vsel %vm492, %v2337, 0
        %v2340 = vsel %vm492, %v2338, 0
        %v2341 = vadd.s32 %v2339, %v2340
        %v2342 = vand.u32 %v2341, 65535
        %v2343 = vshrl.u32 %v2341, 16
        %v2344 = vcvt.s32.f32 %v2342
        %v2345 = vcvt.s32.f32 %v2343
        %2346 = vadd.xlane.f32.xlu0 %v2344
        %v2347 = vpop.xlane.xlu0 %2346
        %2348 = vadd.xlane.f32.xlu0 %v2345
        %v2349 = vpop.xlane.xlu0 %2348
        %v2350 = vcvt.f32.s32 %v2347
        %v2351 = vcvt.f32.s32 %v2349
        %v2352 = vshll.u32 %v2351, 16
        %v2353 = vadd.s32 %v2352, %v2350
        %v2354 = vrot.slane %v2353, 4
        %v2355 = vadd.s32 %v2353, %v2354
        %v2356 = vrot.slane %v2355, 2
        %v2357 = vadd.s32 %v2355, %v2356
        %v2358 = vrot.slane %v2357, 1
        %v2359 = vadd.s32 %v2357, %v2358
        %s2360 = vtos %v2359
        %p2361 = scmp.ge.s32.totalorder %s2333, 205
        %s2362 = sor.u32 %s2301, 2
        %s2363 = scalar_select %p2361, %s2301, %s2362
        %p2364 = scmp.ge.s32.totalorder %s2360, 205
        %s2365 = sor.u32 %s2304, 2
        %s2366 = scalar_select %p2364, %s2304, %s2365
        %v2367 = vstv %s2363
        %vm2368 = vcmp.le.s32.totalorder %v505, %v2367
        %vm2369 = vcmp.le.s32.totalorder %v506, %v2367
        %v2370 = vsel %vm2368, 1, 0
        %v2371 = vsel %vm2369, 1, 0
        %v2372 = vsel %vm492, %v2370, 0
        %v2373 = vsel %vm492, %v2371, 0
        %v2374 = vadd.s32 %v2372, %v2373
        %v2375 = vand.u32 %v2374, 65535
        %v2376 = vshrl.u32 %v2374, 16
        %v2377 = vcvt.s32.f32 %v2375
        %v2378 = vcvt.s32.f32 %v2376
        %2379 = vadd.xlane.f32.xlu0 %v2377
        %v2380 = vpop.xlane.xlu0 %2379
        %2381 = vadd.xlane.f32.xlu0 %v2378
        %v2382 = vpop.xlane.xlu0 %2381
        %v2383 = vcvt.f32.s32 %v2380
        %v2384 = vcvt.f32.s32 %v2382
        %v2385 = vshll.u32 %v2384, 16
        %v2386 = vadd.s32 %v2385, %v2383
        %v2387 = vrot.slane %v2386, 4
        %v2388 = vadd.s32 %v2386, %v2387
        %v2389 = vrot.slane %v2388, 2
        %v2390 = vadd.s32 %v2388, %v2389
        %v2391 = vrot.slane %v2390, 1
        %v2392 = vadd.s32 %v2390, %v2391
        %s2393 = vtos %v2392
        %v2394 = vstv %s2366
        %vm2395 = vcmp.le.s32.totalorder %v507, %v2394
        %vm2396 = vcmp.le.s32.totalorder %v508, %v2394
        %v2397 = vsel %vm2395, 1, 0
        %v2398 = vsel %vm2396, 1, 0
        %v2399 = vsel %vm492, %v2397, 0
        %v2400 = vsel %vm492, %v2398, 0
        %v2401 = vadd.s32 %v2399, %v2400
        %v2402 = vand.u32 %v2401, 65535
        %v2403 = vshrl.u32 %v2401, 16
        %v2404 = vcvt.s32.f32 %v2402
        %v2405 = vcvt.s32.f32 %v2403
        %2406 = vadd.xlane.f32.xlu0 %v2404
        %v2407 = vpop.xlane.xlu0 %2406
        %2408 = vadd.xlane.f32.xlu0 %v2405
        %v2409 = vpop.xlane.xlu0 %2408
        %v2410 = vcvt.f32.s32 %v2407
        %v2411 = vcvt.f32.s32 %v2409
        %v2412 = vshll.u32 %v2411, 16
        %v2413 = vadd.s32 %v2412, %v2410
        %v2414 = vrot.slane %v2413, 4
        %v2415 = vadd.s32 %v2413, %v2414
        %v2416 = vrot.slane %v2415, 2
        %v2417 = vadd.s32 %v2415, %v2416
        %v2418 = vrot.slane %v2417, 1
        %v2419 = vadd.s32 %v2417, %v2418
        %s2420 = vtos %v2419
        %p2421 = scmp.ge.s32.totalorder %s2393, 205
        %s2422 = sor.u32 %s2363, 1
        %s2423 = scalar_select %p2421, %s2363, %s2422
        %p2424 = scmp.ge.s32.totalorder %s2420, 205
        %s2425 = sor.u32 %s2366, 1
        %s2426 = scalar_select %p2424, %s2366, %s2425
        %v2427 = vstv %s2423
        %vm2428 = vcmp.ge.s32.totalorder %v505, %v2427
        %vm2429 = vcmp.ge.s32.totalorder %v506, %v2427
        %v2430 = vsel %vm2428, 1, 0
        %v2431 = vsel %vm2429, 1, 0
        %v2432 = vcvt.s32.f32 %v2430
        %v2433 = vcvt.s32.f32 %v2431
        %v2434 = vstv %s2426
        %vm2435 = vcmp.ge.s32.totalorder %v507, %v2434
        %vm2436 = vcmp.ge.s32.totalorder %v508, %v2434
        %v2437 = vsel %vm2435, 1, 0
        %v2438 = vsel %vm2436, 1, 0
        %v2439 = vcvt.s32.f32 %v2437
        %v2440 = vcvt.s32.f32 %v2438
        %v2441 = vadd.f32 %v2432, %v2439
        %v2442 = vadd.f32 %v2433, %v2440
        %v2443 = vmin.f32 %v2441, 1.0
        %v2444 = vmin.f32 %v2442, 1.0
        %v2445 = vsub.f32 1.0, %v2443
        %v2446 = vsub.f32 1.0, %v2444
        %v2447 = vmax.f32 %v272, %v274
        %v2448 = vmax.f32 %v273, %v275
        %v2449 = vsub.f32 %v2447, %v276
        %v2450 = vsub.f32 %v2448, %v277
        %v2451 = vand.u32 2147483647, %v2449
        %v2452 = vand.u32 2147483647, %v2450
        %v2453 = vmul.f32 %v2443, %v2451
        %v2454 = vmul.f32 %v2444, %v2452
        %v2455 = vsel %vm492, %v2453, 0.0
        %v2456 = vsel %vm492, %v2454, 0.0
        %v2457 = vadd.f32 %v2455, %v2456
        %2458 = vadd.xlane.f32.xlu0 %v2457
        %v2459 = vpop.xlane.xlu0 %2458
        %v2460 = vrot.slane %v2459, 4
        %v2461 = vadd.f32 %v2459, %v2460
        %v2462 = vrot.slane %v2461, 2
        %v2463 = vadd.f32 %v2461, %v2462
        %v2464 = vrot.slane %v2463, 1
        %v2465 = vadd.f32 %v2463, %v2464
        %s2466 = vtos %v2465
        %v2467 = vsub.f32 %v272, %v276
        %v2468 = vsub.f32 %v273, %v277
        %v2469 = vand.u32 2147483647, %v2467
        %v2470 = vand.u32 2147483647, %v2468
        %v2471 = vmul.f32 %v2445, %v2469
        %v2472 = vmul.f32 %v2446, %v2470
        %v2473 = vsel %vm492, %v2471, 0.0
        %v2474 = vsel %vm492, %v2472, 0.0
        %v2475 = vadd.f32 %v2473, %v2474
        %2476 = vadd.xlane.f32.xlu0 %v2475
        %v2477 = vpop.xlane.xlu0 %2476
        %v2478 = vrot.slane %v2477, 4
        %v2479 = vadd.f32 %v2477, %v2478
        %v2480 = vrot.slane %v2479, 2
        %v2481 = vadd.f32 %v2479, %v2480
        %v2482 = vrot.slane %v2481, 1
        %v2483 = vadd.f32 %v2481, %v2482
        %s2484 = vtos %v2483
        %v2485 = vsub.f32 %v274, %v276
        %v2486 = vsub.f32 %v275, %v277
        %v2487 = vand.u32 2147483647, %v2485
        %v2488 = vand.u32 2147483647, %v2486
        %v2489 = vmul.f32 %v2445, %v2487
        %v2490 = vmul.f32 %v2446, %v2488
        %v2491 = vsel %vm492, %v2489, 0.0
        %v2492 = vsel %vm492, %v2490, 0.0
        %v2493 = vadd.f32 %v2491, %v2492
        %2494 = vadd.xlane.f32.xlu0 %v2493
        %v2495 = vpop.xlane.xlu0 %2494
        %v2496 = vrot.slane %v2495, 4
        %v2497 = vadd.f32 %v2495, %v2496
        %v2498 = vrot.slane %v2497, 2
        %v2499 = vadd.f32 %v2497, %v2498
        %v2500 = vrot.slane %v2499, 1
        %v2501 = vadd.f32 %v2499, %v2500
        %s2502 = vtos %v2501
        %v2503 = vlaneseq
        %v2504 = vshrl.u32 %v2503, 7
        %vm2505 = vcmp.eq.s32.totalorder %v2504, 0
        %vm2506 = vcmp.eq.s32.totalorder %v2504, 1
        %vm2507 = vcmp.eq.s32.totalorder %v2504, 2
        %vm2508 = vcmp.eq.s32.totalorder %v2504, 3
        %v2509 = vstv %s2502
        %v2510 = vsel %vm2508, %v2509, 0.0
        %v2511 = vstv %s2484
        %v2512 = vsel %vm2507, %v2511, %v2510
        %v2513 = vstv %s2466
        %v2514 = vsel %vm2506, %v2513, %v2512
        %v2515 = vstv %s504
        %v2516 = vsel %vm2505, %v2515, %v2514
        %2517 = vst [vmem:[%s271] sm:$0xff] %v2516
        %p2518 = scmp.lt.s32.totalorder %s20, 1
        %s2519 = scalar_select %p2518, %s20, 1
        %s2520 = smul.addr %s2519, 8
        %s2521 = scalar_lea.vmem %s3, %s2520
        // Predicated region
        $region45: #{l_grad_inte.1} parent=31 // pred_check
          %p2522 = pneg %p116
        $region46: #{l_grad_inte.1} parent=31 // pred_check_branch
          %2524 = sbr.rel (%p2522) target = $region48
        $region47: #{l_grad_inte.1} parent=31 // pred_region
          _
        $region48: #{l_grad_inte.1} parent=31 // pred_fallthru
          _
      $region32: #{l_grad_inte.1} parent=5 // pred_fallthru
        _
      %p2525 = scmp.le.s32.totalorder 2, %s15
      // Predicated region
      $region49: #{l_grad_inte.1} parent=5 // pred_check
        %p2526 = pneg %p2525
      $region50: #{l_grad_inte.1} parent=5 // pred_check_branch
        %2528 = sbr.rel (%p2526) target = $region52
      $region51: #{l_grad_inte.1} parent=5 // pred_region
        %s2529 = ssub.s32 %s15, 2
        // Predicated region
        $region53: #{l_grad_inte.1} parent=51 // pred_check
          %p2530 = pneg %p122
        $region54: #{l_grad_inte.1} parent=51 // pred_check_branch
          %2532 = sbr.rel (%p2530) target = $region56
        $region55: #{l_grad_inte.1} parent=51 // pred_region
          %p2533 = scmp.lt.s32.totalorder %s21, 1
          %s2534 = scalar_select %p2533, %s21, 1
          %s2535 = smul.addr %s2534, 8
          %s2536 = scalar_lea.vmem %s3, %s2535
        $region56: #{l_grad_inte.1} parent=51 // pred_fallthru
          _
      $region52: #{l_grad_inte.1} parent=5 // pred_fallthru
        _
    $region6: #{l_grad_inte.1} parent=1 // loop_footer
      %s19 = sadd.s32 1, %s15
    $region7: #{l_grad_inte.1} parent=1 // loop_footer_branch
      %14 = sbr.rel target = $region3
    $region8: #{l_grad_inte.1} parent=1 // loop_exit
      _
    %2537 = vsyncpa [#allocation3], 1
    %s2538 = scalar_lea.sflag [#allocation3], 1
    %2539 = vsyncpa %s2538, 1
    %2540 = vsyncpa [#allocation5], 1
    %s2541 = scalar_lea.sflag [#allocation5], 1
    %2542 = vsyncpa %s2541, 1

</llo_original>
